<compile_context>
chip_gen: v7x
topology: tpu7x:2x2x1
jax: 0.10.0
libtpu: 0.0.40
codegen_flags: <defaults>
</compile_context>

<pallas_src>
import functools

import jax
import jax.numpy as jnp
from jax.experimental import pallas as pl
from jax.experimental.pallas import tpu as pltpu


_SQRT2_INV = 0.7071067811865476


# ---------------------------------------------------------------------------
# In-kernel helpers (operate on loaded f32 values)
# ---------------------------------------------------------------------------
def _bf16_dot(a, b):
    """MXU matmul: bf16 operands, f32 accumulation."""
    return jnp.dot(a.astype(jnp.bfloat16), b.astype(jnp.bfloat16),
                   preferred_element_type=jnp.float32)


def _gelu_erf(x):
    return 0.5 * x * (1.0 + jax.lax.erf(x * _SQRT2_INV))


def _ln(x, g, b, eps):
    mean = jnp.mean(x, axis=-1, keepdims=True)
    xc = x - mean
    var = jnp.mean(xc * xc, axis=-1, keepdims=True)
    return xc * jax.lax.rsqrt(var + eps) * g + b


# ---------------------------------------------------------------------------
# Pallas kernels
# ---------------------------------------------------------------------------
def _matmul_bias_ln_kernel(x_ref, w_ref, b_ref, g_ref, beta_ref, o_ref, *, eps):
    """Patch-embed projection fused with its LayerNorm: LN(x @ w + b)."""
    x = x_ref[...].astype(jnp.float32)
    y = _bf16_dot(x, w_ref[...]) + b_ref[...].astype(jnp.float32)
    o_ref[...] = _ln(y, g_ref[...].astype(jnp.float32),
                     beta_ref[...].astype(jnp.float32), eps).astype(o_ref.dtype)


def _layernorm_kernel(x_ref, g_ref, b_ref, o_ref, *, eps):
    o_ref[...] = _ln(x_ref[...].astype(jnp.float32),
                     g_ref[...].astype(jnp.float32),
                     b_ref[...].astype(jnp.float32), eps).astype(o_ref.dtype)


def _encoder_layer_kernel(x_ref, wqkv_ref, bqkv_ref, wo_ref, bo_ref,
                          g1_ref, b1_ref, wff1_ref, bff1_ref,
                          wff2_ref, bff2_ref, g2_ref, b2_ref, o_ref,
                          *, n_heads, scale, eps):
    """One full Informer EncoderLayer for a single (N, D) token tile."""
    x = x_ref[0].astype(jnp.float32)                       # (N, D)
    d_model = x.shape[-1]
    dh = d_model // n_heads

    # --- fused QKV projection: one (D, 3D) GEMM ---
    qkv = _bf16_dot(x, wqkv_ref[...]) + bqkv_ref[...].astype(jnp.float32)   # (N, 3D)

    # --- multi-head attention, all heads inside this grid step ---
    head_outs = []
    for h in range(n_heads):
        qh = qkv[:, h * dh:(h + 1) * dh]                               # (N, dh)
        kh = qkv[:, d_model + h * dh:d_model + (h + 1) * dh]           # (N, dh)
        vh = qkv[:, 2 * d_model + h * dh:2 * d_model + (h + 1) * dh]   # (N, dh)
        # scores via dot_general contracting last dims (no explicit K transpose)
        s = jax.lax.dot_general(
            qh.astype(jnp.bfloat16), kh.astype(jnp.bfloat16),
            (((1,), (1,)), ((), ())),
            preferred_element_type=jnp.float32) * scale                # (N, N)
        s = s - jnp.max(s, axis=-1, keepdims=True)
        p = jnp.exp(s)
        inv = pl.reciprocal(jnp.sum(p, axis=-1, keepdims=True), approx=True)
        head_outs.append(_bf16_dot(p * inv, vh))                       # (N, dh)
    attn = jnp.concatenate(head_outs, axis=-1)                         # (N, D), lane-dense

    # --- output projection + residual + LN1 (residual fused into LN) ---
    new_x = _bf16_dot(attn, wo_ref[...]) + bo_ref[...].astype(jnp.float32)
    x1 = _ln(x + new_x, g1_ref[...].astype(jnp.float32),
             b1_ref[...].astype(jnp.float32), eps)

    # --- FFN (Conv1d k=1 == Linear), exact erf-gelu ---
    hdn = _gelu_erf(_bf16_dot(x1, wff1_ref[...]) + bff1_ref[...].astype(jnp.float32))
    y = _bf16_dot(hdn, wff2_ref[...]) + bff2_ref[...].astype(jnp.float32)

    # --- residual + LN2 ---
    o_ref[0] = _ln(x1 + y, g2_ref[...].astype(jnp.float32),
                   b2_ref[...].astype(jnp.float32), eps).astype(o_ref.dtype)


# ---------------------------------------------------------------------------
# Pallas-call wrappers
# ---------------------------------------------------------------------------
def _pad_rows(x, multiple):
    """Pad leading dim up to a multiple (tail handling instead of full-M tiles)."""
    m = x.shape[0]
    pad = (-m) % multiple
    if pad:
        x = jnp.pad(x, ((0, pad), (0, 0)))
    return x, m


def patch_embed_proj_ln(patches, w, b, gamma, beta, eps=1e-5, block_m=128):
    """LN((patches @ w) + b) with row tiling; patches:(M, K), w:(K, D)."""
    m_rows, k = patches.shape
    d = w.shape[1]
    bm = min(block_m, m_rows)
    xp, m0 = _pad_rows(patches, bm)
    mp = xp.shape[0]
    out = pl.pallas_call(
        functools.partial(_matmul_bias_ln_kernel, eps=eps),
        out_shape=jax.ShapeDtypeStruct((mp, d), patches.dtype),
        grid=(mp // bm,),
        in_specs=[
            pl.BlockSpec((bm, k), lambda i: (i, 0)),
            pl.BlockSpec((k, d), lambda i: (0, 0)),
            pl.BlockSpec((1, d), lambda i: (0, 0)),
            pl.BlockSpec((1, d), lambda i: (0, 0)),
            pl.BlockSpec((1, d), lambda i: (0, 0)),
        ],
        out_specs=pl.BlockSpec((bm, d), lambda i: (i, 0)),
        compiler_params=pltpu.CompilerParams(dimension_semantics=("parallel",)),
    )(xp, w, b.reshape(1, d), gamma.reshape(1, d), beta.reshape(1, d))
    return out[:m0] if mp != m0 else out


def layernorm(x, gamma, beta, eps=1e-5, block_m=256):
    """LayerNorm over last dim; x:(M, D)."""
    m_rows, d = x.shape
    bm = min(block_m, m_rows)
    xp, m0 = _pad_rows(x, bm)
    mp = xp.shape[0]
    out = pl.pallas_call(
        functools.partial(_layernorm_kernel, eps=eps),
        out_shape=jax.ShapeDtypeStruct((mp, d), x.dtype),
        grid=(mp // bm,),
        in_specs=[
            pl.BlockSpec((bm, d), lambda i: (i, 0)),
            pl.BlockSpec((1, d), lambda i: (0, 0)),
            pl.BlockSpec((1, d), lambda i: (0, 0)),
        ],
        out_specs=pl.BlockSpec((bm, d), lambda i: (i, 0)),
        compiler_params=pltpu.CompilerParams(dimension_semantics=("parallel",)),
    )(xp, gamma.reshape(1, d), beta.reshape(1, d))
    return out[:m0] if mp != m0 else out


def encoder_layer(x_tok, p, *, n_heads=8, eps=1e-5):
    """Fused EncoderLayer; x_tok: (BT, N, D) -> (BT, N, D). One grid step per image."""
    bt, n_tok, d = x_tok.shape
    dh = d // n_heads
    d_ff = p["w_ff1"].shape[1]
    scale = 1.0 / float(dh) ** 0.5

    tok_spec = pl.BlockSpec((1, n_tok, d), lambda b: (b, 0, 0))

    def full(r, c):
        return pl.BlockSpec((r, c), lambda b: (0, 0))

    return pl.pallas_call(
        functools.partial(_encoder_layer_kernel,
                          n_heads=n_heads, scale=scale, eps=eps),
        out_shape=jax.ShapeDtypeStruct((bt, n_tok, d), x_tok.dtype),
        grid=(bt,),
        in_specs=[
            tok_spec,
            full(d, 3 * d), full(1, 3 * d),      # fused QKV
            full(d, d), full(1, d),              # out projection
            full(1, d), full(1, d),              # LN1
            full(d, d_ff), full(1, d_ff),        # FF1
            full(d_ff, d), full(1, d),           # FF2
            full(1, d), full(1, d),              # LN2
        ],
        out_specs=tok_spec,
        compiler_params=pltpu.CompilerParams(dimension_semantics=("parallel",)),
    )(x_tok,
      p["wqkv"], p["bqkv"].reshape(1, 3 * d),
      p["wo"], p["bo"].reshape(1, d),
      p["g1"].reshape(1, d), p["b1"].reshape(1, d),
      p["w_ff1"], p["b_ff1"].reshape(1, d_ff),
      p["w_ff2"], p["b_ff2"].reshape(1, d),
      p["g2"].reshape(1, d), p["b2"].reshape(1, d))


# ---------------------------------------------------------------------------
# Model (parameters + forward)
# ---------------------------------------------------------------------------
def init_params(key, in_dims, d_model, n_layers=2):
    d_ff = 2 * d_model
    ks = iter(jax.random.split(key, 64))

    def lin(kin, kout):
        return (jax.random.normal(next(ks), (kin, kout), jnp.float32) * 0.02,
                jnp.zeros((kout,), jnp.float32))

    params = {}
    # patch-embed conv: PyTorch weight (out, in, 3, 3) flattened to (in*9, out)
    params["proj_w"], params["proj_b"] = lin(in_dims * 9, d_model)
    params["pe_gamma"] = jnp.ones((d_model,), jnp.float32)
    params["pe_beta"] = jnp.zeros((d_model,), jnp.float32)

    layers = []
    for _ in range(n_layers):
        lp = {}
        # Q/K/V projections stored pre-fused as one (D, 3D) weight.
        lp["wqkv"], lp["bqkv"] = lin(d_model, 3 * d_model)
        lp["wo"], lp["bo"] = lin(d_model, d_model)
        lp["w_ff1"], lp["b_ff1"] = lin(d_model, d_ff)
        lp["w_ff2"], lp["b_ff2"] = lin(d_ff, d_model)
        lp["g1"], lp["b1"] = jnp.ones((d_model,)), jnp.zeros((d_model,))
        lp["g2"], lp["b2"] = jnp.ones((d_model,)), jnp.zeros((d_model,))
        layers.append(lp)
    params["layers"] = layers
    params["gf"] = jnp.ones((d_model,), jnp.float32)
    params["bf"] = jnp.zeros((d_model,), jnp.float32)
    return params


def _patch_embed_im2col(x_nchw):
    """Conv2d(k=3, s=2, p=1) im2col: returns (BT*h*w, C*9), h, w."""
    # TODO(synk): im2col gather stays in XLA glue; fusing it into the projection
    # kernel's index_map is a further optimization for larger images.
    BT, C, H, W = x_nchw.shape
    xp = jnp.pad(x_nchw, ((0, 0), (0, 0), (1, 1), (1, 1)))
    h = (H - 1) // 2 + 1
    w = (W - 1) // 2 + 1
    cols = []
    for ki in range(3):
        for kj in range(3):
            cols.append(xp[:, :, ki:ki + 2 * h - 1:2, kj:kj + 2 * w - 1:2])
    # order (C, ki, kj) to match PyTorch conv weight flattening (out, in, kh, kw)
    patches = jnp.stack(cols, axis=2).reshape(BT, C * 9, h, w)
    patches = patches.transpose(0, 2, 3, 1).reshape(BT * h * w, C * 9)
    return patches, h, w


def sa_forward(x, params, n_heads=8):
    """x: (B, T, C, H, W) float32  ->  (B, T, D, h, w) float32."""
    B, T, C, H, W = x.shape
    d_model = params["proj_w"].shape[1]
    BT = B * T

    # --- OverlapPatchEmbed: conv (im2col + fused matmul+LN Pallas kernel) ---
    patches, h, w = _patch_embed_im2col(x.reshape(BT, C, H, W))
    tok = patch_embed_proj_ln(patches, params["proj_w"], params["proj_b"],
                              params["pe_gamma"], params["pe_beta"])     # (BT*N, D)
    N = h * w
    tok = tok.reshape(BT, N, d_model)

    # --- Encoder: 2 fused encoder-layer kernels + final LayerNorm ---
    # TODO(synk): dropout layers are identity here (eval-mode / deterministic forward).
    for lp in params["layers"]:
        tok = encoder_layer(tok, lp, n_heads=n_heads)
    tok = layernorm(tok.reshape(BT * N, d_model), params["gf"], params["bf"])

    # --- reshape (B, T, h, w, D) -> permute (B, T, D, h, w) ---
    out = tok.reshape(B, T, h, w, d_model).transpose(0, 1, 4, 2, 3)
    return out


# ---------------------------------------------------------------------------
if __name__ == "__main__":
    B, T = 2, 2
    in_dims, d_model = 4, 64          # 8 heads -> head_dim 8
    img = 16                          # -> h = w = 8, N = 64 tokens

    key = jax.random.PRNGKey(0)
    kx, kp = jax.random.split(key)
    x = jax.random.normal(kx, (B, T, in_dims, img, img), jnp.float32)
    params = init_params(kp, in_dims, d_model, n_layers=2)

    out = jax.jit(sa_forward)(x, params)
    out = jax.block_until_ready(out)
    assert out.shape == (B, T, d_model, img // 2, img // 2), out.shape
    assert jnp.all(jnp.isfinite(out))
    print("KERNEL_OK")
</pallas_src>

<mosaic_0001>
module attributes {stable_mosaic.version = 11 : i64} {
  func.func @_matmul_bias_ln_kernel(%arg0: i32, %arg1: memref<128x36xf32, #tpu.memory_space<vmem>>, %arg2: memref<36x64xf32, #tpu.memory_space<vmem>>, %arg3: memref<1x64xf32, #tpu.memory_space<vmem>>, %arg4: memref<1x64xf32, #tpu.memory_space<vmem>>, %arg5: memref<1x64xf32, #tpu.memory_space<vmem>>, %arg6: memref<128x64xf32, #tpu.memory_space<vmem>>) attributes {dimension_semantics = [#tpu.dimension_semantics<parallel>], iteration_bounds = array<i64: 2>, scalar_prefetch = 0 : i64, scratch_operands = 0 : i64, tpu.core_type = #tpu.core_type<tc>, window_params = [{transform_indices = @transform_0, window_bounds = array<i64: 128, 36>}, {pipeline_mode = #tpu.pipeline_mode<synchronous>, transform_indices = @transform_1, window_bounds = array<i64: 36, 64>}, {pipeline_mode = #tpu.pipeline_mode<synchronous>, transform_indices = @transform_2, window_bounds = array<i64: 1, 64>}, {pipeline_mode = #tpu.pipeline_mode<synchronous>, transform_indices = @transform_3, window_bounds = array<i64: 1, 64>}, {pipeline_mode = #tpu.pipeline_mode<synchronous>, transform_indices = @transform_4, window_bounds = array<i64: 1, 64>}, {transform_indices = @transform_5, window_bounds = array<i64: 128, 64>}]} {
    %c0 = arith.constant 0 : index
    %c0_0 = arith.constant 0 : index
    %0 = vector.load %arg1[%c0, %c0_0] : memref<128x36xf32, #tpu.memory_space<vmem>>, vector<128x36xf32>
    %c0_1 = arith.constant 0 : index
    %c0_2 = arith.constant 0 : index
    %1 = vector.load %arg2[%c0_1, %c0_2] : memref<36x64xf32, #tpu.memory_space<vmem>>, vector<36x64xf32>
    %2 = arith.truncf %0 : vector<128x36xf32> to vector<128x36xbf16>
    %3 = arith.truncf %1 : vector<36x64xf32> to vector<36x64xbf16>
    %cst = arith.constant dense<0.000000e+00> : vector<128x64xf32>
    %4 = tpu.matmul %2, %3, %cst {dimension_numbers = #tpu.dot_dimension_numbers<[1], [0], [0], [1], [0, 0, 1, 1], [], []>} : vector<128x36xbf16>, vector<36x64xbf16>, vector<128x64xf32> -> vector<128x64xf32>
    %c0_3 = arith.constant 0 : index
    %c0_4 = arith.constant 0 : index
    %5 = vector.load %arg3[%c0_3, %c0_4] : memref<1x64xf32, #tpu.memory_space<vmem>>, vector<1x64xf32>
    %6 = vector.broadcast %5 : vector<1x64xf32> to vector<128x64xf32>
    %7 = arith.addf %4, %6 : vector<128x64xf32>
    %c0_5 = arith.constant 0 : index
    %c0_6 = arith.constant 0 : index
    %8 = vector.load %arg4[%c0_5, %c0_6] : memref<1x64xf32, #tpu.memory_space<vmem>>, vector<1x64xf32>
    %c0_7 = arith.constant 0 : index
    %c0_8 = arith.constant 0 : index
    %9 = vector.load %arg5[%c0_7, %c0_8] : memref<1x64xf32, #tpu.memory_space<vmem>>, vector<1x64xf32>
    %cst_9 = arith.constant dense<0.000000e+00> : vector<128xf32>
    %10 = vector.multi_reduction <add>, %7, %cst_9 [1] : vector<128x64xf32> to vector<128xf32>
    %11 = vector.shape_cast %10 : vector<128xf32> to vector<128x1xf32>
    %cst_10 = arith.constant 6.400000e+01 : f32
    %12 = vector.broadcast %cst_10 : f32 to vector<128x1xf32>
    %13 = arith.divf %11, %12 : vector<128x1xf32>
    %14 = vector.broadcast %13 : vector<128x1xf32> to vector<128x64xf32>
    %15 = arith.subf %7, %14 : vector<128x64xf32>
    %16 = arith.mulf %15, %15 : vector<128x64xf32>
    %cst_11 = arith.constant dense<0.000000e+00> : vector<128xf32>
    %17 = vector.multi_reduction <add>, %16, %cst_11 [1] : vector<128x64xf32> to vector<128xf32>
    %18 = vector.shape_cast %17 : vector<128xf32> to vector<128x1xf32>
    %cst_12 = arith.constant 6.400000e+01 : f32
    %19 = vector.broadcast %cst_12 : f32 to vector<128x1xf32>
    %20 = arith.divf %18, %19 : vector<128x1xf32>
    %cst_13 = arith.constant 9.99999974E-6 : f32
    %21 = vector.broadcast %cst_13 : f32 to vector<128x1xf32>
    %22 = arith.addf %20, %21 : vector<128x1xf32>
    %23 = math.rsqrt %22 : vector<128x1xf32>
    %24 = vector.broadcast %23 : vector<128x1xf32> to vector<128x64xf32>
    %25 = arith.mulf %15, %24 : vector<128x64xf32>
    %26 = vector.broadcast %8 : vector<1x64xf32> to vector<128x64xf32>
    %27 = arith.mulf %25, %26 : vector<128x64xf32>
    %28 = vector.broadcast %9 : vector<1x64xf32> to vector<128x64xf32>
    %29 = arith.addf %27, %28 : vector<128x64xf32>
    %c0_14 = arith.constant 0 : index
    %c0_15 = arith.constant 0 : index
    %30 = vector.load %arg6[%c0_14, %c0_15] : memref<128x64xf32, #tpu.memory_space<vmem>>, vector<128x64xf32>
    tpu.vector_store %arg6[%c0_14, %c0_15], %29 {strides = array<i32>} : memref<128x64xf32, #tpu.memory_space<vmem>>, vector<128x64xf32>,
    return
  }
  func.func @transform_0(%arg0: i32) -> (i32, i32) {
    %c0_i32 = arith.constant 0 : i32
    %c0_i32_0 = arith.constant 0 : i32
    return %arg0, %c0_i32 : i32, i32
  }
  func.func @transform_1(%arg0: i32) -> (i32, i32) {
    %c0_i32 = arith.constant 0 : i32
    %c0_i32_0 = arith.constant 0 : i32
    %c0_i32_1 = arith.constant 0 : i32
    return %c0_i32, %c0_i32_0 : i32, i32
  }
  func.func @transform_2(%arg0: i32) -> (i32, i32) {
    %c0_i32 = arith.constant 0 : i32
    %c0_i32_0 = arith.constant 0 : i32
    %c0_i32_1 = arith.constant 0 : i32
    return %c0_i32, %c0_i32_0 : i32, i32
  }
  func.func @transform_3(%arg0: i32) -> (i32, i32) {
    %c0_i32 = arith.constant 0 : i32
    %c0_i32_0 = arith.constant 0 : i32
    %c0_i32_1 = arith.constant 0 : i32
    return %c0_i32, %c0_i32_0 : i32, i32
  }
  func.func @transform_4(%arg0: i32) -> (i32, i32) {
    %c0_i32 = arith.constant 0 : i32
    %c0_i32_0 = arith.constant 0 : i32
    %c0_i32_1 = arith.constant 0 : i32
    return %c0_i32, %c0_i32_0 : i32, i32
  }
  func.func @transform_5(%arg0: i32) -> (i32, i32) {
    %c0_i32 = arith.constant 0 : i32
    %c0_i32_0 = arith.constant 0 : i32
    return %arg0, %c0_i32 : i32, i32
  }
}

module attributes {stable_mosaic.version = 11 : i64} {
  func.func @_encoder_layer_kernel(%arg0: i32, %arg1: memref<1x64x64xf32, #tpu.memory_space<vmem>>, %arg2: memref<64x192xf32, #tpu.memory_space<vmem>>, %arg3: memref<1x192xf32, #tpu.memory_space<vmem>>, %arg4: memref<64x64xf32, #tpu.memory_space<vmem>>, %arg5: memref<1x64xf32, #tpu.memory_space<vmem>>, %arg6: memref<1x64xf32, #tpu.memory_space<vmem>>, %arg7: memref<1x64xf32, #tpu.memory_space<vmem>>, %arg8: memref<64x128xf32, #tpu.memory_space<vmem>>, %arg9: memref<1x128xf32, #tpu.memory_space<vmem>>, %arg10: memref<128x64xf32, #tpu.memory_space<vmem>>, %arg11: memref<1x64xf32, #tpu.memory_space<vmem>>, %arg12: memref<1x64xf32, #tpu.memory_space<vmem>>, %arg13: memref<1x64xf32, #tpu.memory_space<vmem>>, %arg14: memref<1x64x64xf32, #tpu.memory_space<vmem>>) attributes {dimension_semantics = [#tpu.dimension_semantics<parallel>], iteration_bounds = array<i64: 4>, scalar_prefetch = 0 : i64, scratch_operands = 0 : i64, tpu.core_type = #tpu.core_type<tc>, window_params = [{transform_indices = @transform_0, window_bounds = array<i64: 1, 64, 64>}, {pipeline_mode = #tpu.pipeline_mode<synchronous>, transform_indices = @transform_1, window_bounds = array<i64: 64, 192>}, {pipeline_mode = #tpu.pipeline_mode<synchronous>, transform_indices = @transform_2, window_bounds = array<i64: 1, 192>}, {pipeline_mode = #tpu.pipeline_mode<synchronous>, transform_indices = @transform_3, window_bounds = array<i64: 64, 64>}, {pipeline_mode = #tpu.pipeline_mode<synchronous>, transform_indices = @transform_4, window_bounds = array<i64: 1, 64>}, {pipeline_mode = #tpu.pipeline_mode<synchronous>, transform_indices = @transform_5, window_bounds = array<i64: 1, 64>}, {pipeline_mode = #tpu.pipeline_mode<synchronous>, transform_indices = @transform_6, window_bounds = array<i64: 1, 64>}, {pipeline_mode = #tpu.pipeline_mode<synchronous>, transform_indices = @transform_7, window_bounds = array<i64: 64, 128>}, {pipeline_mode = #tpu.pipeline_mode<synchronous>, transform_indices = @transform_8, window_bounds = array<i64: 1, 128>}, {pipeline_mode = #tpu.pipeline_mode<synchronous>, transform_indices = @transform_9, window_bounds = array<i64: 128, 64>}, {pipeline_mode = #tpu.pipeline_mode<synchronous>, transform_indices = @transform_10, window_bounds = array<i64: 1, 64>}, {pipeline_mode = #tpu.pipeline_mode<synchronous>, transform_indices = @transform_11, window_bounds = array<i64: 1, 64>}, {pipeline_mode = #tpu.pipeline_mode<synchronous>, transform_indices = @transform_12, window_bounds = array<i64: 1, 64>}, {transform_indices = @transform_13, window_bounds = array<i64: 1, 64, 64>}]} {
    %c0 = arith.constant 0 : index
    %c0_0 = arith.constant 0 : index
    %c0_1 = arith.constant 0 : index
    %0 = vector.load %arg1[%c0, %c0_0, %c0_1] : memref<1x64x64xf32, #tpu.memory_space<vmem>>, vector<1x64x64xf32>
    %1 = vector.shape_cast %0 : vector<1x64x64xf32> to vector<64x64xf32>
    %c0_2 = arith.constant 0 : index
    %c0_3 = arith.constant 0 : index
    %2 = vector.load %arg2[%c0_2, %c0_3] : memref<64x192xf32, #tpu.memory_space<vmem>>, vector<64x192xf32>
    %3 = arith.truncf %1 : vector<64x64xf32> to vector<64x64xbf16>
    %4 = arith.truncf %2 : vector<64x192xf32> to vector<64x192xbf16>
    %cst = arith.constant dense<0.000000e+00> : vector<64x192xf32>
    %5 = tpu.matmul %3, %4, %cst {dimension_numbers = #tpu.dot_dimension_numbers<[1], [0], [0], [1], [0, 0, 1, 1], [], []>} : vector<64x64xbf16>, vector<64x192xbf16>, vector<64x192xf32> -> vector<64x192xf32>
    %c0_4 = arith.constant 0 : index
    %c0_5 = arith.constant 0 : index
    %6 = vector.load %arg3[%c0_4, %c0_5] : memref<1x192xf32, #tpu.memory_space<vmem>>, vector<1x192xf32>
    %7 = vector.broadcast %6 : vector<1x192xf32> to vector<64x192xf32>
    %8 = arith.addf %5, %7 : vector<64x192xf32>
    %9 = vector.extract_strided_slice %8 {offsets = [0, 0], sizes = [64, 8], strides = [1, 1]} : vector<64x192xf32> to vector<64x8xf32>
    %10 = vector.extract_strided_slice %8 {offsets = [0, 64], sizes = [64, 8], strides = [1, 1]} : vector<64x192xf32> to vector<64x8xf32>
    %11 = vector.extract_strided_slice %8 {offsets = [0, 128], sizes = [64, 8], strides = [1, 1]} : vector<64x192xf32> to vector<64x8xf32>
    %12 = arith.truncf %9 : vector<64x8xf32> to vector<64x8xbf16>
    %13 = arith.truncf %10 : vector<64x8xf32> to vector<64x8xbf16>
    %cst_6 = arith.constant dense<0.000000e+00> : vector<64x64xf32>
    %14 = tpu.matmul %12, %13, %cst_6 {dimension_numbers = #tpu.dot_dimension_numbers<[1], [1], [0], [0], [0, 0, 1, 0], [], []>} : vector<64x8xbf16>, vector<64x8xbf16>, vector<64x64xf32> -> vector<64x64xf32>
    %cst_7 = arith.constant 0.353553385 : f32
    %15 = vector.broadcast %cst_7 : f32 to vector<64x64xf32>
    %16 = arith.mulf %14, %15 : vector<64x64xf32>
    %cst_8 = arith.constant dense<0xFF800000> : vector<64xf32>
    %17 = vector.multi_reduction <maximumf>, %16, %cst_8 [1] : vector<64x64xf32> to vector<64xf32>
    %18 = vector.shape_cast %17 : vector<64xf32> to vector<64x1xf32>
    %19 = vector.broadcast %18 : vector<64x1xf32> to vector<64x64xf32>
    %20 = arith.subf %16, %19 : vector<64x64xf32>
    %21 = math.exp %20 : vector<64x64xf32>
    %cst_9 = arith.constant dense<0.000000e+00> : vector<64xf32>
    %22 = vector.multi_reduction <add>, %21, %cst_9 [1] : vector<64x64xf32> to vector<64xf32>
    %23 = vector.shape_cast %22 : vector<64xf32> to vector<64x1xf32>
    %24 = tpu.reciprocal %23 {approx = true} : vector<64x1xf32> -> vector<64x1xf32>
    %25 = vector.broadcast %24 : vector<64x1xf32> to vector<64x64xf32>
    %26 = arith.mulf %21, %25 : vector<64x64xf32>
    %27 = arith.truncf %26 : vector<64x64xf32> to vector<64x64xbf16>
    %28 = arith.truncf %11 : vector<64x8xf32> to vector<64x8xbf16>
    %cst_10 = arith.constant dense<0.000000e+00> : vector<64x8xf32>
    %29 = tpu.matmul %27, %28, %cst_10 {dimension_numbers = #tpu.dot_dimension_numbers<[1], [0], [0], [1], [0, 0, 1, 1], [], []>} : vector<64x64xbf16>, vector<64x8xbf16>, vector<64x8xf32> -> vector<64x8xf32>
    %30 = vector.extract_strided_slice %8 {offsets = [0, 8], sizes = [64, 8], strides = [1, 1]} : vector<64x192xf32> to vector<64x8xf32>
    %31 = vector.extract_strided_slice %8 {offsets = [0, 72], sizes = [64, 8], strides = [1, 1]} : vector<64x192xf32> to vector<64x8xf32>
    %32 = vector.extract_strided_slice %8 {offsets = [0, 136], sizes = [64, 8], strides = [1, 1]} : vector<64x192xf32> to vector<64x8xf32>
    %33 = arith.truncf %30 : vector<64x8xf32> to vector<64x8xbf16>
    %34 = arith.truncf %31 : vector<64x8xf32> to vector<64x8xbf16>
    %cst_11 = arith.constant dense<0.000000e+00> : vector<64x64xf32>
    %35 = tpu.matmul %33, %34, %cst_11 {dimension_numbers = #tpu.dot_dimension_numbers<[1], [1], [0], [0], [0, 0, 1, 0], [], []>} : vector<64x8xbf16>, vector<64x8xbf16>, vector<64x64xf32> -> vector<64x64xf32>
    %cst_12 = arith.constant 0.353553385 : f32
    %36 = vector.broadcast %cst_12 : f32 to vector<64x64xf32>
    %37 = arith.mulf %35, %36 : vector<64x64xf32>
    %cst_13 = arith.constant dense<0xFF800000> : vector<64xf32>
    %38 = vector.multi_reduction <maximumf>, %37, %cst_13 [1] : vector<64x64xf32> to vector<64xf32>
    %39 = vector.shape_cast %38 : vector<64xf32> to vector<64x1xf32>
    %40 = vector.broadcast %39 : vector<64x1xf32> to vector<64x64xf32>
    %41 = arith.subf %37, %40 : vector<64x64xf32>
    %42 = math.exp %41 : vector<64x64xf32>
    %cst_14 = arith.constant dense<0.000000e+00> : vector<64xf32>
    %43 = vector.multi_reduction <add>, %42, %cst_14 [1] : vector<64x64xf32> to vector<64xf32>
    %44 = vector.shape_cast %43 : vector<64xf32> to vector<64x1xf32>
    %45 = tpu.reciprocal %44 {approx = true} : vector<64x1xf32> -> vector<64x1xf32>
    %46 = vector.broadcast %45 : vector<64x1xf32> to vector<64x64xf32>
    %47 = arith.mulf %42, %46 : vector<64x64xf32>
    %48 = arith.truncf %47 : vector<64x64xf32> to vector<64x64xbf16>
    %49 = arith.truncf %32 : vector<64x8xf32> to vector<64x8xbf16>
    %cst_15 = arith.constant dense<0.000000e+00> : vector<64x8xf32>
    %50 = tpu.matmul %48, %49, %cst_15 {dimension_numbers = #tpu.dot_dimension_numbers<[1], [0], [0], [1], [0, 0, 1, 1], [], []>} : vector<64x64xbf16>, vector<64x8xbf16>, vector<64x8xf32> -> vector<64x8xf32>
    %51 = vector.extract_strided_slice %8 {offsets = [0, 16], sizes = [64, 8], strides = [1, 1]} : vector<64x192xf32> to vector<64x8xf32>
    %52 = vector.extract_strided_slice %8 {offsets = [0, 80], sizes = [64, 8], strides = [1, 1]} : vector<64x192xf32> to vector<64x8xf32>
    %53 = vector.extract_strided_slice %8 {offsets = [0, 144], sizes = [64, 8], strides = [1, 1]} : vector<64x192xf32> to vector<64x8xf32>
    %54 = arith.truncf %51 : vector<64x8xf32> to vector<64x8xbf16>
    %55 = arith.truncf %52 : vector<64x8xf32> to vector<64x8xbf16>
    %cst_16 = arith.constant dense<0.000000e+00> : vector<64x64xf32>
    %56 = tpu.matmul %54, %55, %cst_16 {dimension_numbers = #tpu.dot_dimension_numbers<[1], [1], [0], [0], [0, 0, 1, 0], [], []>} : vector<64x8xbf16>, vector<64x8xbf16>, vector<64x64xf32> -> vector<64x64xf32>
    %cst_17 = arith.constant 0.353553385 : f32
    %57 = vector.broadcast %cst_17 : f32 to vector<64x64xf32>
    %58 = arith.mulf %56, %57 : vector<64x64xf32>
    %cst_18 = arith.constant dense<0xFF800000> : vector<64xf32>
    %59 = vector.multi_reduction <maximumf>, %58, %cst_18 [1] : vector<64x64xf32> to vector<64xf32>
    %60 = vector.shape_cast %59 : vector<64xf32> to vector<64x1xf32>
    %61 = vector.broadcast %60 : vector<64x1xf32> to vector<64x64xf32>
    %62 = arith.subf %58, %61 : vector<64x64xf32>
    %63 = math.exp %62 : vector<64x64xf32>
    %cst_19 = arith.constant dense<0.000000e+00> : vector<64xf32>
    %64 = vector.multi_reduction <add>, %63, %cst_19 [1] : vector<64x64xf32> to vector<64xf32>
    %65 = vector.shape_cast %64 : vector<64xf32> to vector<64x1xf32>
    %66 = tpu.reciprocal %65 {approx = true} : vector<64x1xf32> -> vector<64x1xf32>
    %67 = vector.broadcast %66 : vector<64x1xf32> to vector<64x64xf32>
    %68 = arith.mulf %63, %67 : vector<64x64xf32>
    %69 = arith.truncf %68 : vector<64x64xf32> to vector<64x64xbf16>
    %70 = arith.truncf %53 : vector<64x8xf32> to vector<64x8xbf16>
    %cst_20 = arith.constant dense<0.000000e+00> : vector<64x8xf32>
    %71 = tpu.matmul %69, %70, %cst_20 {dimension_numbers = #tpu.dot_dimension_numbers<[1], [0], [0], [1], [0, 0, 1, 1], [], []>} : vector<64x64xbf16>, vector<64x8xbf16>, vector<64x8xf32> -> vector<64x8xf32>
    %72 = vector.extract_strided_slice %8 {offsets = [0, 24], sizes = [64, 8], strides = [1, 1]} : vector<64x192xf32> to vector<64x8xf32>
    %73 = vector.extract_strided_slice %8 {offsets = [0, 88], sizes = [64, 8], strides = [1, 1]} : vector<64x192xf32> to vector<64x8xf32>
    %74 = vector.extract_strided_slice %8 {offsets = [0, 152], sizes = [64, 8], strides = [1, 1]} : vector<64x192xf32> to vector<64x8xf32>
    %75 = arith.truncf %72 : vector<64x8xf32> to vector<64x8xbf16>
    %76 = arith.truncf %73 : vector<64x8xf32> to vector<64x8xbf16>
    %cst_21 = arith.constant dense<0.000000e+00> : vector<64x64xf32>
    %77 = tpu.matmul %75, %76, %cst_21 {dimension_numbers = #tpu.dot_dimension_numbers<[1], [1], [0], [0], [0, 0, 1, 0], [], []>} : vector<64x8xbf16>, vector<64x8xbf16>, vector<64x64xf32> -> vector<64x64xf32>
    %cst_22 = arith.constant 0.353553385 : f32
    %78 = vector.broadcast %cst_22 : f32 to vector<64x64xf32>
    %79 = arith.mulf %77, %78 : vector<64x64xf32>
    %cst_23 = arith.constant dense<0xFF800000> : vector<64xf32>
    %80 = vector.multi_reduction <maximumf>, %79, %cst_23 [1] : vector<64x64xf32> to vector<64xf32>
    %81 = vector.shape_cast %80 : vector<64xf32> to vector<64x1xf32>
    %82 = vector.broadcast %81 : vector<64x1xf32> to vector<64x64xf32>
    %83 = arith.subf %79, %82 : vector<64x64xf32>
    %84 = math.exp %83 : vector<64x64xf32>
    %cst_24 = arith.constant dense<0.000000e+00> : vector<64xf32>
    %85 = vector.multi_reduction <add>, %84, %cst_24 [1] : vector<64x64xf32> to vector<64xf32>
    %86 = vector.shape_cast %85 : vector<64xf32> to vector<64x1xf32>
    %87 = tpu.reciprocal %86 {approx = true} : vector<64x1xf32> -> vector<64x1xf32>
    %88 = vector.broadcast %87 : vector<64x1xf32> to vector<64x64xf32>
    %89 = arith.mulf %84, %88 : vector<64x64xf32>
    %90 = arith.truncf %89 : vector<64x64xf32> to vector<64x64xbf16>
    %91 = arith.truncf %74 : vector<64x8xf32> to vector<64x8xbf16>
    %cst_25 = arith.constant dense<0.000000e+00> : vector<64x8xf32>
    %92 = tpu.matmul %90, %91, %cst_25 {dimension_numbers = #tpu.dot_dimension_numbers<[1], [0], [0], [1], [0, 0, 1, 1], [], []>} : vector<64x64xbf16>, vector<64x8xbf16>, vector<64x8xf32> -> vector<64x8xf32>
    %93 = vector.extract_strided_slice %8 {offsets = [0, 32], sizes = [64, 8], strides = [1, 1]} : vector<64x192xf32> to vector<64x8xf32>
    %94 = vector.extract_strided_slice %8 {offsets = [0, 96], sizes = [64, 8], strides = [1, 1]} : vector<64x192xf32> to vector<64x8xf32>
    %95 = vector.extract_strided_slice %8 {offsets = [0, 160], sizes = [64, 8], strides = [1, 1]} : vector<64x192xf32> to vector<64x8xf32>
    %96 = arith.truncf %93 : vector<64x8xf32> to vector<64x8xbf16>
    %97 = arith.truncf %94 : vector<64x8xf32> to vector<64x8xbf16>
    %cst_26 = arith.constant dense<0.000000e+00> : vector<64x64xf32>
    %98 = tpu.matmul %96, %97, %cst_26 {dimension_numbers = #tpu.dot_dimension_numbers<[1], [1], [0], [0], [0, 0, 1, 0], [], []>} : vector<64x8xbf16>, vector<64x8xbf16>, vector<64x64xf32> -> vector<64x64xf32>
    %cst_27 = arith.constant 0.353553385 : f32
    %99 = vector.broadcast %cst_27 : f32 to vector<64x64xf32>
    %100 = arith.mulf %98, %99 : vector<64x64xf32>
    %cst_28 = arith.constant dense<0xFF800000> : vector<64xf32>
    %101 = vector.multi_reduction <maximumf>, %100, %cst_28 [1] : vector<64x64xf32> to vector<64xf32>
    %102 = vector.shape_cast %101 : vector<64xf32> to vector<64x1xf32>
    %103 = vector.broadcast %102 : vector<64x1xf32> to vector<64x64xf32>
    %104 = arith.subf %100, %103 : vector<64x64xf32>
    %105 = math.exp %104 : vector<64x64xf32>
    %cst_29 = arith.constant dense<0.000000e+00> : vector<64xf32>
    %106 = vector.multi_reduction <add>, %105, %cst_29 [1] : vector<64x64xf32> to vector<64xf32>
    %107 = vector.shape_cast %106 : vector<64xf32> to vector<64x1xf32>
    %108 = tpu.reciprocal %107 {approx = true} : vector<64x1xf32> -> vector<64x1xf32>
    %109 = vector.broadcast %108 : vector<64x1xf32> to vector<64x64xf32>
    %110 = arith.mulf %105, %109 : vector<64x64xf32>
    %111 = arith.truncf %110 : vector<64x64xf32> to vector<64x64xbf16>
    %112 = arith.truncf %95 : vector<64x8xf32> to vector<64x8xbf16>
    %cst_30 = arith.constant dense<0.000000e+00> : vector<64x8xf32>
    %113 = tpu.matmul %111, %112, %cst_30 {dimension_numbers = #tpu.dot_dimension_numbers<[1], [0], [0], [1], [0, 0, 1, 1], [], []>} : vector<64x64xbf16>, vector<64x8xbf16>, vector<64x8xf32> -> vector<64x8xf32>
    %114 = vector.extract_strided_slice %8 {offsets = [0, 40], sizes = [64, 8], strides = [1, 1]} : vector<64x192xf32> to vector<64x8xf32>
    %115 = vector.extract_strided_slice %8 {offsets = [0, 104], sizes = [64, 8], strides = [1, 1]} : vector<64x192xf32> to vector<64x8xf32>
    %116 = vector.extract_strided_slice %8 {offsets = [0, 168], sizes = [64, 8], strides = [1, 1]} : vector<64x192xf32> to vector<64x8xf32>
    %117 = arith.truncf %114 : vector<64x8xf32> to vector<64x8xbf16>
    %118 = arith.truncf %115 : vector<64x8xf32> to vector<64x8xbf16>
    %cst_31 = arith.constant dense<0.000000e+00> : vector<64x64xf32>
    %119 = tpu.matmul %117, %118, %cst_31 {dimension_numbers = #tpu.dot_dimension_numbers<[1], [1], [0], [0], [0, 0, 1, 0], [], []>} : vector<64x8xbf16>, vector<64x8xbf16>, vector<64x64xf32> -> vector<64x64xf32>
    %cst_32 = arith.constant 0.353553385 : f32
    %120 = vector.broadcast %cst_32 : f32 to vector<64x64xf32>
    %121 = arith.mulf %119, %120 : vector<64x64xf32>
    %cst_33 = arith.constant dense<0xFF800000> : vector<64xf32>
    %122 = vector.multi_reduction <maximumf>, %121, %cst_33 [1] : vector<64x64xf32> to vector<64xf32>
    %123 = vector.shape_cast %122 : vector<64xf32> to vector<64x1xf32>
    %124 = vector.broadcast %123 : vector<64x1xf32> to vector<64x64xf32>
    %125 = arith.subf %121, %124 : vector<64x64xf32>
    %126 = math.exp %125 : vector<64x64xf32>
    %cst_34 = arith.constant dense<0.000000e+00> : vector<64xf32>
    %127 = vector.multi_reduction <add>, %126, %cst_34 [1] : vector<64x64xf32> to vector<64xf32>
    %128 = vector.shape_cast %127 : vector<64xf32> to vector<64x1xf32>
    %129 = tpu.reciprocal %128 {approx = true} : vector<64x1xf32> -> vector<64x1xf32>
    %130 = vector.broadcast %129 : vector<64x1xf32> to vector<64x64xf32>
    %131 = arith.mulf %126, %130 : vector<64x64xf32>
    %132 = arith.truncf %131 : vector<64x64xf32> to vector<64x64xbf16>
    %133 = arith.truncf %116 : vector<64x8xf32> to vector<64x8xbf16>
    %cst_35 = arith.constant dense<0.000000e+00> : vector<64x8xf32>
    %134 = tpu.matmul %132, %133, %cst_35 {dimension_numbers = #tpu.dot_dimension_numbers<[1], [0], [0], [1], [0, 0, 1, 1], [], []>} : vector<64x64xbf16>, vector<64x8xbf16>, vector<64x8xf32> -> vector<64x8xf32>
    %135 = vector.extract_strided_slice %8 {offsets = [0, 48], sizes = [64, 8], strides = [1, 1]} : vector<64x192xf32> to vector<64x8xf32>
    %136 = vector.extract_strided_slice %8 {offsets = [0, 112], sizes = [64, 8], strides = [1, 1]} : vector<64x192xf32> to vector<64x8xf32>
    %137 = vector.extract_strided_slice %8 {offsets = [0, 176], sizes = [64, 8], strides = [1, 1]} : vector<64x192xf32> to vector<64x8xf32>
    %138 = arith.truncf %135 : vector<64x8xf32> to vector<64x8xbf16>
    %139 = arith.truncf %136 : vector<64x8xf32> to vector<64x8xbf16>
    %cst_36 = arith.constant dense<0.000000e+00> : vector<64x64xf32>
    %140 = tpu.matmul %138, %139, %cst_36 {dimension_numbers = #tpu.dot_dimension_numbers<[1], [1], [0], [0], [0, 0, 1, 0], [], []>} : vector<64x8xbf16>, vector<64x8xbf16>, vector<64x64xf32> -> vector<64x64xf32>
    %cst_37 = arith.constant 0.353553385 : f32
    %141 = vector.broadcast %cst_37 : f32 to vector<64x64xf32>
    %142 = arith.mulf %140, %141 : vector<64x64xf32>
    %cst_38 = arith.constant dense<0xFF800000> : vector<64xf32>
    %143 = vector.multi_reduction <maximumf>, %142, %cst_38 [1] : vector<64x64xf32> to vector<64xf32>
    %144 = vector.shape_cast %143 : vector<64xf32> to vector<64x1xf32>
    %145 = vector.broadcast %144 : vector<64x1xf32> to vector<64x64xf32>
    %146 = arith.subf %142, %145 : vector<64x64xf32>
    %147 = math.exp %146 : vector<64x64xf32>
    %cst_39 = arith.constant dense<0.000000e+00> : vector<64xf32>
    %148 = vector.multi_reduction <add>, %147, %cst_39 [1] : vector<64x64xf32> to vector<64xf32>
    %149 = vector.shape_cast %148 : vector<64xf32> to vector<64x1xf32>
    %150 = tpu.reciprocal %149 {approx = true} : vector<64x1xf32> -> vector<64x1xf32>
    %151 = vector.broadcast %150 : vector<64x1xf32> to vector<64x64xf32>
    %152 = arith.mulf %147, %151 : vector<64x64xf32>
    %153 = arith.truncf %152 : vector<64x64xf32> to vector<64x64xbf16>
    %154 = arith.truncf %137 : vector<64x8xf32> to vector<64x8xbf16>
    %cst_40 = arith.constant dense<0.000000e+00> : vector<64x8xf32>
    %155 = tpu.matmul %153, %154, %cst_40 {dimension_numbers = #tpu.dot_dimension_numbers<[1], [0], [0], [1], [0, 0, 1, 1], [], []>} : vector<64x64xbf16>, vector<64x8xbf16>, vector<64x8xf32> -> vector<64x8xf32>
    %156 = vector.extract_strided_slice %8 {offsets = [0, 56], sizes = [64, 8], strides = [1, 1]} : vector<64x192xf32> to vector<64x8xf32>
    %157 = vector.extract_strided_slice %8 {offsets = [0, 120], sizes = [64, 8], strides = [1, 1]} : vector<64x192xf32> to vector<64x8xf32>
    %158 = vector.extract_strided_slice %8 {offsets = [0, 184], sizes = [64, 8], strides = [1, 1]} : vector<64x192xf32> to vector<64x8xf32>
    %159 = arith.truncf %156 : vector<64x8xf32> to vector<64x8xbf16>
    %160 = arith.truncf %157 : vector<64x8xf32> to vector<64x8xbf16>
    %cst_41 = arith.constant dense<0.000000e+00> : vector<64x64xf32>
    %161 = tpu.matmul %159, %160, %cst_41 {dimension_numbers = #tpu.dot_dimension_numbers<[1], [1], [0], [0], [0, 0, 1, 0], [], []>} : vector<64x8xbf16>, vector<64x8xbf16>, vector<64x64xf32> -> vector<64x64xf32>
    %cst_42 = arith.constant 0.353553385 : f32
    %162 = vector.broadcast %cst_42 : f32 to vector<64x64xf32>
    %163 = arith.mulf %161, %162 : vector<64x64xf32>
    %cst_43 = arith.constant dense<0xFF800000> : vector<64xf32>
    %164 = vector.multi_reduction <maximumf>, %163, %cst_43 [1] : vector<64x64xf32> to vector<64xf32>
    %165 = vector.shape_cast %164 : vector<64xf32> to vector<64x1xf32>
    %166 = vector.broadcast %165 : vector<64x1xf32> to vector<64x64xf32>
    %167 = arith.subf %163, %166 : vector<64x64xf32>
    %168 = math.exp %167 : vector<64x64xf32>
    %cst_44 = arith.constant dense<0.000000e+00> : vector<64xf32>
    %169 = vector.multi_reduction <add>, %168, %cst_44 [1] : vector<64x64xf32> to vector<64xf32>
    %170 = vector.shape_cast %169 : vector<64xf32> to vector<64x1xf32>
    %171 = tpu.reciprocal %170 {approx = true} : vector<64x1xf32> -> vector<64x1xf32>
    %172 = vector.broadcast %171 : vector<64x1xf32> to vector<64x64xf32>
    %173 = arith.mulf %168, %172 : vector<64x64xf32>
    %174 = arith.truncf %173 : vector<64x64xf32> to vector<64x64xbf16>
    %175 = arith.truncf %158 : vector<64x8xf32> to vector<64x8xbf16>
    %cst_45 = arith.constant dense<0.000000e+00> : vector<64x8xf32>
    %176 = tpu.matmul %174, %175, %cst_45 {dimension_numbers = #tpu.dot_dimension_numbers<[1], [0], [0], [1], [0, 0, 1, 1], [], []>} : vector<64x64xbf16>, vector<64x8xbf16>, vector<64x8xf32> -> vector<64x8xf32>
    %177 = tpu.concatenate %29, %50, %71, %92, %113, %134, %155, %176 in 1 : vector<64x8xf32>, vector<64x8xf32>, vector<64x8xf32>, vector<64x8xf32>, vector<64x8xf32>, vector<64x8xf32>, vector<64x8xf32>, vector<64x8xf32> -> vector<64x64xf32>
    %c0_46 = arith.constant 0 : index
    %c0_47 = arith.constant 0 : index
    %178 = vector.load %arg4[%c0_46, %c0_47] : memref<64x64xf32, #tpu.memory_space<vmem>>, vector<64x64xf32>
    %179 = arith.truncf %177 : vector<64x64xf32> to vector<64x64xbf16>
    %180 = arith.truncf %178 : vector<64x64xf32> to vector<64x64xbf16>
    %cst_48 = arith.constant dense<0.000000e+00> : vector<64x64xf32>
    %181 = tpu.matmul %179, %180, %cst_48 {dimension_numbers = #tpu.dot_dimension_numbers<[1], [0], [0], [1], [0, 0, 1, 1], [], []>} : vector<64x64xbf16>, vector<64x64xbf16>, vector<64x64xf32> -> vector<64x64xf32>
    %c0_49 = arith.constant 0 : index
    %c0_50 = arith.constant 0 : index
    %182 = vector.load %arg5[%c0_49, %c0_50] : memref<1x64xf32, #tpu.memory_space<vmem>>, vector<1x64xf32>
    %183 = vector.broadcast %182 : vector<1x64xf32> to vector<64x64xf32>
    %184 = arith.addf %181, %183 : vector<64x64xf32>
    %185 = arith.addf %1, %184 : vector<64x64xf32>
    %c0_51 = arith.constant 0 : index
    %c0_52 = arith.constant 0 : index
    %186 = vector.load %arg6[%c0_51, %c0_52] : memref<1x64xf32, #tpu.memory_space<vmem>>, vector<1x64xf32>
    %c0_53 = arith.constant 0 : index
    %c0_54 = arith.constant 0 : index
    %187 = vector.load %arg7[%c0_53, %c0_54] : memref<1x64xf32, #tpu.memory_space<vmem>>, vector<1x64xf32>
    %cst_55 = arith.constant dense<0.000000e+00> : vector<64xf32>
    %188 = vector.multi_reduction <add>, %185, %cst_55 [1] : vector<64x64xf32> to vector<64xf32>
    %189 = vector.shape_cast %188 : vector<64xf32> to vector<64x1xf32>
    %cst_56 = arith.constant 6.400000e+01 : f32
    %190 = vector.broadcast %cst_56 : f32 to vector<64x1xf32>
    %191 = arith.divf %189, %190 : vector<64x1xf32>
    %192 = vector.broadcast %191 : vector<64x1xf32> to vector<64x64xf32>
    %193 = arith.subf %185, %192 : vector<64x64xf32>
    %194 = arith.mulf %193, %193 : vector<64x64xf32>
    %cst_57 = arith.constant dense<0.000000e+00> : vector<64xf32>
    %195 = vector.multi_reduction <add>, %194, %cst_57 [1] : vector<64x64xf32> to vector<64xf32>
    %196 = vector.shape_cast %195 : vector<64xf32> to vector<64x1xf32>
    %cst_58 = arith.constant 6.400000e+01 : f32
    %197 = vector.broadcast %cst_58 : f32 to vector<64x1xf32>
    %198 = arith.divf %196, %197 : vector<64x1xf32>
    %cst_59 = arith.constant 9.99999974E-6 : f32
    %199 = vector.broadcast %cst_59 : f32 to vector<64x1xf32>
    %200 = arith.addf %198, %199 : vector<64x1xf32>
    %201 = math.rsqrt %200 : vector<64x1xf32>
    %202 = vector.broadcast %201 : vector<64x1xf32> to vector<64x64xf32>
    %203 = arith.mulf %193, %202 : vector<64x64xf32>
    %204 = vector.broadcast %186 : vector<1x64xf32> to vector<64x64xf32>
    %205 = arith.mulf %203, %204 : vector<64x64xf32>
    %206 = vector.broadcast %187 : vector<1x64xf32> to vector<64x64xf32>
    %207 = arith.addf %205, %206 : vector<64x64xf32>
    %c0_60 = arith.constant 0 : index
    %c0_61 = arith.constant 0 : index
    %208 = vector.load %arg8[%c0_60, %c0_61] : memref<64x128xf32, #tpu.memory_space<vmem>>, vector<64x128xf32>
    %209 = arith.truncf %207 : vector<64x64xf32> to vector<64x64xbf16>
    %210 = arith.truncf %208 : vector<64x128xf32> to vector<64x128xbf16>
    %cst_62 = arith.constant dense<0.000000e+00> : vector<64x128xf32>
    %211 = tpu.matmul %209, %210, %cst_62 {dimension_numbers = #tpu.dot_dimension_numbers<[1], [0], [0], [1], [0, 0, 1, 1], [], []>} : vector<64x64xbf16>, vector<64x128xbf16>, vector<64x128xf32> -> vector<64x128xf32>
    %c0_63 = arith.constant 0 : index
    %c0_64 = arith.constant 0 : index
    %212 = vector.load %arg9[%c0_63, %c0_64] : memref<1x128xf32, #tpu.memory_space<vmem>>, vector<1x128xf32>
    %213 = vector.broadcast %212 : vector<1x128xf32> to vector<64x128xf32>
    %214 = arith.addf %211, %213 : vector<64x128xf32>
    %cst_65 = arith.constant 5.000000e-01 : f32
    %215 = vector.broadcast %cst_65 : f32 to vector<64x128xf32>
    %216 = arith.mulf %215, %214 : vector<64x128xf32>
    %cst_66 = arith.constant 0.707106769 : f32
    %217 = vector.broadcast %cst_66 : f32 to vector<64x128xf32>
    %218 = arith.mulf %214, %217 : vector<64x128xf32>
    %219 = math.erf %218 : vector<64x128xf32>
    %cst_67 = arith.constant 1.000000e+00 : f32
    %220 = vector.broadcast %cst_67 : f32 to vector<64x128xf32>
    %221 = arith.addf %220, %219 : vector<64x128xf32>
    %222 = arith.mulf %216, %221 : vector<64x128xf32>
    %c0_68 = arith.constant 0 : index
    %c0_69 = arith.constant 0 : index
    %223 = vector.load %arg10[%c0_68, %c0_69] : memref<128x64xf32, #tpu.memory_space<vmem>>, vector<128x64xf32>
    %224 = arith.truncf %222 : vector<64x128xf32> to vector<64x128xbf16>
    %225 = arith.truncf %223 : vector<128x64xf32> to vector<128x64xbf16>
    %cst_70 = arith.constant dense<0.000000e+00> : vector<64x64xf32>
    %226 = tpu.matmul %224, %225, %cst_70 {dimension_numbers = #tpu.dot_dimension_numbers<[1], [0], [0], [1], [0, 0, 1, 1], [], []>} : vector<64x128xbf16>, vector<128x64xbf16>, vector<64x64xf32> -> vector<64x64xf32>
    %c0_71 = arith.constant 0 : index
    %c0_72 = arith.constant 0 : index
    %227 = vector.load %arg11[%c0_71, %c0_72] : memref<1x64xf32, #tpu.memory_space<vmem>>, vector<1x64xf32>
    %228 = vector.broadcast %227 : vector<1x64xf32> to vector<64x64xf32>
    %229 = arith.addf %226, %228 : vector<64x64xf32>
    %230 = arith.addf %207, %229 : vector<64x64xf32>
    %c0_73 = arith.constant 0 : index
    %c0_74 = arith.constant 0 : index
    %231 = vector.load %arg12[%c0_73, %c0_74] : memref<1x64xf32, #tpu.memory_space<vmem>>, vector<1x64xf32>
    %c0_75 = arith.constant 0 : index
    %c0_76 = arith.constant 0 : index
    %232 = vector.load %arg13[%c0_75, %c0_76] : memref<1x64xf32, #tpu.memory_space<vmem>>, vector<1x64xf32>
    %cst_77 = arith.constant dense<0.000000e+00> : vector<64xf32>
    %233 = vector.multi_reduction <add>, %230, %cst_77 [1] : vector<64x64xf32> to vector<64xf32>
    %234 = vector.shape_cast %233 : vector<64xf32> to vector<64x1xf32>
    %cst_78 = arith.constant 6.400000e+01 : f32
    %235 = vector.broadcast %cst_78 : f32 to vector<64x1xf32>
    %236 = arith.divf %234, %235 : vector<64x1xf32>
    %237 = vector.broadcast %236 : vector<64x1xf32> to vector<64x64xf32>
    %238 = arith.subf %230, %237 : vector<64x64xf32>
    %239 = arith.mulf %238, %238 : vector<64x64xf32>
    %cst_79 = arith.constant dense<0.000000e+00> : vector<64xf32>
    %240 = vector.multi_reduction <add>, %239, %cst_79 [1] : vector<64x64xf32> to vector<64xf32>
    %241 = vector.shape_cast %240 : vector<64xf32> to vector<64x1xf32>
    %cst_80 = arith.constant 6.400000e+01 : f32
    %242 = vector.broadcast %cst_80 : f32 to vector<64x1xf32>
    %243 = arith.divf %241, %242 : vector<64x1xf32>
    %cst_81 = arith.constant 9.99999974E-6 : f32
    %244 = vector.broadcast %cst_81 : f32 to vector<64x1xf32>
    %245 = arith.addf %243, %244 : vector<64x1xf32>
    %246 = math.rsqrt %245 : vector<64x1xf32>
    %247 = vector.broadcast %246 : vector<64x1xf32> to vector<64x64xf32>
    %248 = arith.mulf %238, %247 : vector<64x64xf32>
    %249 = vector.broadcast %231 : vector<1x64xf32> to vector<64x64xf32>
    %250 = arith.mulf %248, %249 : vector<64x64xf32>
    %251 = vector.broadcast %232 : vector<1x64xf32> to vector<64x64xf32>
    %252 = arith.addf %250, %251 : vector<64x64xf32>
    %c0_82 = arith.constant 0 : index
    %c0_83 = arith.constant 0 : index
    %c0_84 = arith.constant 0 : index
    %253 = vector.load %arg14[%c0_82, %c0_83, %c0_84] : memref<1x64x64xf32, #tpu.memory_space<vmem>>, vector<1x64x64xf32>
    %254 = vector.shape_cast %253 : vector<1x64x64xf32> to vector<64x64xf32>
    %255 = vector.shape_cast %252 : vector<64x64xf32> to vector<1x64x64xf32>
    tpu.vector_store %arg14[%c0_82, %c0_83, %c0_84], %255 {strides = array<i32>} : memref<1x64x64xf32, #tpu.memory_space<vmem>>, vector<1x64x64xf32>,
    return
  }
  func.func @transform_0(%arg0: i32) -> (i32, i32, i32) {
    %c0_i32 = arith.constant 0 : i32
    %c0_i32_0 = arith.constant 0 : i32
    %c0_i32_1 = arith.constant 0 : i32
    return %arg0, %c0_i32, %c0_i32_0 : i32, i32, i32
  }
  func.func @transform_1(%arg0: i32) -> (i32, i32) {
    %c0_i32 = arith.constant 0 : i32
    %c0_i32_0 = arith.constant 0 : i32
    %c0_i32_1 = arith.constant 0 : i32
    return %c0_i32, %c0_i32_0 : i32, i32
  }
  func.func @transform_2(%arg0: i32) -> (i32, i32) {
    %c0_i32 = arith.constant 0 : i32
    %c0_i32_0 = arith.constant 0 : i32
    %c0_i32_1 = arith.constant 0 : i32
    return %c0_i32, %c0_i32_0 : i32, i32
  }
  func.func @transform_3(%arg0: i32) -> (i32, i32) {
    %c0_i32 = arith.constant 0 : i32
    %c0_i32_0 = arith.constant 0 : i32
    %c0_i32_1 = arith.constant 0 : i32
    return %c0_i32, %c0_i32_0 : i32, i32
  }
  func.func @transform_4(%arg0: i32) -> (i32, i32) {
    %c0_i32 = arith.constant 0 : i32
    %c0_i32_0 = arith.constant 0 : i32
    %c0_i32_1 = arith.constant 0 : i32
    return %c0_i32, %c0_i32_0 : i32, i32
  }
  func.func @transform_5(%arg0: i32) -> (i32, i32) {
    %c0_i32 = arith.constant 0 : i32
    %c0_i32_0 = arith.constant 0 : i32
    %c0_i32_1 = arith.constant 0 : i32
    return %c0_i32, %c0_i32_0 : i32, i32
  }
  func.func @transform_6(%arg0: i32) -> (i32, i32) {
    %c0_i32 = arith.constant 0 : i32
    %c0_i32_0 = arith.constant 0 : i32
    %c0_i32_1 = arith.constant 0 : i32
    return %c0_i32, %c0_i32_0 : i32, i32
  }
  func.func @transform_7(%arg0: i32) -> (i32, i32) {
    %c0_i32 = arith.constant 0 : i32
    %c0_i32_0 = arith.constant 0 : i32
    %c0_i32_1 = arith.constant 0 : i32
    return %c0_i32, %c0_i32_0 : i32, i32
  }
  func.func @transform_8(%arg0: i32) -> (i32, i32) {
    %c0_i32 = arith.constant 0 : i32
    %c0_i32_0 = arith.constant 0 : i32
    %c0_i32_1 = arith.constant 0 : i32
    return %c0_i32, %c0_i32_0 : i32, i32
  }
  func.func @transform_9(%arg0: i32) -> (i32, i32) {
    %c0_i32 = arith.constant 0 : i32
    %c0_i32_0 = arith.constant 0 : i32
    %c0_i32_1 = arith.constant 0 : i32
    return %c0_i32, %c0_i32_0 : i32, i32
  }
  func.func @transform_10(%arg0: i32) -> (i32, i32) {
    %c0_i32 = arith.constant 0 : i32
    %c0_i32_0 = arith.constant 0 : i32
    %c0_i32_1 = arith.constant 0 : i32
    return %c0_i32, %c0_i32_0 : i32, i32
  }
  func.func @transform_11(%arg0: i32) -> (i32, i32) {
    %c0_i32 = arith.constant 0 : i32
    %c0_i32_0 = arith.constant 0 : i32
    %c0_i32_1 = arith.constant 0 : i32
    return %c0_i32, %c0_i32_0 : i32, i32
  }
  func.func @transform_12(%arg0: i32) -> (i32, i32) {
    %c0_i32 = arith.constant 0 : i32
    %c0_i32_0 = arith.constant 0 : i32
    %c0_i32_1 = arith.constant 0 : i32
    return %c0_i32, %c0_i32_0 : i32, i32
  }
  func.func @transform_13(%arg0: i32) -> (i32, i32, i32) {
    %c0_i32 = arith.constant 0 : i32
    %c0_i32_0 = arith.constant 0 : i32
    %c0_i32_1 = arith.constant 0 : i32
    return %arg0, %c0_i32, %c0_i32_0 : i32, i32, i32
  }
}

module attributes {stable_mosaic.version = 11 : i64} {
  func.func @_layernorm_kernel(%arg0: i32, %arg1: memref<256x64xf32, #tpu.memory_space<vmem>>, %arg2: memref<1x64xf32, #tpu.memory_space<vmem>>, %arg3: memref<1x64xf32, #tpu.memory_space<vmem>>, %arg4: memref<256x64xf32, #tpu.memory_space<vmem>>) attributes {dimension_semantics = [#tpu.dimension_semantics<parallel>], iteration_bounds = array<i64: 1>, scalar_prefetch = 0 : i64, scratch_operands = 0 : i64, tpu.core_type = #tpu.core_type<tc>, window_params = [{transform_indices = @transform_0, window_bounds = array<i64: 256, 64>}, {pipeline_mode = #tpu.pipeline_mode<synchronous>, transform_indices = @transform_1, window_bounds = array<i64: 1, 64>}, {pipeline_mode = #tpu.pipeline_mode<synchronous>, transform_indices = @transform_2, window_bounds = array<i64: 1, 64>}, {transform_indices = @transform_3, window_bounds = array<i64: 256, 64>}]} {
    %c0 = arith.constant 0 : index
    %c0_0 = arith.constant 0 : index
    %0 = vector.load %arg1[%c0, %c0_0] : memref<256x64xf32, #tpu.memory_space<vmem>>, vector<256x64xf32>
    %c0_1 = arith.constant 0 : index
    %c0_2 = arith.constant 0 : index
    %1 = vector.load %arg2[%c0_1, %c0_2] : memref<1x64xf32, #tpu.memory_space<vmem>>, vector<1x64xf32>
    %c0_3 = arith.constant 0 : index
    %c0_4 = arith.constant 0 : index
    %2 = vector.load %arg3[%c0_3, %c0_4] : memref<1x64xf32, #tpu.memory_space<vmem>>, vector<1x64xf32>
    %cst = arith.constant dense<0.000000e+00> : vector<256xf32>
    %3 = vector.multi_reduction <add>, %0, %cst [1] : vector<256x64xf32> to vector<256xf32>
    %4 = vector.shape_cast %3 : vector<256xf32> to vector<256x1xf32>
    %cst_5 = arith.constant 6.400000e+01 : f32
    %5 = vector.broadcast %cst_5 : f32 to vector<256x1xf32>
    %6 = arith.divf %4, %5 : vector<256x1xf32>
    %7 = vector.broadcast %6 : vector<256x1xf32> to vector<256x64xf32>
    %8 = arith.subf %0, %7 : vector<256x64xf32>
    %9 = arith.mulf %8, %8 : vector<256x64xf32>
    %cst_6 = arith.constant dense<0.000000e+00> : vector<256xf32>
    %10 = vector.multi_reduction <add>, %9, %cst_6 [1] : vector<256x64xf32> to vector<256xf32>
    %11 = vector.shape_cast %10 : vector<256xf32> to vector<256x1xf32>
    %cst_7 = arith.constant 6.400000e+01 : f32
    %12 = vector.broadcast %cst_7 : f32 to vector<256x1xf32>
    %13 = arith.divf %11, %12 : vector<256x1xf32>
    %cst_8 = arith.constant 9.99999974E-6 : f32
    %14 = vector.broadcast %cst_8 : f32 to vector<256x1xf32>
    %15 = arith.addf %13, %14 : vector<256x1xf32>
    %16 = math.rsqrt %15 : vector<256x1xf32>
    %17 = vector.broadcast %16 : vector<256x1xf32> to vector<256x64xf32>
    %18 = arith.mulf %8, %17 : vector<256x64xf32>
    %19 = vector.broadcast %1 : vector<1x64xf32> to vector<256x64xf32>
    %20 = arith.mulf %18, %19 : vector<256x64xf32>
    %21 = vector.broadcast %2 : vector<1x64xf32> to vector<256x64xf32>
    %22 = arith.addf %20, %21 : vector<256x64xf32>
    %c0_9 = arith.constant 0 : index
    %c0_10 = arith.constant 0 : index
    %23 = vector.load %arg4[%c0_9, %c0_10] : memref<256x64xf32, #tpu.memory_space<vmem>>, vector<256x64xf32>
    tpu.vector_store %arg4[%c0_9, %c0_10], %22 {strides = array<i32>} : memref<256x64xf32, #tpu.memory_space<vmem>>, vector<256x64xf32>,
    return
  }
  func.func @transform_0(%arg0: i32) -> (i32, i32) {
    %c0_i32 = arith.constant 0 : i32
    %c0_i32_0 = arith.constant 0 : i32
    return %arg0, %c0_i32 : i32, i32
  }
  func.func @transform_1(%arg0: i32) -> (i32, i32) {
    %c0_i32 = arith.constant 0 : i32
    %c0_i32_0 = arith.constant 0 : i32
    %c0_i32_1 = arith.constant 0 : i32
    return %c0_i32, %c0_i32_0 : i32, i32
  }
  func.func @transform_2(%arg0: i32) -> (i32, i32) {
    %c0_i32 = arith.constant 0 : i32
    %c0_i32_0 = arith.constant 0 : i32
    %c0_i32_1 = arith.constant 0 : i32
    return %c0_i32, %c0_i32_0 : i32, i32
  }
  func.func @transform_3(%arg0: i32) -> (i32, i32) {
    %c0_i32 = arith.constant 0 : i32
    %c0_i32_0 = arith.constant 0 : i32
    return %arg0, %c0_i32 : i32, i32
  }
}

</mosaic_0001>

<llo_original>
// kernel: sa_forward.4
$region0: #{sa_forward.4}
  #allocation0 [shape = 'u32[]', space=smem, size = 0x4, offset = 0x4, fixed_abs, tag = 'smem constant byte address 0x4 - core index']
  #allocation1 [shape = 'u32[144,128]{1,0:T(1,128)}', space=vmem, size = 0x12000, scoped, tag = 'internal scratch']
  %s0 = inlined_call_operand.vmem [shape: f32[256,36], index: 0, kind: input, shape index: {}]
  %s1 = inlined_call_operand.vmem [shape: f32[36,64], index: 1, kind: input, shape index: {}]
  %s2 = inlined_call_operand.vmem [shape: f32[1,64], index: 2, kind: input, shape index: {}]
  %s3 = inlined_call_operand.vmem [shape: f32[1,64], index: 3, kind: input, shape index: {}]
  %s4 = inlined_call_operand.vmem [shape: f32[1,64], index: 4, kind: input, shape index: {}]
  %s5 = inlined_call_operand.vmem [shape: f32[256,64], index: 5, kind: output, shape index: {}]
  %s6 = sld [smem:[#allocation0]]
  $region53: #{sa_forward.4} parent=0
    _
  %s8 = ssub.s32 1, %s6
  %s9 = scalar_select 0, %s8, %s6
  loop: start=0, step=1, limit=4
  $region2: #{sa_forward.4} parent=0 // loop_pre_header
    _
  $region3: #{sa_forward.4} parent=0 // loop_header
    %s11 = sphi 0, %s15
    %p12 = scmp.ge.s32.totalorder %s11, 4
    %s21 = sphi 0, %s23
    %s24 = sphi 0, %s21
    %s25 = sphi 0, %s24
    %s41 = sphi 0, %s25
    %s45 = sphi 0, %s45
    %s47 = sphi 0, %s45
    %s48 = sphi 0, %s47
    %s62 = sphi 0, %s48
    %s66 = sphi 0, %s66
    %s68 = sphi 0, %s66
    %s69 = sphi 0, %s68
    %s83 = sphi 0, %s69
    %s87 = sphi 0, %s87
    %s89 = sphi 0, %s87
    %s90 = sphi 0, %s89
    %s104 = sphi 0, %s90
    %s108 = sphi 0, %s108
    %s110 = sphi 0, %s108
    %s111 = sphi 0, %s110
    %s125 = sphi 0, %s111
    %s131 = sphi 0, %s133
    %s134 = sphi 0, %s131
    %s135 = sphi 0, %s134
    %s151 = sphi 0, %s135
  $region4: #{sa_forward.4} parent=0 // loop_header_branch
    %14 = sbr.rel (%p12) target = $region8
  $region5: #{sa_forward.4} parent=0 // loop_body
    %s16 = ssub.s32 %s11, 1
    %s17 = ssub.s32 %s11, 2
    %s18 = sadd.s32 %s11, 1
    %s19 = ssub.s32 %s11, %s18
    %p20 = scmp.eq.s32.totalorder %s19, 0
    %s22 = sadd.s32 %s21, 1
    %s23 = scalar_select %p20, %s21, %s22
    %p26 = pneg %p20
    %p27 = scmp.eq.s32.totalorder %s11, 1
    %p28 = por %p26, %p27
    %p29 = scmp.ne.s32.totalorder %s21, %s24
    %p30 = scmp.eq.s32.totalorder %s11, 0
    %p31 = por %p29, %p30
    %p32 = scmp.ne.s32.totalorder %s21, %s24
    %p33 = scmp.eq.s32.totalorder %s16, 1
    %p34 = por %p32, %p33
    %p35 = scmp.ne.s32.totalorder %s24, %s25
    %p36 = scmp.eq.s32.totalorder %s16, 0
    %p37 = por %p35, %p36
    %p38 = scmp.ne.s32.totalorder %s24, %s25
    %p39 = scmp.eq.s32.totalorder %s17, 1
    %p40 = por %p38, %p39
    %p42 = scmp.ne.s32.totalorder %s25, %s41
    %p43 = scmp.eq.s32.totalorder %s17, 0
    %p44 = por %p42, %p43
    %s46 = sadd.s32 %s45, 1
    %p49 = scmp.eq.s32.totalorder %s11, 1
    %p50 = scmp.ne.s32.totalorder %s45, %s47
    %p51 = scmp.eq.s32.totalorder %s11, 0
    %p52 = por %p50, %p51
    %p53 = scmp.ne.s32.totalorder %s45, %s47
    %p54 = scmp.eq.s32.totalorder %s16, 1
    %p55 = por %p53, %p54
    %p56 = scmp.ne.s32.totalorder %s47, %s48
    %p57 = scmp.eq.s32.totalorder %s16, 0
    %p58 = por %p56, %p57
    %p59 = scmp.ne.s32.totalorder %s47, %s48
    %p60 = scmp.eq.s32.totalorder %s17, 1
    %p61 = por %p59, %p60
    %p63 = scmp.ne.s32.totalorder %s48, %s62
    %p64 = scmp.eq.s32.totalorder %s17, 0
    %p65 = por %p63, %p64
    %s67 = sadd.s32 %s66, 1
    %p70 = scmp.eq.s32.totalorder %s11, 1
    %p71 = scmp.ne.s32.totalorder %s66, %s68
    %p72 = scmp.eq.s32.totalorder %s11, 0
    %p73 = por %p71, %p72
    %p74 = scmp.ne.s32.totalorder %s66, %s68
    %p75 = scmp.eq.s32.totalorder %s16, 1
    %p76 = por %p74, %p75
    %p77 = scmp.ne.s32.totalorder %s68, %s69
    %p78 = scmp.eq.s32.totalorder %s16, 0
    %p79 = por %p77, %p78
    %p80 = scmp.ne.s32.totalorder %s68, %s69
    %p81 = scmp.eq.s32.totalorder %s17, 1
    %p82 = por %p80, %p81
    %p84 = scmp.ne.s32.totalorder %s69, %s83
    %p85 = scmp.eq.s32.totalorder %s17, 0
    %p86 = por %p84, %p85
    %s88 = sadd.s32 %s87, 1
    %p91 = scmp.eq.s32.totalorder %s11, 1
    %p92 = scmp.ne.s32.totalorder %s87, %s89
    %p93 = scmp.eq.s32.totalorder %s11, 0
    %p94 = por %p92, %p93
    %p95 = scmp.ne.s32.totalorder %s87, %s89
    %p96 = scmp.eq.s32.totalorder %s16, 1
    %p97 = por %p95, %p96
    %p98 = scmp.ne.s32.totalorder %s89, %s90
    %p99 = scmp.eq.s32.totalorder %s16, 0
    %p100 = por %p98, %p99
    %p101 = scmp.ne.s32.totalorder %s89, %s90
    %p102 = scmp.eq.s32.totalorder %s17, 1
    %p103 = por %p101, %p102
    %p105 = scmp.ne.s32.totalorder %s90, %s104
    %p106 = scmp.eq.s32.totalorder %s17, 0
    %p107 = por %p105, %p106
    %s109 = sadd.s32 %s108, 1
    %p112 = scmp.eq.s32.totalorder %s11, 1
    %p113 = scmp.ne.s32.totalorder %s108, %s110
    %p114 = scmp.eq.s32.totalorder %s11, 0
    %p115 = por %p113, %p114
    %p116 = scmp.ne.s32.totalorder %s108, %s110
    %p117 = scmp.eq.s32.totalorder %s16, 1
    %p118 = por %p116, %p117
    %p119 = scmp.ne.s32.totalorder %s110, %s111
    %p120 = scmp.eq.s32.totalorder %s16, 0
    %p121 = por %p119, %p120
    %p122 = scmp.ne.s32.totalorder %s110, %s111
    %p123 = scmp.eq.s32.totalorder %s17, 1
    %p124 = por %p122, %p123
    %p126 = scmp.ne.s32.totalorder %s111, %s125
    %p127 = scmp.eq.s32.totalorder %s17, 0
    %p128 = por %p126, %p127
    %s129 = ssub.s32 %s11, %s18
    %p130 = scmp.eq.s32.totalorder %s129, 0
    %s132 = sadd.s32 %s131, 1
    %s133 = scalar_select %p130, %s131, %s132
    %p136 = pneg %p130
    %p137 = scmp.eq.s32.totalorder %s11, 1
    %p138 = por %p136, %p137
    %p139 = scmp.ne.s32.totalorder %s131, %s134
    %p140 = scmp.eq.s32.totalorder %s11, 0
    %p141 = por %p139, %p140
    %p142 = scmp.ne.s32.totalorder %s131, %s134
    %p143 = scmp.eq.s32.totalorder %s16, 1
    %p144 = por %p142, %p143
    %p145 = scmp.ne.s32.totalorder %s134, %s135
    %p146 = scmp.eq.s32.totalorder %s16, 0
    %p147 = por %p145, %p146
    %p148 = scmp.ne.s32.totalorder %s134, %s135
    %p149 = scmp.eq.s32.totalorder %s17, 1
    %p150 = por %p148, %p149
    %p152 = scmp.ne.s32.totalorder %s135, %s151
    %p153 = scmp.eq.s32.totalorder %s17, 0
    %p154 = por %p152, %p153
    %p155 = scmp.le.s32.totalorder 1, %s11
    %p156 = scmp.lt.s32.totalorder %s11, 3
    %p157 = pnand %p155, %p156
    %p158 = pneg %p157
    // Predicated region
    $region9: #{sa_forward.4} parent=5 // pred_check
      _
    $region10: #{sa_forward.4} parent=5 // pred_check_branch
      %160 = sbr.rel (%p157) target = $region12
    $region11: #{sa_forward.4} parent=5 // pred_region
      %s161 = ssub.s32 %s11, 1
      // Predicated region
      $region13: #{sa_forward.4} parent=11 // pred_check
        %p162 = pneg %p58
      $region14: #{sa_forward.4} parent=11 // pred_check_branch
        %164 = sbr.rel (%p162) target = $region16
      $region15: #{sa_forward.4} parent=11 // pred_region
        _
      $region16: #{sa_forward.4} parent=11 // pred_fallthru
        _
      // Predicated region
      $region17: #{sa_forward.4} parent=11 // pred_check
        %p165 = pneg %p79
      $region18: #{sa_forward.4} parent=11 // pred_check_branch
        %167 = sbr.rel (%p165) target = $region20
      $region19: #{sa_forward.4} parent=11 // pred_region
        _
      $region20: #{sa_forward.4} parent=11 // pred_fallthru
        _
      // Predicated region
      $region21: #{sa_forward.4} parent=11 // pred_check
        %p168 = pneg %p100
      $region22: #{sa_forward.4} parent=11 // pred_check_branch
        %170 = sbr.rel (%p168) target = $region24
      $region23: #{sa_forward.4} parent=11 // pred_region
        _
      $region24: #{sa_forward.4} parent=11 // pred_fallthru
        _
      // Predicated region
      $region25: #{sa_forward.4} parent=11 // pred_check
        %p171 = pneg %p121
      $region26: #{sa_forward.4} parent=11 // pred_check_branch
        %173 = sbr.rel (%p171) target = $region28
      $region27: #{sa_forward.4} parent=11 // pred_region
        _
      $region28: #{sa_forward.4} parent=11 // pred_fallthru
        _
    $region12: #{sa_forward.4} parent=5 // pred_fallthru
      _
    %p174 = scmp.lt.s32.totalorder %s11, 2
    // Predicated region
    $region29: #{sa_forward.4} parent=5 // pred_check
      %p175 = pneg %p174
    $region30: #{sa_forward.4} parent=5 // pred_check_branch
      %177 = sbr.rel (%p175) target = $region32
    $region31: #{sa_forward.4} parent=5 // pred_region
      // Predicated region
      $region33: #{sa_forward.4} parent=31 // pred_check
        %p178 = pneg %p31
      $region34: #{sa_forward.4} parent=31 // pred_check_branch
        %180 = sbr.rel (%p178) target = $region36
      $region35: #{sa_forward.4} parent=31 // pred_region
        %s181 = smul.u32 16, %s11
        %p182 = scmp.lt.s32.totalorder %s181, 31
        %s183 = scalar_select %p182, %s181, 31
        %s184 = smul.addr %s183, 8
        %s185 = scalar_lea.vmem %s0, %s184
        %s186 = smul.u32 16, %s11
      $region36: #{sa_forward.4} parent=31 // pred_fallthru
        _
    $region32: #{sa_forward.4} parent=5 // pred_fallthru
      _
    %p187 = scmp.le.s32.totalorder 1, %s11
    %p188 = scmp.lt.s32.totalorder %s11, 3
    %p189 = pnand %p187, %p188
    %p190 = pneg %p189
    // Predicated region
    $region37: #{sa_forward.4} parent=5 // pred_check
      _
    $region38: #{sa_forward.4} parent=5 // pred_check_branch
      %192 = sbr.rel (%p189) target = $region40
    $region39: #{sa_forward.4} parent=5 // pred_region
      %s193 = ssub.s32 %s11, 1
      %s194 = smul.u32 16, %s16
      %p195 = scmp.lt.s32.totalorder %s194, 31
      %s196 = scalar_select %p195, %s194, 31
      %s197 = smul.addr %s196, 8
      %s198 = scalar_lea.vmem %s0, %s197
      %p199 = pneg %p37
      %p200 = pneg %p34
      %p201 = pneg %p58
      %p202 = pneg %p55
      %p203 = pneg %p79
      %p204 = pneg %p76
      %p205 = pneg %p100
      %p206 = pneg %p97
      %p207 = pneg %p121
      %p208 = pneg %p118
      %p209 = pneg %p147
      %p210 = pneg %p144
      %s211 = smul.u32 16, %s16
      %p212 = scmp.lt.s32.totalorder %s211, 31
      %s213 = scalar_select %p212, %s211, 31
      %s214 = smul.addr %s213, 8
      %s215 = scalar_lea.vmem %s5, %s214
      %s216 = smul.u32 16, %s16
      %p217 = scmp.lt.s32.totalorder %s216, 31
      %s218 = scalar_select %p217, %s216, 31
      %s219 = smul.addr %s218, 8
      %s220 = scalar_lea.vmem %s0, %s219
      %s221 = smul.u32 16, %s16
      %s222 = smul.u32 16, %s16
      %p223 = scmp.lt.s32.totalorder %s222, 31
      %s224 = scalar_select %p223, %s222, 31
      %s225 = smul.addr %s224, 8
      %s226 = scalar_lea.vmem %s5, %s225
      %s227 = smul.u32 16, %s16
      %v229 = vld [vmem:[%s220] sm:$0xff]
      %v230 = vld [vmem:[%s220 + $0x8] sm:$0xff]
      %v231 = vld [vmem:[%s220 + $0x10] sm:$0xff]
      %v232 = vld [vmem:[%s220 + $0x18] sm:$0xff]
      %v233 = vld [vmem:[%s220 + $0x20] sm:$0xff]
      %v234 = vld [vmem:[%s220 + $0x28] sm:$0xff]
      %v235 = vld [vmem:[%s220 + $0x30] sm:$0xff]
      %v236 = vld [vmem:[%s220 + $0x38] sm:$0xff]
      %v237 = vld [vmem:[%s220 + $0x40] sm:$0xff]
      %v238 = vld [vmem:[%s220 + $0x48] sm:$0xff]
      %v239 = vld [vmem:[%s220 + $0x50] sm:$0xff]
      %v240 = vld [vmem:[%s220 + $0x58] sm:$0xff]
      %v241 = vld [vmem:[%s220 + $0x60] sm:$0xff]
      %v242 = vld [vmem:[%s220 + $0x68] sm:$0xff]
      %v243 = vld [vmem:[%s220 + $0x70] sm:$0xff]
      %v244 = vld [vmem:[%s220 + $0x78] sm:$0xff]
      %v245 = vld [vmem:[%s1] sm:$0xff]
      %v246 = vld [vmem:[%s1 + $0x8] sm:$0xff]
      %v247 = vld [vmem:[%s1 + $0x10] sm:$0xff]
      %v248 = vld [vmem:[%s1 + $0x18] sm:$0xff]
      %v249 = vld [vmem:[%s1 + $0x20] sm:$0xf]
      %v250 = vpack.c.bf16 %v230, %v229
      %v251 = vpack.c.bf16 %v232, %v231
      %v252 = vpack.c.bf16 %v234, %v233
      %v253 = vpack.c.bf16 %v236, %v235
      %v254 = vpack.c.bf16 %v238, %v237
      %v255 = vpack.c.bf16 %v240, %v239
      %v256 = vpack.c.bf16 %v242, %v241
      %v257 = vpack.c.bf16 %v244, %v243
      %v258 = vpack.c.bf16 %v246, %v245
      %v259 = vpack.c.bf16 %v248, %v247
      %v260 = vpack.c.bf16 %v249, %v249
      %v261 = vld [vmem:[%s2] sm:$0x1]
      %v263 = vlaneseq
      %v264 = vshrl.u32 %v263, 7
      %v265 = vsub.s32 0, %v264
      %v266 = vrot.slane %v261, %v265
      %vm268 = vcmask 293888
      %v270 = vsel %vm268, %v250, 0
      %v273 = vsel %vm268, %v251, 0
      %v276 = vsel %vm268, %v252, 0
      %v279 = vsel %vm268, %v253, 0
      %v282 = vsel %vm268, %v254, 0
      %v285 = vsel %vm268, %v255, 0
      %v288 = vsel %vm268, %v256, 0
      %v291 = vsel %vm268, %v257, 0
      %vm293 = vcmask 1041408
      %v295 = vsel %vm293, %v260, 0
      %297 = vmatprep.subr.bf16.mxu0 0
      %298 = vmatpush1.bf16.msra.mxu0 %v258
      %299 = vmatprep.subr.bf16.mxu0 0
      %300 = vmatpush1.bf16.msra.mxu0 %v259
      %301 = vmatprep.subr.bf16.mxu0 0
      %302 = vmatpush1.bf16.msra.mxu0 %v295
      %303 = vmatprep.subr.bf16.mxu0 0
      %304 = vmatpush1.bf16.msra.mxu0 0
      %305 = vmatprep.subr.bf16.mxu0 0
      %306 = vmatpush1.bf16.msra.mxu0 0
      %307 = vmatprep.subr.bf16.mxu0 0
      %308 = vmatpush1.bf16.msra.mxu0 0
      %309 = vmatprep.subr.bf16.mxu0 0
      %310 = vmatpush1.bf16.msra.mxu0 0
      %311 = vmatprep.subr.bf16.mxu0 0
      %312 = vmatpush1.bf16.msra.mxu0 0
      %313 = vmatprep.subr.bf16.mxu0 0
      %314 = vmatpush1.bf16.msra.mxu0 0
      %315 = vmatprep.subr.bf16.mxu0 0
      %316 = vmatpush1.bf16.msra.mxu0 0
      %317 = vmatprep.subr.bf16.mxu0 0
      %318 = vmatpush1.bf16.msra.mxu0 0
      %319 = vmatprep.subr.bf16.mxu0 0
      %320 = vmatpush1.bf16.msra.mxu0 0
      %321 = vmatprep.subr.bf16.mxu0 0
      %322 = vmatpush1.bf16.msra.mxu0 0
      %323 = vmatprep.subr.bf16.mxu0 0
      %324 = vmatpush1.bf16.msra.mxu0 0
      %325 = vmatprep.subr.bf16.mxu0 0
      %326 = vmatpush1.bf16.msra.mxu0 0
      %327 = vmatprep.subr.bf16.mxu0 0
      %328 = vmatpush1.bf16.msra.mxu0 0
      %329 = vmatprep.mubr.bf16.mxu0 0
      %330 = vmatmul.mubr.bf16.gmra.mrb[0].mxu0 %v270
      %v331 = vpop.f32.mrb[0].mxu0
      %v332 = vadd.f32 %v266, %v331
      %v333 = vpop.f32.mrb[0].mxu0
      %v334 = vpop.f32.mrb[0].mxu0
      %v335 = vadd.f32 %v266, %v334
      %v336 = vpop.f32.mrb[0].mxu0
      %337 = vmatprep.mubr.bf16.mxu0 0
      %338 = vmatmul.mubr.bf16.gmra.mrb[0].mxu0 %v273
      %v339 = vpop.f32.mrb[0].mxu0
      %v340 = vadd.f32 %v266, %v339
      %v341 = vpop.f32.mrb[0].mxu0
      %v342 = vpop.f32.mrb[0].mxu0
      %v343 = vadd.f32 %v266, %v342
      %v344 = vpop.f32.mrb[0].mxu0
      %345 = vmatprep.mubr.bf16.mxu0 0
      %346 = vmatmul.mubr.bf16.gmra.mrb[0].mxu0 %v276
      %v347 = vpop.f32.mrb[0].mxu0
      %v348 = vadd.f32 %v266, %v347
      %v349 = vpop.f32.mrb[0].mxu0
      %v350 = vpop.f32.mrb[0].mxu0
      %v351 = vadd.f32 %v266, %v350
      %v352 = vpop.f32.mrb[0].mxu0
      %353 = vmatprep.mubr.bf16.mxu0 0
      %354 = vmatmul.mubr.bf16.gmra.mrb[0].mxu0 %v279
      %v355 = vpop.f32.mrb[0].mxu0
      %v356 = vadd.f32 %v266, %v355
      %v357 = vpop.f32.mrb[0].mxu0
      %v358 = vpop.f32.mrb[0].mxu0
      %v359 = vadd.f32 %v266, %v358
      %v360 = vpop.f32.mrb[0].mxu0
      %361 = vmatprep.mubr.bf16.mxu0 0
      %362 = vmatmul.mubr.bf16.gmra.mrb[0].mxu0 %v282
      %v363 = vpop.f32.mrb[0].mxu0
      %v364 = vadd.f32 %v266, %v363
      %v365 = vpop.f32.mrb[0].mxu0
      %v366 = vpop.f32.mrb[0].mxu0
      %v367 = vadd.f32 %v266, %v366
      %v368 = vpop.f32.mrb[0].mxu0
      %369 = vmatprep.mubr.bf16.mxu0 0
      %370 = vmatmul.mubr.bf16.gmra.mrb[0].mxu0 %v285
      %v371 = vpop.f32.mrb[0].mxu0
      %v372 = vadd.f32 %v266, %v371
      %v373 = vpop.f32.mrb[0].mxu0
      %v374 = vpop.f32.mrb[0].mxu0
      %v375 = vadd.f32 %v266, %v374
      %v376 = vpop.f32.mrb[0].mxu0
      %377 = vmatprep.mubr.bf16.mxu0 0
      %378 = vmatmul.mubr.bf16.gmra.mrb[0].mxu0 %v288
      %v379 = vpop.f32.mrb[0].mxu0
      %v380 = vadd.f32 %v266, %v379
      %v381 = vpop.f32.mrb[0].mxu0
      %v382 = vpop.f32.mrb[0].mxu0
      %v383 = vadd.f32 %v266, %v382
      %v384 = vpop.f32.mrb[0].mxu0
      %385 = vmatprep.mubr.bf16.mxu0 0
      %386 = vmatmul.mubr.bf16.gmra.mrb[0].mxu0 %v291
      %v387 = vpop.f32.mrb[0].mxu0
      %v388 = vadd.f32 %v266, %v387
      %v389 = vpop.f32.mrb[0].mxu0
      %v390 = vpop.f32.mrb[0].mxu0
      %v391 = vadd.f32 %v266, %v390
      %v392 = vpop.f32.mrb[0].mxu0
      %393 = vdwg.mxu0
      %v394 = vld [vmem:[%s3] sm:$0x1]
      %v395 = vld [vmem:[%s4] sm:$0x1]
      %vm396 = vcmask 523264
      %v397 = vsel %vm396, %v332, 0.0
      %398 = vadd.xlane.f32.xlu0 %v397
      %v399 = vpop.xlane.xlu0 %398
      %v400 = vsel %vm396, %v335, 0.0
      %401 = vadd.xlane.f32.xlu0 %v400
      %v402 = vpop.xlane.xlu0 %401
      %v403 = vsel %vm396, %v340, 0.0
      %404 = vadd.xlane.f32.xlu0 %v403
      %v405 = vpop.xlane.xlu0 %404
      %v406 = vsel %vm396, %v343, 0.0
      %407 = vadd.xlane.f32.xlu0 %v406
      %v408 = vpop.xlane.xlu0 %407
      %v409 = vsel %vm396, %v348, 0.0
      %410 = vadd.xlane.f32.xlu0 %v409
      %v411 = vpop.xlane.xlu0 %410
      %v412 = vsel %vm396, %v351, 0.0
      %413 = vadd.xlane.f32.xlu0 %v412
      %v414 = vpop.xlane.xlu0 %413
      %v415 = vsel %vm396, %v356, 0.0
      %416 = vadd.xlane.f32.xlu0 %v415
      %v417 = vpop.xlane.xlu0 %416
      %v418 = vsel %vm396, %v359, 0.0
      %419 = vadd.xlane.f32.xlu0 %v418
      %v420 = vpop.xlane.xlu0 %419
      %v421 = vsel %vm396, %v364, 0.0
      %422 = vadd.xlane.f32.xlu0 %v421
      %v423 = vpop.xlane.xlu0 %422
      %v424 = vsel %vm396, %v367, 0.0
      %425 = vadd.xlane.f32.xlu0 %v424
      %v426 = vpop.xlane.xlu0 %425
      %v427 = vsel %vm396, %v372, 0.0
      %428 = vadd.xlane.f32.xlu0 %v427
      %v429 = vpop.xlane.xlu0 %428
      %v430 = vsel %vm396, %v375, 0.0
      %431 = vadd.xlane.f32.xlu0 %v430
      %v432 = vpop.xlane.xlu0 %431
      %v433 = vsel %vm396, %v380, 0.0
      %434 = vadd.xlane.f32.xlu0 %v433
      %v435 = vpop.xlane.xlu0 %434
      %v436 = vsel %vm396, %v383, 0.0
      %437 = vadd.xlane.f32.xlu0 %v436
      %v438 = vpop.xlane.xlu0 %437
      %v439 = vsel %vm396, %v388, 0.0
      %440 = vadd.xlane.f32.xlu0 %v439
      %v441 = vpop.xlane.xlu0 %440
      %v442 = vsel %vm396, %v391, 0.0
      %443 = vadd.xlane.f32.xlu0 %v442
      %v444 = vpop.xlane.xlu0 %443
      %v445 = vrcp.pop 64.0
      %v446 = vmul.f32 %v399, %v445
      %v447 = vmul.f32 %v402, %v445
      %v448 = vmul.f32 %v405, %v445
      %v449 = vmul.f32 %v408, %v445
      %v450 = vmul.f32 %v411, %v445
      %v451 = vmul.f32 %v414, %v445
      %v452 = vmul.f32 %v417, %v445
      %v453 = vmul.f32 %v420, %v445
      %v454 = vmul.f32 %v423, %v445
      %v455 = vmul.f32 %v426, %v445
      %v456 = vmul.f32 %v429, %v445
      %v457 = vmul.f32 %v432, %v445
      %v458 = vmul.f32 %v435, %v445
      %v459 = vmul.f32 %v438, %v445
      %v460 = vmul.f32 %v441, %v445
      %v461 = vmul.f32 %v444, %v445
      %v462 = vsub.f32 %v332, %v446
      %v463 = vsub.f32 %v335, %v447
      %v464 = vsub.f32 %v340, %v448
      %v465 = vsub.f32 %v343, %v449
      %v466 = vsub.f32 %v348, %v450
      %v467 = vsub.f32 %v351, %v451
      %v468 = vsub.f32 %v356, %v452
      %v469 = vsub.f32 %v359, %v453
      %v470 = vsub.f32 %v364, %v454
      %v471 = vsub.f32 %v367, %v455
      %v472 = vsub.f32 %v372, %v456
      %v473 = vsub.f32 %v375, %v457
      %v474 = vsub.f32 %v380, %v458
      %v475 = vsub.f32 %v383, %v459
      %v476 = vsub.f32 %v388, %v460
      %v477 = vsub.f32 %v391, %v461
      %v478 = vmul.f32 %v462, %v462
      %v479 = vmul.f32 %v463, %v463
      %v480 = vmul.f32 %v464, %v464
      %v481 = vmul.f32 %v465, %v465
      %v482 = vmul.f32 %v466, %v466
      %v483 = vmul.f32 %v467, %v467
      %v484 = vmul.f32 %v468, %v468
      %v485 = vmul.f32 %v469, %v469
      %v486 = vmul.f32 %v470, %v470
      %v487 = vmul.f32 %v471, %v471
      %v488 = vmul.f32 %v472, %v472
      %v489 = vmul.f32 %v473, %v473
      %v490 = vmul.f32 %v474, %v474
      %v491 = vmul.f32 %v475, %v475
      %v492 = vmul.f32 %v476, %v476
      %v493 = vmul.f32 %v477, %v477
      %v494 = vsel %vm396, %v478, 0.0
      %495 = vadd.xlane.f32.xlu0 %v494
      %v496 = vpop.xlane.xlu0 %495
      %v497 = vsel %vm396, %v479, 0.0
      %498 = vadd.xlane.f32.xlu0 %v497
      %v499 = vpop.xlane.xlu0 %498
      %v500 = vsel %vm396, %v480, 0.0
      %501 = vadd.xlane.f32.xlu0 %v500
      %v502 = vpop.xlane.xlu0 %501
      %v503 = vsel %vm396, %v481, 0.0
      %504 = vadd.xlane.f32.xlu0 %v503
      %v505 = vpop.xlane.xlu0 %504
      %v506 = vsel %vm396, %v482, 0.0
      %507 = vadd.xlane.f32.xlu0 %v506
      %v508 = vpop.xlane.xlu0 %507
      %v509 = vsel %vm396, %v483, 0.0
      %510 = vadd.xlane.f32.xlu0 %v509
      %v511 = vpop.xlane.xlu0 %510
      %v512 = vsel %vm396, %v484, 0.0
      %513 = vadd.xlane.f32.xlu0 %v512
      %v514 = vpop.xlane.xlu0 %513
      %v515 = vsel %vm396, %v485, 0.0
      %516 = vadd.xlane.f32.xlu0 %v515
      %v517 = vpop.xlane.xlu0 %516
      %v518 = vsel %vm396, %v486, 0.0
      %519 = vadd.xlane.f32.xlu0 %v518
      %v520 = vpop.xlane.xlu0 %519
      %v521 = vsel %vm396, %v487, 0.0
      %522 = vadd.xlane.f32.xlu0 %v521
      %v523 = vpop.xlane.xlu0 %522
      %v524 = vsel %vm396, %v488, 0.0
      %525 = vadd.xlane.f32.xlu0 %v524
      %v526 = vpop.xlane.xlu0 %525
      %v527 = vsel %vm396, %v489, 0.0
      %528 = vadd.xlane.f32.xlu0 %v527
      %v529 = vpop.xlane.xlu0 %528
      %v530 = vsel %vm396, %v490, 0.0
      %531 = vadd.xlane.f32.xlu0 %v530
      %v532 = vpop.xlane.xlu0 %531
      %v533 = vsel %vm396, %v491, 0.0
      %534 = vadd.xlane.f32.xlu0 %v533
      %v535 = vpop.xlane.xlu0 %534
      %v536 = vsel %vm396, %v492, 0.0
      %537 = vadd.xlane.f32.xlu0 %v536
      %v538 = vpop.xlane.xlu0 %537
      %v539 = vsel %vm396, %v493, 0.0
      %540 = vadd.xlane.f32.xlu0 %v539
      %v541 = vpop.xlane.xlu0 %540
      %v542 = vmul.f32 %v496, %v445
      %v543 = vmul.f32 %v499, %v445
      %v544 = vmul.f32 %v502, %v445
      %v545 = vmul.f32 %v505, %v445
      %v546 = vmul.f32 %v508, %v445
      %v547 = vmul.f32 %v511, %v445
      %v548 = vmul.f32 %v514, %v445
      %v549 = vmul.f32 %v517, %v445
      %v550 = vmul.f32 %v520, %v445
      %v551 = vmul.f32 %v523, %v445
      %v552 = vmul.f32 %v526, %v445
      %v553 = vmul.f32 %v529, %v445
      %v554 = vmul.f32 %v532, %v445
      %v555 = vmul.f32 %v535, %v445
      %v556 = vmul.f32 %v538, %v445
      %v557 = vmul.f32 %v541, %v445
      %v558 = vadd.f32 %v542, 1e-05
      %v559 = vadd.f32 %v543, 1e-05
      %v560 = vadd.f32 %v544, 1e-05
      %v561 = vadd.f32 %v545, 1e-05
      %v562 = vadd.f32 %v546, 1e-05
      %v563 = vadd.f32 %v547, 1e-05
      %v564 = vadd.f32 %v548, 1e-05
      %v565 = vadd.f32 %v549, 1e-05
      %v566 = vadd.f32 %v550, 1e-05
      %v567 = vadd.f32 %v551, 1e-05
      %v568 = vadd.f32 %v552, 1e-05
      %v569 = vadd.f32 %v553, 1e-05
      %v570 = vadd.f32 %v554, 1e-05
      %v571 = vadd.f32 %v555, 1e-05
      %v572 = vadd.f32 %v556, 1e-05
      %v573 = vadd.f32 %v557, 1e-05
      %v574 = vrsqrt.pop %v558
      %v575 = vrsqrt.pop %v559
      %v576 = vrsqrt.pop %v560
      %v577 = vrsqrt.pop %v561
      %v578 = vrsqrt.pop %v562
      %v579 = vrsqrt.pop %v563
      %v580 = vrsqrt.pop %v564
      %v581 = vrsqrt.pop %v565
      %v582 = vrsqrt.pop %v566
      %v583 = vrsqrt.pop %v567
      %v584 = vrsqrt.pop %v568
      %v585 = vrsqrt.pop %v569
      %v586 = vrsqrt.pop %v570
      %v587 = vrsqrt.pop %v571
      %v588 = vrsqrt.pop %v572
      %v589 = vrsqrt.pop %v573
      %v590 = vmul.f32 %v462, %v574
      %v591 = vmul.f32 %v463, %v575
      %v592 = vmul.f32 %v464, %v576
      %v593 = vmul.f32 %v465, %v577
      %v594 = vmul.f32 %v466, %v578
      %v595 = vmul.f32 %v467, %v579
      %v596 = vmul.f32 %v468, %v580
      %v597 = vmul.f32 %v469, %v581
      %v598 = vmul.f32 %v470, %v582
      %v599 = vmul.f32 %v471, %v583
      %v600 = vmul.f32 %v472, %v584
      %v601 = vmul.f32 %v473, %v585
      %v602 = vmul.f32 %v474, %v586
      %v603 = vmul.f32 %v475, %v587
      %v604 = vmul.f32 %v476, %v588
      %v605 = vmul.f32 %v477, %v589
      %v607 = vlaneseq
      %v608 = vshrl.u32 %v607, 7
      %v609 = vsub.s32 0, %v608
      %v610 = vrot.slane %v394, %v609
      %v612 = vmul.f32 %v590, %v610
      %v613 = vmul.f32 %v591, %v610
      %v614 = vmul.f32 %v592, %v610
      %v615 = vmul.f32 %v593, %v610
      %v616 = vmul.f32 %v594, %v610
      %v617 = vmul.f32 %v595, %v610
      %v618 = vmul.f32 %v596, %v610
      %v619 = vmul.f32 %v597, %v610
      %v620 = vmul.f32 %v598, %v610
      %v621 = vmul.f32 %v599, %v610
      %v622 = vmul.f32 %v600, %v610
      %v623 = vmul.f32 %v601, %v610
      %v624 = vmul.f32 %v602, %v610
      %v625 = vmul.f32 %v603, %v610
      %v626 = vmul.f32 %v604, %v610
      %v627 = vmul.f32 %v605, %v610
      %v629 = vlaneseq
      %v630 = vshrl.u32 %v629, 7
      %v631 = vsub.s32 0, %v630
      %v632 = vrot.slane %v395, %v631
      %v634 = vadd.f32 %v612, %v632
      %v635 = vadd.f32 %v613, %v632
      %v636 = vadd.f32 %v614, %v632
      %v637 = vadd.f32 %v615, %v632
      %v638 = vadd.f32 %v616, %v632
      %v639 = vadd.f32 %v617, %v632
      %v640 = vadd.f32 %v618, %v632
      %v641 = vadd.f32 %v619, %v632
      %v642 = vadd.f32 %v620, %v632
      %v643 = vadd.f32 %v621, %v632
      %v644 = vadd.f32 %v622, %v632
      %v645 = vadd.f32 %v623, %v632
      %v646 = vadd.f32 %v624, %v632
      %v647 = vadd.f32 %v625, %v632
      %v648 = vadd.f32 %v626, %v632
      %v649 = vadd.f32 %v627, %v632
      %650 = vst.msk [vmem:[%s226] sm:$0xff] %vm396, %v634
      %651 = vst.msk [vmem:[%s226 + $0x8] sm:$0xff] %vm396, %v635
      %652 = vst.msk [vmem:[%s226 + $0x10] sm:$0xff] %vm396, %v636
      %653 = vst.msk [vmem:[%s226 + $0x18] sm:$0xff] %vm396, %v637
      %654 = vst.msk [vmem:[%s226 + $0x20] sm:$0xff] %vm396, %v638
      %655 = vst.msk [vmem:[%s226 + $0x28] sm:$0xff] %vm396, %v639
      %656 = vst.msk [vmem:[%s226 + $0x30] sm:$0xff] %vm396, %v640
      %657 = vst.msk [vmem:[%s226 + $0x38] sm:$0xff] %vm396, %v641
      %658 = vst.msk [vmem:[%s226 + $0x40] sm:$0xff] %vm396, %v642
      %659 = vst.msk [vmem:[%s226 + $0x48] sm:$0xff] %vm396, %v643
      %660 = vst.msk [vmem:[%s226 + $0x50] sm:$0xff] %vm396, %v644
      %661 = vst.msk [vmem:[%s226 + $0x58] sm:$0xff] %vm396, %v645
      %662 = vst.msk [vmem:[%s226 + $0x60] sm:$0xff] %vm396, %v646
      %663 = vst.msk [vmem:[%s226 + $0x68] sm:$0xff] %vm396, %v647
      %664 = vst.msk [vmem:[%s226 + $0x70] sm:$0xff] %vm396, %v648
      %665 = vst.msk [vmem:[%s226 + $0x78] sm:$0xff] %vm396, %v649
      %s666 = smul.u32 16, %s16
      %p667 = scmp.lt.s32.totalorder %s666, 31
      %s668 = scalar_select %p667, %s666, 31
      %s669 = smul.addr %s668, 8
      %s670 = scalar_lea.vmem %s5, %s669
      // Predicated region
      $region41: #{sa_forward.4} parent=39 // pred_check
        %p671 = pneg %p144
      $region42: #{sa_forward.4} parent=39 // pred_check_branch
        %673 = sbr.rel (%p671) target = $region44
      $region43: #{sa_forward.4} parent=39 // pred_region
        %s674 = smul.u32 16, %s16
      $region44: #{sa_forward.4} parent=39 // pred_fallthru
        _
    $region40: #{sa_forward.4} parent=5 // pred_fallthru
      _
    %p675 = scmp.le.s32.totalorder 2, %s11
    // Predicated region
    $region45: #{sa_forward.4} parent=5 // pred_check
      %p676 = pneg %p675
    $region46: #{sa_forward.4} parent=5 // pred_check_branch
      %678 = sbr.rel (%p676) target = $region48
    $region47: #{sa_forward.4} parent=5 // pred_region
      %s679 = ssub.s32 %s11, 2
      // Predicated region
      $region49: #{sa_forward.4} parent=47 // pred_check
        %p680 = pneg %p150
      $region50: #{sa_forward.4} parent=47 // pred_check_branch
        %682 = sbr.rel (%p680) target = $region52
      $region51: #{sa_forward.4} parent=47 // pred_region
        %s683 = smul.u32 16, %s17
        %p684 = scmp.lt.s32.totalorder %s683, 31
        %s685 = scalar_select %p684, %s683, 31
        %s686 = smul.addr %s685, 8
        %s687 = scalar_lea.vmem %s5, %s686
      $region52: #{sa_forward.4} parent=47 // pred_fallthru
        _
    $region48: #{sa_forward.4} parent=5 // pred_fallthru
      _
  $region6: #{sa_forward.4} parent=0 // loop_footer
    %s15 = sadd.s32 1, %s11
  $region7: #{sa_forward.4} parent=0 // loop_footer_branch
    %10 = sbr.rel target = $region3
  $region8: #{sa_forward.4} parent=0 // loop_exit
    _

// kernel: sa_forward.7
$region0: #{sa_forward.7}
  #allocation0 [shape = 'u32[]', space=smem, size = 0x4, offset = 0x4, fixed_abs, tag = 'smem constant byte address 0x4 - core index']
  #allocation1 [shape = 'u32[144,128]{1,0:T(1,128)}', space=vmem, size = 0x12000, scoped, tag = 'internal scratch']
  %s0 = inlined_call_operand.vmem [shape: f32[256,64], index: 0, kind: input, shape index: {}]
  %s1 = inlined_call_operand.vmem [shape: f32[1,64], index: 1, kind: input, shape index: {}]
  %s2 = inlined_call_operand.vmem [shape: f32[1,64], index: 2, kind: input, shape index: {}]
  %s3 = inlined_call_operand.hbm [shape: f32[256,64], index: 3, kind: output, shape index: {}]
  %s4 = sld [smem:[#allocation0]]
  $region22: #{sa_forward.7} parent=0
    _
  %s6 = ssub.s32 1, %s4
  %s7 = scalar_select 0, %s6, %s4
  $region1: #{sa_forward.7} parent=0
    #allocation2 [shape = 'u8[131072]{0}', space=vmem, size = 0x20000, scoped, tag = 'output window, operand 0, single buffered']
    #allocation3 [shape = 's32[1]{0}', space=sflag, size = 0x4, scoped, tag = 'scoped memory for sa_forward.7']
    %8 = vsyncpa [#allocation3], 0
    // Predicated region
    $region2: #{sa_forward.7} parent=1 // pred_check
      _
    $region3: #{sa_forward.7} parent=1 // pred_check_branch
      %10 = sbr.rel (0) target = $region5
    $region4: #{sa_forward.7} parent=1 // pred_region
      _
    $region5: #{sa_forward.7} parent=1 // pred_fallthru
      _
    // Predicated region
    $region6: #{sa_forward.7} parent=1 // pred_check
      _
    $region7: #{sa_forward.7} parent=1 // pred_check_branch
      %12 = sbr.rel (0) target = $region9
    $region8: #{sa_forward.7} parent=1 // pred_region
      _
    $region9: #{sa_forward.7} parent=1 // pred_fallthru
      _
    // Predicated region
    $region10: #{sa_forward.7} parent=1 // pred_check
      _
    $region11: #{sa_forward.7} parent=1 // pred_check_branch
      %14 = sbr.rel (0) target = $region13
    $region12: #{sa_forward.7} parent=1 // pred_region
      _
    $region13: #{sa_forward.7} parent=1 // pred_fallthru
      _
    %v15 = vld [vmem:[%s0] sm:$0xff]
    %v16 = vld [vmem:[%s0 + $0x8] sm:$0xff]
    %v17 = vld [vmem:[%s0 + $0x10] sm:$0xff]
    %v18 = vld [vmem:[%s0 + $0x18] sm:$0xff]
    %v19 = vld [vmem:[%s0 + $0x20] sm:$0xff]
    %v20 = vld [vmem:[%s0 + $0x28] sm:$0xff]
    %v21 = vld [vmem:[%s0 + $0x30] sm:$0xff]
    %v22 = vld [vmem:[%s0 + $0x38] sm:$0xff]
    %v23 = vld [vmem:[%s0 + $0x40] sm:$0xff]
    %v24 = vld [vmem:[%s0 + $0x48] sm:$0xff]
    %v25 = vld [vmem:[%s0 + $0x50] sm:$0xff]
    %v26 = vld [vmem:[%s0 + $0x58] sm:$0xff]
    %v27 = vld [vmem:[%s0 + $0x60] sm:$0xff]
    %v28 = vld [vmem:[%s0 + $0x68] sm:$0xff]
    %v29 = vld [vmem:[%s0 + $0x70] sm:$0xff]
    %v30 = vld [vmem:[%s0 + $0x78] sm:$0xff]
    %v31 = vld [vmem:[%s0 + $0x80] sm:$0xff]
    %v32 = vld [vmem:[%s0 + $0x88] sm:$0xff]
    %v33 = vld [vmem:[%s0 + $0x90] sm:$0xff]
    %v34 = vld [vmem:[%s0 + $0x98] sm:$0xff]
    %v35 = vld [vmem:[%s0 + $0xa0] sm:$0xff]
    %v36 = vld [vmem:[%s0 + $0xa8] sm:$0xff]
    %v37 = vld [vmem:[%s0 + $0xb0] sm:$0xff]
    %v38 = vld [vmem:[%s0 + $0xb8] sm:$0xff]
    %v39 = vld [vmem:[%s0 + $0xc0] sm:$0xff]
    %v40 = vld [vmem:[%s0 + $0xc8] sm:$0xff]
    %v41 = vld [vmem:[%s0 + $0xd0] sm:$0xff]
    %v42 = vld [vmem:[%s0 + $0xd8] sm:$0xff]
    %v43 = vld [vmem:[%s0 + $0xe0] sm:$0xff]
    %v44 = vld [vmem:[%s0 + $0xe8] sm:$0xff]
    %v45 = vld [vmem:[%s0 + $0xf0] sm:$0xff]
    %v46 = vld [vmem:[%s0 + $0xf8] sm:$0xff]
    %v47 = vld [vmem:[%s1] sm:$0x1]
    %v48 = vld [vmem:[%s2] sm:$0x1]
    %vm49 = vcmask 523264
    %v50 = vsel %vm49, %v15, 0.0
    %51 = vadd.xlane.f32.xlu0 %v50
    %v52 = vpop.xlane.xlu0 %51
    %v53 = vsel %vm49, %v16, 0.0
    %54 = vadd.xlane.f32.xlu0 %v53
    %v55 = vpop.xlane.xlu0 %54
    %v56 = vsel %vm49, %v17, 0.0
    %57 = vadd.xlane.f32.xlu0 %v56
    %v58 = vpop.xlane.xlu0 %57
    %v59 = vsel %vm49, %v18, 0.0
    %60 = vadd.xlane.f32.xlu0 %v59
    %v61 = vpop.xlane.xlu0 %60
    %v62 = vsel %vm49, %v19, 0.0
    %63 = vadd.xlane.f32.xlu0 %v62
    %v64 = vpop.xlane.xlu0 %63
    %v65 = vsel %vm49, %v20, 0.0
    %66 = vadd.xlane.f32.xlu0 %v65
    %v67 = vpop.xlane.xlu0 %66
    %v68 = vsel %vm49, %v21, 0.0
    %69 = vadd.xlane.f32.xlu0 %v68
    %v70 = vpop.xlane.xlu0 %69
    %v71 = vsel %vm49, %v22, 0.0
    %72 = vadd.xlane.f32.xlu0 %v71
    %v73 = vpop.xlane.xlu0 %72
    %v74 = vsel %vm49, %v23, 0.0
    %75 = vadd.xlane.f32.xlu0 %v74
    %v76 = vpop.xlane.xlu0 %75
    %v77 = vsel %vm49, %v24, 0.0
    %78 = vadd.xlane.f32.xlu0 %v77
    %v79 = vpop.xlane.xlu0 %78
    %v80 = vsel %vm49, %v25, 0.0
    %81 = vadd.xlane.f32.xlu0 %v80
    %v82 = vpop.xlane.xlu0 %81
    %v83 = vsel %vm49, %v26, 0.0
    %84 = vadd.xlane.f32.xlu0 %v83
    %v85 = vpop.xlane.xlu0 %84
    %v86 = vsel %vm49, %v27, 0.0
    %87 = vadd.xlane.f32.xlu0 %v86
    %v88 = vpop.xlane.xlu0 %87
    %v89 = vsel %vm49, %v28, 0.0
    %90 = vadd.xlane.f32.xlu0 %v89
    %v91 = vpop.xlane.xlu0 %90
    %v92 = vsel %vm49, %v29, 0.0
    %93 = vadd.xlane.f32.xlu0 %v92
    %v94 = vpop.xlane.xlu0 %93
    %v95 = vsel %vm49, %v30, 0.0
    %96 = vadd.xlane.f32.xlu0 %v95
    %v97 = vpop.xlane.xlu0 %96
    %v98 = vsel %vm49, %v31, 0.0
    %99 = vadd.xlane.f32.xlu0 %v98
    %v100 = vpop.xlane.xlu0 %99
    %v101 = vsel %vm49, %v32, 0.0
    %102 = vadd.xlane.f32.xlu0 %v101
    %v103 = vpop.xlane.xlu0 %102
    %v104 = vsel %vm49, %v33, 0.0
    %105 = vadd.xlane.f32.xlu0 %v104
    %v106 = vpop.xlane.xlu0 %105
    %v107 = vsel %vm49, %v34, 0.0
    %108 = vadd.xlane.f32.xlu0 %v107
    %v109 = vpop.xlane.xlu0 %108
    %v110 = vsel %vm49, %v35, 0.0
    %111 = vadd.xlane.f32.xlu0 %v110
    %v112 = vpop.xlane.xlu0 %111
    %v113 = vsel %vm49, %v36, 0.0
    %114 = vadd.xlane.f32.xlu0 %v113
    %v115 = vpop.xlane.xlu0 %114
    %v116 = vsel %vm49, %v37, 0.0
    %117 = vadd.xlane.f32.xlu0 %v116
    %v118 = vpop.xlane.xlu0 %117
    %v119 = vsel %vm49, %v38, 0.0
    %120 = vadd.xlane.f32.xlu0 %v119
    %v121 = vpop.xlane.xlu0 %120
    %v122 = vsel %vm49, %v39, 0.0
    %123 = vadd.xlane.f32.xlu0 %v122
    %v124 = vpop.xlane.xlu0 %123
    %v125 = vsel %vm49, %v40, 0.0
    %126 = vadd.xlane.f32.xlu0 %v125
    %v127 = vpop.xlane.xlu0 %126
    %v128 = vsel %vm49, %v41, 0.0
    %129 = vadd.xlane.f32.xlu0 %v128
    %v130 = vpop.xlane.xlu0 %129
    %v131 = vsel %vm49, %v42, 0.0
    %132 = vadd.xlane.f32.xlu0 %v131
    %v133 = vpop.xlane.xlu0 %132
    %v134 = vsel %vm49, %v43, 0.0
    %135 = vadd.xlane.f32.xlu0 %v134
    %v136 = vpop.xlane.xlu0 %135
    %v137 = vsel %vm49, %v44, 0.0
    %138 = vadd.xlane.f32.xlu0 %v137
    %v139 = vpop.xlane.xlu0 %138
    %v140 = vsel %vm49, %v45, 0.0
    %141 = vadd.xlane.f32.xlu0 %v140
    %v142 = vpop.xlane.xlu0 %141
    %v143 = vsel %vm49, %v46, 0.0
    %144 = vadd.xlane.f32.xlu0 %v143
    %v145 = vpop.xlane.xlu0 %144
    %v146 = vrcp.pop 64.0
    %v147 = vmul.f32 %v52, %v146
    %v148 = vmul.f32 %v55, %v146
    %v149 = vmul.f32 %v58, %v146
    %v150 = vmul.f32 %v61, %v146
    %v151 = vmul.f32 %v64, %v146
    %v152 = vmul.f32 %v67, %v146
    %v153 = vmul.f32 %v70, %v146
    %v154 = vmul.f32 %v73, %v146
    %v155 = vmul.f32 %v76, %v146
    %v156 = vmul.f32 %v79, %v146
    %v157 = vmul.f32 %v82, %v146
    %v158 = vmul.f32 %v85, %v146
    %v159 = vmul.f32 %v88, %v146
    %v160 = vmul.f32 %v91, %v146
    %v161 = vmul.f32 %v94, %v146
    %v162 = vmul.f32 %v97, %v146
    %v163 = vmul.f32 %v100, %v146
    %v164 = vmul.f32 %v103, %v146
    %v165 = vmul.f32 %v106, %v146
    %v166 = vmul.f32 %v109, %v146
    %v167 = vmul.f32 %v112, %v146
    %v168 = vmul.f32 %v115, %v146
    %v169 = vmul.f32 %v118, %v146
    %v170 = vmul.f32 %v121, %v146
    %v171 = vmul.f32 %v124, %v146
    %v172 = vmul.f32 %v127, %v146
    %v173 = vmul.f32 %v130, %v146
    %v174 = vmul.f32 %v133, %v146
    %v175 = vmul.f32 %v136, %v146
    %v176 = vmul.f32 %v139, %v146
    %v177 = vmul.f32 %v142, %v146
    %v178 = vmul.f32 %v145, %v146
    %v179 = vsub.f32 %v15, %v147
    %v180 = vsub.f32 %v16, %v148
    %v181 = vsub.f32 %v17, %v149
    %v182 = vsub.f32 %v18, %v150
    %v183 = vsub.f32 %v19, %v151
    %v184 = vsub.f32 %v20, %v152
    %v185 = vsub.f32 %v21, %v153
    %v186 = vsub.f32 %v22, %v154
    %v187 = vsub.f32 %v23, %v155
    %v188 = vsub.f32 %v24, %v156
    %v189 = vsub.f32 %v25, %v157
    %v190 = vsub.f32 %v26, %v158
    %v191 = vsub.f32 %v27, %v159
    %v192 = vsub.f32 %v28, %v160
    %v193 = vsub.f32 %v29, %v161
    %v194 = vsub.f32 %v30, %v162
    %v195 = vsub.f32 %v31, %v163
    %v196 = vsub.f32 %v32, %v164
    %v197 = vsub.f32 %v33, %v165
    %v198 = vsub.f32 %v34, %v166
    %v199 = vsub.f32 %v35, %v167
    %v200 = vsub.f32 %v36, %v168
    %v201 = vsub.f32 %v37, %v169
    %v202 = vsub.f32 %v38, %v170
    %v203 = vsub.f32 %v39, %v171
    %v204 = vsub.f32 %v40, %v172
    %v205 = vsub.f32 %v41, %v173
    %v206 = vsub.f32 %v42, %v174
    %v207 = vsub.f32 %v43, %v175
    %v208 = vsub.f32 %v44, %v176
    %v209 = vsub.f32 %v45, %v177
    %v210 = vsub.f32 %v46, %v178
    %v211 = vmul.f32 %v179, %v179
    %v212 = vmul.f32 %v180, %v180
    %v213 = vmul.f32 %v181, %v181
    %v214 = vmul.f32 %v182, %v182
    %v215 = vmul.f32 %v183, %v183
    %v216 = vmul.f32 %v184, %v184
    %v217 = vmul.f32 %v185, %v185
    %v218 = vmul.f32 %v186, %v186
    %v219 = vmul.f32 %v187, %v187
    %v220 = vmul.f32 %v188, %v188
    %v221 = vmul.f32 %v189, %v189
    %v222 = vmul.f32 %v190, %v190
    %v223 = vmul.f32 %v191, %v191
    %v224 = vmul.f32 %v192, %v192
    %v225 = vmul.f32 %v193, %v193
    %v226 = vmul.f32 %v194, %v194
    %v227 = vmul.f32 %v195, %v195
    %v228 = vmul.f32 %v196, %v196
    %v229 = vmul.f32 %v197, %v197
    %v230 = vmul.f32 %v198, %v198
    %v231 = vmul.f32 %v199, %v199
    %v232 = vmul.f32 %v200, %v200
    %v233 = vmul.f32 %v201, %v201
    %v234 = vmul.f32 %v202, %v202
    %v235 = vmul.f32 %v203, %v203
    %v236 = vmul.f32 %v204, %v204
    %v237 = vmul.f32 %v205, %v205
    %v238 = vmul.f32 %v206, %v206
    %v239 = vmul.f32 %v207, %v207
    %v240 = vmul.f32 %v208, %v208
    %v241 = vmul.f32 %v209, %v209
    %v242 = vmul.f32 %v210, %v210
    %v243 = vsel %vm49, %v211, 0.0
    %244 = vadd.xlane.f32.xlu0 %v243
    %v245 = vpop.xlane.xlu0 %244
    %v246 = vsel %vm49, %v212, 0.0
    %247 = vadd.xlane.f32.xlu0 %v246
    %v248 = vpop.xlane.xlu0 %247
    %v249 = vsel %vm49, %v213, 0.0
    %250 = vadd.xlane.f32.xlu0 %v249
    %v251 = vpop.xlane.xlu0 %250
    %v252 = vsel %vm49, %v214, 0.0
    %253 = vadd.xlane.f32.xlu0 %v252
    %v254 = vpop.xlane.xlu0 %253
    %v255 = vsel %vm49, %v215, 0.0
    %256 = vadd.xlane.f32.xlu0 %v255
    %v257 = vpop.xlane.xlu0 %256
    %v258 = vsel %vm49, %v216, 0.0
    %259 = vadd.xlane.f32.xlu0 %v258
    %v260 = vpop.xlane.xlu0 %259
    %v261 = vsel %vm49, %v217, 0.0
    %262 = vadd.xlane.f32.xlu0 %v261
    %v263 = vpop.xlane.xlu0 %262
    %v264 = vsel %vm49, %v218, 0.0
    %265 = vadd.xlane.f32.xlu0 %v264
    %v266 = vpop.xlane.xlu0 %265
    %v267 = vsel %vm49, %v219, 0.0
    %268 = vadd.xlane.f32.xlu0 %v267
    %v269 = vpop.xlane.xlu0 %268
    %v270 = vsel %vm49, %v220, 0.0
    %271 = vadd.xlane.f32.xlu0 %v270
    %v272 = vpop.xlane.xlu0 %271
    %v273 = vsel %vm49, %v221, 0.0
    %274 = vadd.xlane.f32.xlu0 %v273
    %v275 = vpop.xlane.xlu0 %274
    %v276 = vsel %vm49, %v222, 0.0
    %277 = vadd.xlane.f32.xlu0 %v276
    %v278 = vpop.xlane.xlu0 %277
    %v279 = vsel %vm49, %v223, 0.0
    %280 = vadd.xlane.f32.xlu0 %v279
    %v281 = vpop.xlane.xlu0 %280
    %v282 = vsel %vm49, %v224, 0.0
    %283 = vadd.xlane.f32.xlu0 %v282
    %v284 = vpop.xlane.xlu0 %283
    %v285 = vsel %vm49, %v225, 0.0
    %286 = vadd.xlane.f32.xlu0 %v285
    %v287 = vpop.xlane.xlu0 %286
    %v288 = vsel %vm49, %v226, 0.0
    %289 = vadd.xlane.f32.xlu0 %v288
    %v290 = vpop.xlane.xlu0 %289
    %v291 = vsel %vm49, %v227, 0.0
    %292 = vadd.xlane.f32.xlu0 %v291
    %v293 = vpop.xlane.xlu0 %292
    %v294 = vsel %vm49, %v228, 0.0
    %295 = vadd.xlane.f32.xlu0 %v294
    %v296 = vpop.xlane.xlu0 %295
    %v297 = vsel %vm49, %v229, 0.0
    %298 = vadd.xlane.f32.xlu0 %v297
    %v299 = vpop.xlane.xlu0 %298
    %v300 = vsel %vm49, %v230, 0.0
    %301 = vadd.xlane.f32.xlu0 %v300
    %v302 = vpop.xlane.xlu0 %301
    %v303 = vsel %vm49, %v231, 0.0
    %304 = vadd.xlane.f32.xlu0 %v303
    %v305 = vpop.xlane.xlu0 %304
    %v306 = vsel %vm49, %v232, 0.0
    %307 = vadd.xlane.f32.xlu0 %v306
    %v308 = vpop.xlane.xlu0 %307
    %v309 = vsel %vm49, %v233, 0.0
    %310 = vadd.xlane.f32.xlu0 %v309
    %v311 = vpop.xlane.xlu0 %310
    %v312 = vsel %vm49, %v234, 0.0
    %313 = vadd.xlane.f32.xlu0 %v312
    %v314 = vpop.xlane.xlu0 %313
    %v315 = vsel %vm49, %v235, 0.0
    %316 = vadd.xlane.f32.xlu0 %v315
    %v317 = vpop.xlane.xlu0 %316
    %v318 = vsel %vm49, %v236, 0.0
    %319 = vadd.xlane.f32.xlu0 %v318
    %v320 = vpop.xlane.xlu0 %319
    %v321 = vsel %vm49, %v237, 0.0
    %322 = vadd.xlane.f32.xlu0 %v321
    %v323 = vpop.xlane.xlu0 %322
    %v324 = vsel %vm49, %v238, 0.0
    %325 = vadd.xlane.f32.xlu0 %v324
    %v326 = vpop.xlane.xlu0 %325
    %v327 = vsel %vm49, %v239, 0.0
    %328 = vadd.xlane.f32.xlu0 %v327
    %v329 = vpop.xlane.xlu0 %328
    %v330 = vsel %vm49, %v240, 0.0
    %331 = vadd.xlane.f32.xlu0 %v330
    %v332 = vpop.xlane.xlu0 %331
    %v333 = vsel %vm49, %v241, 0.0
    %334 = vadd.xlane.f32.xlu0 %v333
    %v335 = vpop.xlane.xlu0 %334
    %v336 = vsel %vm49, %v242, 0.0
    %337 = vadd.xlane.f32.xlu0 %v336
    %v338 = vpop.xlane.xlu0 %337
    %v339 = vmul.f32 %v245, %v146
    %v340 = vmul.f32 %v248, %v146
    %v341 = vmul.f32 %v251, %v146
    %v342 = vmul.f32 %v254, %v146
    %v343 = vmul.f32 %v257, %v146
    %v344 = vmul.f32 %v260, %v146
    %v345 = vmul.f32 %v263, %v146
    %v346 = vmul.f32 %v266, %v146
    %v347 = vmul.f32 %v269, %v146
    %v348 = vmul.f32 %v272, %v146
    %v349 = vmul.f32 %v275, %v146
    %v350 = vmul.f32 %v278, %v146
    %v351 = vmul.f32 %v281, %v146
    %v352 = vmul.f32 %v284, %v146
    %v353 = vmul.f32 %v287, %v146
    %v354 = vmul.f32 %v290, %v146
    %v355 = vmul.f32 %v293, %v146
    %v356 = vmul.f32 %v296, %v146
    %v357 = vmul.f32 %v299, %v146
    %v358 = vmul.f32 %v302, %v146
    %v359 = vmul.f32 %v305, %v146
    %v360 = vmul.f32 %v308, %v146
    %v361 = vmul.f32 %v311, %v146
    %v362 = vmul.f32 %v314, %v146
    %v363 = vmul.f32 %v317, %v146
    %v364 = vmul.f32 %v320, %v146
    %v365 = vmul.f32 %v323, %v146
    %v366 = vmul.f32 %v326, %v146
    %v367 = vmul.f32 %v329, %v146
    %v368 = vmul.f32 %v332, %v146
    %v369 = vmul.f32 %v335, %v146
    %v370 = vmul.f32 %v338, %v146
    %v371 = vadd.f32 %v339, 1e-05
    %v372 = vadd.f32 %v340, 1e-05
    %v373 = vadd.f32 %v341, 1e-05
    %v374 = vadd.f32 %v342, 1e-05
    %v375 = vadd.f32 %v343, 1e-05
    %v376 = vadd.f32 %v344, 1e-05
    %v377 = vadd.f32 %v345, 1e-05
    %v378 = vadd.f32 %v346, 1e-05
    %v379 = vadd.f32 %v347, 1e-05
    %v380 = vadd.f32 %v348, 1e-05
    %v381 = vadd.f32 %v349, 1e-05
    %v382 = vadd.f32 %v350, 1e-05
    %v383 = vadd.f32 %v351, 1e-05
    %v384 = vadd.f32 %v352, 1e-05
    %v385 = vadd.f32 %v353, 1e-05
    %v386 = vadd.f32 %v354, 1e-05
    %v387 = vadd.f32 %v355, 1e-05
    %v388 = vadd.f32 %v356, 1e-05
    %v389 = vadd.f32 %v357, 1e-05
    %v390 = vadd.f32 %v358, 1e-05
    %v391 = vadd.f32 %v359, 1e-05
    %v392 = vadd.f32 %v360, 1e-05
    %v393 = vadd.f32 %v361, 1e-05
    %v394 = vadd.f32 %v362, 1e-05
    %v395 = vadd.f32 %v363, 1e-05
    %v396 = vadd.f32 %v364, 1e-05
    %v397 = vadd.f32 %v365, 1e-05
    %v398 = vadd.f32 %v366, 1e-05
    %v399 = vadd.f32 %v367, 1e-05
    %v400 = vadd.f32 %v368, 1e-05
    %v401 = vadd.f32 %v369, 1e-05
    %v402 = vadd.f32 %v370, 1e-05
    %v403 = vrsqrt.pop %v371
    %v404 = vrsqrt.pop %v372
    %v405 = vrsqrt.pop %v373
    %v406 = vrsqrt.pop %v374
    %v407 = vrsqrt.pop %v375
    %v408 = vrsqrt.pop %v376
    %v409 = vrsqrt.pop %v377
    %v410 = vrsqrt.pop %v378
    %v411 = vrsqrt.pop %v379
    %v412 = vrsqrt.pop %v380
    %v413 = vrsqrt.pop %v381
    %v414 = vrsqrt.pop %v382
    %v415 = vrsqrt.pop %v383
    %v416 = vrsqrt.pop %v384
    %v417 = vrsqrt.pop %v385
    %v418 = vrsqrt.pop %v386
    %v419 = vrsqrt.pop %v387
    %v420 = vrsqrt.pop %v388
    %v421 = vrsqrt.pop %v389
    %v422 = vrsqrt.pop %v390
    %v423 = vrsqrt.pop %v391
    %v424 = vrsqrt.pop %v392
    %v425 = vrsqrt.pop %v393
    %v426 = vrsqrt.pop %v394
    %v427 = vrsqrt.pop %v395
    %v428 = vrsqrt.pop %v396
    %v429 = vrsqrt.pop %v397
    %v430 = vrsqrt.pop %v398
    %v431 = vrsqrt.pop %v399
    %v432 = vrsqrt.pop %v400
    %v433 = vrsqrt.pop %v401
    %v434 = vrsqrt.pop %v402
    %v435 = vmul.f32 %v179, %v403
    %v436 = vmul.f32 %v180, %v404
    %v437 = vmul.f32 %v181, %v405
    %v438 = vmul.f32 %v182, %v406
    %v439 = vmul.f32 %v183, %v407
    %v440 = vmul.f32 %v184, %v408
    %v441 = vmul.f32 %v185, %v409
    %v442 = vmul.f32 %v186, %v410
    %v443 = vmul.f32 %v187, %v411
    %v444 = vmul.f32 %v188, %v412
    %v445 = vmul.f32 %v189, %v413
    %v446 = vmul.f32 %v190, %v414
    %v447 = vmul.f32 %v191, %v415
    %v448 = vmul.f32 %v192, %v416
    %v449 = vmul.f32 %v193, %v417
    %v450 = vmul.f32 %v194, %v418
    %v451 = vmul.f32 %v195, %v419
    %v452 = vmul.f32 %v196, %v420
    %v453 = vmul.f32 %v197, %v421
    %v454 = vmul.f32 %v198, %v422
    %v455 = vmul.f32 %v199, %v423
    %v456 = vmul.f32 %v200, %v424
    %v457 = vmul.f32 %v201, %v425
    %v458 = vmul.f32 %v202, %v426
    %v459 = vmul.f32 %v203, %v427
    %v460 = vmul.f32 %v204, %v428
    %v461 = vmul.f32 %v205, %v429
    %v462 = vmul.f32 %v206, %v430
    %v463 = vmul.f32 %v207, %v431
    %v464 = vmul.f32 %v208, %v432
    %v465 = vmul.f32 %v209, %v433
    %v466 = vmul.f32 %v210, %v434
    %v468 = vlaneseq
    %v469 = vshrl.u32 %v468, 7
    %v470 = vsub.s32 0, %v469
    %v471 = vrot.slane %v47, %v470
    %v473 = vmul.f32 %v435, %v471
    %v474 = vmul.f32 %v436, %v471
    %v475 = vmul.f32 %v437, %v471
    %v476 = vmul.f32 %v438, %v471
    %v477 = vmul.f32 %v439, %v471
    %v478 = vmul.f32 %v440, %v471
    %v479 = vmul.f32 %v441, %v471
    %v480 = vmul.f32 %v442, %v471
    %v481 = vmul.f32 %v443, %v471
    %v482 = vmul.f32 %v444, %v471
    %v483 = vmul.f32 %v445, %v471
    %v484 = vmul.f32 %v446, %v471
    %v485 = vmul.f32 %v447, %v471
    %v486 = vmul.f32 %v448, %v471
    %v487 = vmul.f32 %v449, %v471
    %v488 = vmul.f32 %v450, %v471
    %v489 = vmul.f32 %v451, %v471
    %v490 = vmul.f32 %v452, %v471
    %v491 = vmul.f32 %v453, %v471
    %v492 = vmul.f32 %v454, %v471
    %v493 = vmul.f32 %v455, %v471
    %v494 = vmul.f32 %v456, %v471
    %v495 = vmul.f32 %v457, %v471
    %v496 = vmul.f32 %v458, %v471
    %v497 = vmul.f32 %v459, %v471
    %v498 = vmul.f32 %v460, %v471
    %v499 = vmul.f32 %v461, %v471
    %v500 = vmul.f32 %v462, %v471
    %v501 = vmul.f32 %v463, %v471
    %v502 = vmul.f32 %v464, %v471
    %v503 = vmul.f32 %v465, %v471
    %v504 = vmul.f32 %v466, %v471
    %v506 = vlaneseq
    %v507 = vshrl.u32 %v506, 7
    %v508 = vsub.s32 0, %v507
    %v509 = vrot.slane %v48, %v508
    %v511 = vadd.f32 %v473, %v509
    %v512 = vadd.f32 %v474, %v509
    %v513 = vadd.f32 %v475, %v509
    %v514 = vadd.f32 %v476, %v509
    %v515 = vadd.f32 %v477, %v509
    %v516 = vadd.f32 %v478, %v509
    %v517 = vadd.f32 %v479, %v509
    %v518 = vadd.f32 %v480, %v509
    %v519 = vadd.f32 %v481, %v509
    %v520 = vadd.f32 %v482, %v509
    %v521 = vadd.f32 %v483, %v509
    %v522 = vadd.f32 %v484, %v509
    %v523 = vadd.f32 %v485, %v509
    %v524 = vadd.f32 %v486, %v509
    %v525 = vadd.f32 %v487, %v509
    %v526 = vadd.f32 %v488, %v509
    %v527 = vadd.f32 %v489, %v509
    %v528 = vadd.f32 %v490, %v509
    %v529 = vadd.f32 %v491, %v509
    %v530 = vadd.f32 %v492, %v509
    %v531 = vadd.f32 %v493, %v509
    %v532 = vadd.f32 %v494, %v509
    %v533 = vadd.f32 %v495, %v509
    %v534 = vadd.f32 %v496, %v509
    %v535 = vadd.f32 %v497, %v509
    %v536 = vadd.f32 %v498, %v509
    %v537 = vadd.f32 %v499, %v509
    %v538 = vadd.f32 %v500, %v509
    %v539 = vadd.f32 %v501, %v509
    %v540 = vadd.f32 %v502, %v509
    %v541 = vadd.f32 %v503, %v509
    %v542 = vadd.f32 %v504, %v509
    %543 = vst.msk [vmem:[#allocation2] sm:$0xff] %vm49, %v511
    %544 = vst.msk [vmem:[#allocation2 + $0x8] sm:$0xff] %vm49, %v512
    %545 = vst.msk [vmem:[#allocation2 + $0x10] sm:$0xff] %vm49, %v513
    %546 = vst.msk [vmem:[#allocation2 + $0x18] sm:$0xff] %vm49, %v514
    %547 = vst.msk [vmem:[#allocation2 + $0x20] sm:$0xff] %vm49, %v515
    %548 = vst.msk [vmem:[#allocation2 + $0x28] sm:$0xff] %vm49, %v516
    %549 = vst.msk [vmem:[#allocation2 + $0x30] sm:$0xff] %vm49, %v517
    %550 = vst.msk [vmem:[#allocation2 + $0x38] sm:$0xff] %vm49, %v518
    %551 = vst.msk [vmem:[#allocation2 + $0x40] sm:$0xff] %vm49, %v519
    %552 = vst.msk [vmem:[#allocation2 + $0x48] sm:$0xff] %vm49, %v520
    %553 = vst.msk [vmem:[#allocation2 + $0x50] sm:$0xff] %vm49, %v521
    %554 = vst.msk [vmem:[#allocation2 + $0x58] sm:$0xff] %vm49, %v522
    %555 = vst.msk [vmem:[#allocation2 + $0x60] sm:$0xff] %vm49, %v523
    %556 = vst.msk [vmem:[#allocation2 + $0x68] sm:$0xff] %vm49, %v524
    %557 = vst.msk [vmem:[#allocation2 + $0x70] sm:$0xff] %vm49, %v525
    %558 = vst.msk [vmem:[#allocation2 + $0x78] sm:$0xff] %vm49, %v526
    %559 = vst.msk [vmem:[#allocation2 + $0x80] sm:$0xff] %vm49, %v527
    %560 = vst.msk [vmem:[#allocation2 + $0x88] sm:$0xff] %vm49, %v528
    %561 = vst.msk [vmem:[#allocation2 + $0x90] sm:$0xff] %vm49, %v529
    %562 = vst.msk [vmem:[#allocation2 + $0x98] sm:$0xff] %vm49, %v530
    %563 = vst.msk [vmem:[#allocation2 + $0xa0] sm:$0xff] %vm49, %v531
    %564 = vst.msk [vmem:[#allocation2 + $0xa8] sm:$0xff] %vm49, %v532
    %565 = vst.msk [vmem:[#allocation2 + $0xb0] sm:$0xff] %vm49, %v533
    %566 = vst.msk [vmem:[#allocation2 + $0xb8] sm:$0xff] %vm49, %v534
    %567 = vst.msk [vmem:[#allocation2 + $0xc0] sm:$0xff] %vm49, %v535
    %568 = vst.msk [vmem:[#allocation2 + $0xc8] sm:$0xff] %vm49, %v536
    %569 = vst.msk [vmem:[#allocation2 + $0xd0] sm:$0xff] %vm49, %v537
    %570 = vst.msk [vmem:[#allocation2 + $0xd8] sm:$0xff] %vm49, %v538
    %571 = vst.msk [vmem:[#allocation2 + $0xe0] sm:$0xff] %vm49, %v539
    %572 = vst.msk [vmem:[#allocation2 + $0xe8] sm:$0xff] %vm49, %v540
    %573 = vst.msk [vmem:[#allocation2 + $0xf0] sm:$0xff] %vm49, %v541
    %574 = vst.msk [vmem:[#allocation2 + $0xf8] sm:$0xff] %vm49, %v542
    // Predicated region
    $region14: #{sa_forward.7} parent=1 // pred_check
      _
    $region15: #{sa_forward.7} parent=1 // pred_check_branch
      %576 = sbr.rel (0) target = $region17
    $region16: #{sa_forward.7} parent=1 // pred_region
      %s578 = ssub.s32 4096, 4096
      %579 = vsyncadd [#allocation3], %s578
      %s580 = sshll.u32 [#allocation2], 4
      %s581 = int_to_ptr.vmem [resolvable:$true] %s580
      %586 = dma.vmem_to_hbm [thread:$0]  %s581, 4096, %s3, [#allocation3], 128, 128, 8
    $region17: #{sa_forward.7} parent=1 // pred_fallthru
      _
    // Predicated region
    $region18: #{sa_forward.7} parent=1 // pred_check
      _
    $region19: #{sa_forward.7} parent=1 // pred_check_branch
      %588 = sbr.rel (0) target = $region21
    $region20: #{sa_forward.7} parent=1 // pred_region
      %589 = dma.done [#allocation3], 4096
    $region21: #{sa_forward.7} parent=1 // pred_fallthru
      _
    %590 = vsyncpa [#allocation3], 1

// kernel: sa_forward.5
$region0: #{sa_forward.5}
  #allocation0 [shape = 'u32[]', space=smem, size = 0x4, offset = 0x4, fixed_abs, tag = 'smem constant byte address 0x4 - core index']
  #allocation1 [shape = 'u32[144,128]{1,0:T(1,128)}', space=vmem, size = 0x12000, scoped, tag = 'internal scratch']
  %s0 = inlined_call_operand.vmem [shape: f32[4,64,64], index: 0, kind: input, shape index: {}]
  %s1 = inlined_call_operand.vmem [shape: f32[64,192], index: 1, kind: input, shape index: {}]
  %s2 = inlined_call_operand.vmem [shape: f32[1,192], index: 2, kind: input, shape index: {}]
  %s3 = inlined_call_operand.vmem [shape: f32[64,64], index: 3, kind: input, shape index: {}]
  %s4 = inlined_call_operand.vmem [shape: f32[1,64], index: 4, kind: input, shape index: {}]
  %s5 = inlined_call_operand.vmem [shape: f32[1,64], index: 5, kind: input, shape index: {}]
  %s6 = inlined_call_operand.vmem [shape: f32[1,64], index: 6, kind: input, shape index: {}]
  %s7 = inlined_call_operand.vmem [shape: f32[64,128], index: 7, kind: input, shape index: {}]
  %s8 = inlined_call_operand.vmem [shape: f32[1,128], index: 8, kind: input, shape index: {}]
  %s9 = inlined_call_operand.vmem [shape: f32[128,64], index: 9, kind: input, shape index: {}]
  %s10 = inlined_call_operand.vmem [shape: f32[1,64], index: 10, kind: input, shape index: {}]
  %s11 = inlined_call_operand.vmem [shape: f32[1,64], index: 11, kind: input, shape index: {}]
  %s12 = inlined_call_operand.vmem [shape: f32[1,64], index: 12, kind: input, shape index: {}]
  %s13 = inlined_call_operand.vmem [shape: f32[4,64,64], index: 13, kind: output, shape index: {}]
  %s14 = sld [smem:[#allocation0]]
  $region85: #{sa_forward.5} parent=0
    _
  %s16 = ssub.s32 1, %s14
  %s17 = scalar_select 0, %s16, %s14
  loop: start=0, step=1, limit=6
  $region2: #{sa_forward.5} parent=0 // loop_pre_header
    _
  $region3: #{sa_forward.5} parent=0 // loop_header
    %s19 = sphi 0, %s23
    %p20 = scmp.ge.s32.totalorder %s19, 6
    %s29 = sphi 0, %s31
    %s32 = sphi 0, %s29
    %s33 = sphi 0, %s32
    %s49 = sphi 0, %s33
    %s53 = sphi 0, %s53
    %s55 = sphi 0, %s53
    %s56 = sphi 0, %s55
    %s70 = sphi 0, %s56
    %s74 = sphi 0, %s74
    %s76 = sphi 0, %s74
    %s77 = sphi 0, %s76
    %s91 = sphi 0, %s77
    %s95 = sphi 0, %s95
    %s97 = sphi 0, %s95
    %s98 = sphi 0, %s97
    %s112 = sphi 0, %s98
    %s116 = sphi 0, %s116
    %s118 = sphi 0, %s116
    %s119 = sphi 0, %s118
    %s133 = sphi 0, %s119
    %s137 = sphi 0, %s137
    %s139 = sphi 0, %s137
    %s140 = sphi 0, %s139
    %s154 = sphi 0, %s140
    %s158 = sphi 0, %s158
    %s160 = sphi 0, %s158
    %s161 = sphi 0, %s160
    %s175 = sphi 0, %s161
    %s179 = sphi 0, %s179
    %s181 = sphi 0, %s179
    %s182 = sphi 0, %s181
    %s196 = sphi 0, %s182
    %s200 = sphi 0, %s200
    %s202 = sphi 0, %s200
    %s203 = sphi 0, %s202
    %s217 = sphi 0, %s203
    %s221 = sphi 0, %s221
    %s223 = sphi 0, %s221
    %s224 = sphi 0, %s223
    %s238 = sphi 0, %s224
    %s242 = sphi 0, %s242
    %s244 = sphi 0, %s242
    %s245 = sphi 0, %s244
    %s259 = sphi 0, %s245
    %s263 = sphi 0, %s263
    %s265 = sphi 0, %s263
    %s266 = sphi 0, %s265
    %s280 = sphi 0, %s266
    %s284 = sphi 0, %s284
    %s286 = sphi 0, %s284
    %s287 = sphi 0, %s286
    %s301 = sphi 0, %s287
    %s307 = sphi 0, %s309
    %s310 = sphi 0, %s307
    %s311 = sphi 0, %s310
    %s327 = sphi 0, %s311
  $region4: #{sa_forward.5} parent=0 // loop_header_branch
    %22 = sbr.rel (%p20) target = $region8
  $region5: #{sa_forward.5} parent=0 // loop_body
    %s24 = ssub.s32 %s19, 1
    %s25 = ssub.s32 %s19, 2
    %s26 = sadd.s32 %s19, 1
    %s27 = ssub.s32 %s19, %s26
    %p28 = scmp.eq.s32.totalorder %s27, 0
    %s30 = sadd.s32 %s29, 1
    %s31 = scalar_select %p28, %s29, %s30
    %p34 = pneg %p28
    %p35 = scmp.eq.s32.totalorder %s19, 3
    %p36 = por %p34, %p35
    %p37 = scmp.ne.s32.totalorder %s29, %s32
    %p38 = scmp.eq.s32.totalorder %s19, 0
    %p39 = por %p37, %p38
    %p40 = scmp.ne.s32.totalorder %s29, %s32
    %p41 = scmp.eq.s32.totalorder %s24, 3
    %p42 = por %p40, %p41
    %p43 = scmp.ne.s32.totalorder %s32, %s33
    %p44 = scmp.eq.s32.totalorder %s24, 0
    %p45 = por %p43, %p44
    %p46 = scmp.ne.s32.totalorder %s32, %s33
    %p47 = scmp.eq.s32.totalorder %s25, 3
    %p48 = por %p46, %p47
    %p50 = scmp.ne.s32.totalorder %s33, %s49
    %p51 = scmp.eq.s32.totalorder %s25, 0
    %p52 = por %p50, %p51
    %s54 = sadd.s32 %s53, 1
    %p57 = scmp.eq.s32.totalorder %s19, 3
    %p58 = scmp.ne.s32.totalorder %s53, %s55
    %p59 = scmp.eq.s32.totalorder %s19, 0
    %p60 = por %p58, %p59
    %p61 = scmp.ne.s32.totalorder %s53, %s55
    %p62 = scmp.eq.s32.totalorder %s24, 3
    %p63 = por %p61, %p62
    %p64 = scmp.ne.s32.totalorder %s55, %s56
    %p65 = scmp.eq.s32.totalorder %s24, 0
    %p66 = por %p64, %p65
    %p67 = scmp.ne.s32.totalorder %s55, %s56
    %p68 = scmp.eq.s32.totalorder %s25, 3
    %p69 = por %p67, %p68
    %p71 = scmp.ne.s32.totalorder %s56, %s70
    %p72 = scmp.eq.s32.totalorder %s25, 0
    %p73 = por %p71, %p72
    %s75 = sadd.s32 %s74, 1
    %p78 = scmp.eq.s32.totalorder %s19, 3
    %p79 = scmp.ne.s32.totalorder %s74, %s76
    %p80 = scmp.eq.s32.totalorder %s19, 0
    %p81 = por %p79, %p80
    %p82 = scmp.ne.s32.totalorder %s74, %s76
    %p83 = scmp.eq.s32.totalorder %s24, 3
    %p84 = por %p82, %p83
    %p85 = scmp.ne.s32.totalorder %s76, %s77
    %p86 = scmp.eq.s32.totalorder %s24, 0
    %p87 = por %p85, %p86
    %p88 = scmp.ne.s32.totalorder %s76, %s77
    %p89 = scmp.eq.s32.totalorder %s25, 3
    %p90 = por %p88, %p89
    %p92 = scmp.ne.s32.totalorder %s77, %s91
    %p93 = scmp.eq.s32.totalorder %s25, 0
    %p94 = por %p92, %p93
    %s96 = sadd.s32 %s95, 1
    %p99 = scmp.eq.s32.totalorder %s19, 3
    %p100 = scmp.ne.s32.totalorder %s95, %s97
    %p101 = scmp.eq.s32.totalorder %s19, 0
    %p102 = por %p100, %p101
    %p103 = scmp.ne.s32.totalorder %s95, %s97
    %p104 = scmp.eq.s32.totalorder %s24, 3
    %p105 = por %p103, %p104
    %p106 = scmp.ne.s32.totalorder %s97, %s98
    %p107 = scmp.eq.s32.totalorder %s24, 0
    %p108 = por %p106, %p107
    %p109 = scmp.ne.s32.totalorder %s97, %s98
    %p110 = scmp.eq.s32.totalorder %s25, 3
    %p111 = por %p109, %p110
    %p113 = scmp.ne.s32.totalorder %s98, %s112
    %p114 = scmp.eq.s32.totalorder %s25, 0
    %p115 = por %p113, %p114
    %s117 = sadd.s32 %s116, 1
    %p120 = scmp.eq.s32.totalorder %s19, 3
    %p121 = scmp.ne.s32.totalorder %s116, %s118
    %p122 = scmp.eq.s32.totalorder %s19, 0
    %p123 = por %p121, %p122
    %p124 = scmp.ne.s32.totalorder %s116, %s118
    %p125 = scmp.eq.s32.totalorder %s24, 3
    %p126 = por %p124, %p125
    %p127 = scmp.ne.s32.totalorder %s118, %s119
    %p128 = scmp.eq.s32.totalorder %s24, 0
    %p129 = por %p127, %p128
    %p130 = scmp.ne.s32.totalorder %s118, %s119
    %p131 = scmp.eq.s32.totalorder %s25, 3
    %p132 = por %p130, %p131
    %p134 = scmp.ne.s32.totalorder %s119, %s133
    %p135 = scmp.eq.s32.totalorder %s25, 0
    %p136 = por %p134, %p135
    %s138 = sadd.s32 %s137, 1
    %p141 = scmp.eq.s32.totalorder %s19, 3
    %p142 = scmp.ne.s32.totalorder %s137, %s139
    %p143 = scmp.eq.s32.totalorder %s19, 0
    %p144 = por %p142, %p143
    %p145 = scmp.ne.s32.totalorder %s137, %s139
    %p146 = scmp.eq.s32.totalorder %s24, 3
    %p147 = por %p145, %p146
    %p148 = scmp.ne.s32.totalorder %s139, %s140
    %p149 = scmp.eq.s32.totalorder %s24, 0
    %p150 = por %p148, %p149
    %p151 = scmp.ne.s32.totalorder %s139, %s140
    %p152 = scmp.eq.s32.totalorder %s25, 3
    %p153 = por %p151, %p152
    %p155 = scmp.ne.s32.totalorder %s140, %s154
    %p156 = scmp.eq.s32.totalorder %s25, 0
    %p157 = por %p155, %p156
    %s159 = sadd.s32 %s158, 1
    %p162 = scmp.eq.s32.totalorder %s19, 3
    %p163 = scmp.ne.s32.totalorder %s158, %s160
    %p164 = scmp.eq.s32.totalorder %s19, 0
    %p165 = por %p163, %p164
    %p166 = scmp.ne.s32.totalorder %s158, %s160
    %p167 = scmp.eq.s32.totalorder %s24, 3
    %p168 = por %p166, %p167
    %p169 = scmp.ne.s32.totalorder %s160, %s161
    %p170 = scmp.eq.s32.totalorder %s24, 0
    %p171 = por %p169, %p170
    %p172 = scmp.ne.s32.totalorder %s160, %s161
    %p173 = scmp.eq.s32.totalorder %s25, 3
    %p174 = por %p172, %p173
    %p176 = scmp.ne.s32.totalorder %s161, %s175
    %p177 = scmp.eq.s32.totalorder %s25, 0
    %p178 = por %p176, %p177
    %s180 = sadd.s32 %s179, 1
    %p183 = scmp.eq.s32.totalorder %s19, 3
    %p184 = scmp.ne.s32.totalorder %s179, %s181
    %p185 = scmp.eq.s32.totalorder %s19, 0
    %p186 = por %p184, %p185
    %p187 = scmp.ne.s32.totalorder %s179, %s181
    %p188 = scmp.eq.s32.totalorder %s24, 3
    %p189 = por %p187, %p188
    %p190 = scmp.ne.s32.totalorder %s181, %s182
    %p191 = scmp.eq.s32.totalorder %s24, 0
    %p192 = por %p190, %p191
    %p193 = scmp.ne.s32.totalorder %s181, %s182
    %p194 = scmp.eq.s32.totalorder %s25, 3
    %p195 = por %p193, %p194
    %p197 = scmp.ne.s32.totalorder %s182, %s196
    %p198 = scmp.eq.s32.totalorder %s25, 0
    %p199 = por %p197, %p198
    %s201 = sadd.s32 %s200, 1
    %p204 = scmp.eq.s32.totalorder %s19, 3
    %p205 = scmp.ne.s32.totalorder %s200, %s202
    %p206 = scmp.eq.s32.totalorder %s19, 0
    %p207 = por %p205, %p206
    %p208 = scmp.ne.s32.totalorder %s200, %s202
    %p209 = scmp.eq.s32.totalorder %s24, 3
    %p210 = por %p208, %p209
    %p211 = scmp.ne.s32.totalorder %s202, %s203
    %p212 = scmp.eq.s32.totalorder %s24, 0
    %p213 = por %p211, %p212
    %p214 = scmp.ne.s32.totalorder %s202, %s203
    %p215 = scmp.eq.s32.totalorder %s25, 3
    %p216 = por %p214, %p215
    %p218 = scmp.ne.s32.totalorder %s203, %s217
    %p219 = scmp.eq.s32.totalorder %s25, 0
    %p220 = por %p218, %p219
    %s222 = sadd.s32 %s221, 1
    %p225 = scmp.eq.s32.totalorder %s19, 3
    %p226 = scmp.ne.s32.totalorder %s221, %s223
    %p227 = scmp.eq.s32.totalorder %s19, 0
    %p228 = por %p226, %p227
    %p229 = scmp.ne.s32.totalorder %s221, %s223
    %p230 = scmp.eq.s32.totalorder %s24, 3
    %p231 = por %p229, %p230
    %p232 = scmp.ne.s32.totalorder %s223, %s224
    %p233 = scmp.eq.s32.totalorder %s24, 0
    %p234 = por %p232, %p233
    %p235 = scmp.ne.s32.totalorder %s223, %s224
    %p236 = scmp.eq.s32.totalorder %s25, 3
    %p237 = por %p235, %p236
    %p239 = scmp.ne.s32.totalorder %s224, %s238
    %p240 = scmp.eq.s32.totalorder %s25, 0
    %p241 = por %p239, %p240
    %s243 = sadd.s32 %s242, 1
    %p246 = scmp.eq.s32.totalorder %s19, 3
    %p247 = scmp.ne.s32.totalorder %s242, %s244
    %p248 = scmp.eq.s32.totalorder %s19, 0
    %p249 = por %p247, %p248
    %p250 = scmp.ne.s32.totalorder %s242, %s244
    %p251 = scmp.eq.s32.totalorder %s24, 3
    %p252 = por %p250, %p251
    %p253 = scmp.ne.s32.totalorder %s244, %s245
    %p254 = scmp.eq.s32.totalorder %s24, 0
    %p255 = por %p253, %p254
    %p256 = scmp.ne.s32.totalorder %s244, %s245
    %p257 = scmp.eq.s32.totalorder %s25, 3
    %p258 = por %p256, %p257
    %p260 = scmp.ne.s32.totalorder %s245, %s259
    %p261 = scmp.eq.s32.totalorder %s25, 0
    %p262 = por %p260, %p261
    %s264 = sadd.s32 %s263, 1
    %p267 = scmp.eq.s32.totalorder %s19, 3
    %p268 = scmp.ne.s32.totalorder %s263, %s265
    %p269 = scmp.eq.s32.totalorder %s19, 0
    %p270 = por %p268, %p269
    %p271 = scmp.ne.s32.totalorder %s263, %s265
    %p272 = scmp.eq.s32.totalorder %s24, 3
    %p273 = por %p271, %p272
    %p274 = scmp.ne.s32.totalorder %s265, %s266
    %p275 = scmp.eq.s32.totalorder %s24, 0
    %p276 = por %p274, %p275
    %p277 = scmp.ne.s32.totalorder %s265, %s266
    %p278 = scmp.eq.s32.totalorder %s25, 3
    %p279 = por %p277, %p278
    %p281 = scmp.ne.s32.totalorder %s266, %s280
    %p282 = scmp.eq.s32.totalorder %s25, 0
    %p283 = por %p281, %p282
    %s285 = sadd.s32 %s284, 1
    %p288 = scmp.eq.s32.totalorder %s19, 3
    %p289 = scmp.ne.s32.totalorder %s284, %s286
    %p290 = scmp.eq.s32.totalorder %s19, 0
    %p291 = por %p289, %p290
    %p292 = scmp.ne.s32.totalorder %s284, %s286
    %p293 = scmp.eq.s32.totalorder %s24, 3
    %p294 = por %p292, %p293
    %p295 = scmp.ne.s32.totalorder %s286, %s287
    %p296 = scmp.eq.s32.totalorder %s24, 0
    %p297 = por %p295, %p296
    %p298 = scmp.ne.s32.totalorder %s286, %s287
    %p299 = scmp.eq.s32.totalorder %s25, 3
    %p300 = por %p298, %p299
    %p302 = scmp.ne.s32.totalorder %s287, %s301
    %p303 = scmp.eq.s32.totalorder %s25, 0
    %p304 = por %p302, %p303
    %s305 = ssub.s32 %s19, %s26
    %p306 = scmp.eq.s32.totalorder %s305, 0
    %s308 = sadd.s32 %s307, 1
    %s309 = scalar_select %p306, %s307, %s308
    %p312 = pneg %p306
    %p313 = scmp.eq.s32.totalorder %s19, 3
    %p314 = por %p312, %p313
    %p315 = scmp.ne.s32.totalorder %s307, %s310
    %p316 = scmp.eq.s32.totalorder %s19, 0
    %p317 = por %p315, %p316
    %p318 = scmp.ne.s32.totalorder %s307, %s310
    %p319 = scmp.eq.s32.totalorder %s24, 3
    %p320 = por %p318, %p319
    %p321 = scmp.ne.s32.totalorder %s310, %s311
    %p322 = scmp.eq.s32.totalorder %s24, 0
    %p323 = por %p321, %p322
    %p324 = scmp.ne.s32.totalorder %s310, %s311
    %p325 = scmp.eq.s32.totalorder %s25, 3
    %p326 = por %p324, %p325
    %p328 = scmp.ne.s32.totalorder %s311, %s327
    %p329 = scmp.eq.s32.totalorder %s25, 0
    %p330 = por %p328, %p329
    %p331 = scmp.le.s32.totalorder 1, %s19
    %p332 = scmp.lt.s32.totalorder %s19, 5
    %p333 = pnand %p331, %p332
    %p334 = pneg %p333
    // Predicated region
    $region9: #{sa_forward.5} parent=5 // pred_check
      _
    $region10: #{sa_forward.5} parent=5 // pred_check_branch
      %336 = sbr.rel (%p333) target = $region12
    $region11: #{sa_forward.5} parent=5 // pred_region
      %s337 = ssub.s32 %s19, 1
      // Predicated region
      $region13: #{sa_forward.5} parent=11 // pred_check
        %p338 = pneg %p66
      $region14: #{sa_forward.5} parent=11 // pred_check_branch
        %340 = sbr.rel (%p338) target = $region16
      $region15: #{sa_forward.5} parent=11 // pred_region
        _
      $region16: #{sa_forward.5} parent=11 // pred_fallthru
        _
      // Predicated region
      $region17: #{sa_forward.5} parent=11 // pred_check
        %p341 = pneg %p87
      $region18: #{sa_forward.5} parent=11 // pred_check_branch
        %343 = sbr.rel (%p341) target = $region20
      $region19: #{sa_forward.5} parent=11 // pred_region
        _
      $region20: #{sa_forward.5} parent=11 // pred_fallthru
        _
      // Predicated region
      $region21: #{sa_forward.5} parent=11 // pred_check
        %p344 = pneg %p108
      $region22: #{sa_forward.5} parent=11 // pred_check_branch
        %346 = sbr.rel (%p344) target = $region24
      $region23: #{sa_forward.5} parent=11 // pred_region
        _
      $region24: #{sa_forward.5} parent=11 // pred_fallthru
        _
      // Predicated region
      $region25: #{sa_forward.5} parent=11 // pred_check
        %p347 = pneg %p129
      $region26: #{sa_forward.5} parent=11 // pred_check_branch
        %349 = sbr.rel (%p347) target = $region28
      $region27: #{sa_forward.5} parent=11 // pred_region
        _
      $region28: #{sa_forward.5} parent=11 // pred_fallthru
        _
      // Predicated region
      $region29: #{sa_forward.5} parent=11 // pred_check
        %p350 = pneg %p150
      $region30: #{sa_forward.5} parent=11 // pred_check_branch
        %352 = sbr.rel (%p350) target = $region32
      $region31: #{sa_forward.5} parent=11 // pred_region
        _
      $region32: #{sa_forward.5} parent=11 // pred_fallthru
        _
      // Predicated region
      $region33: #{sa_forward.5} parent=11 // pred_check
        %p353 = pneg %p171
      $region34: #{sa_forward.5} parent=11 // pred_check_branch
        %355 = sbr.rel (%p353) target = $region36
      $region35: #{sa_forward.5} parent=11 // pred_region
        _
      $region36: #{sa_forward.5} parent=11 // pred_fallthru
        _
      // Predicated region
      $region37: #{sa_forward.5} parent=11 // pred_check
        %p356 = pneg %p192
      $region38: #{sa_forward.5} parent=11 // pred_check_branch
        %358 = sbr.rel (%p356) target = $region40
      $region39: #{sa_forward.5} parent=11 // pred_region
        _
      $region40: #{sa_forward.5} parent=11 // pred_fallthru
        _
      // Predicated region
      $region41: #{sa_forward.5} parent=11 // pred_check
        %p359 = pneg %p213
      $region42: #{sa_forward.5} parent=11 // pred_check_branch
        %361 = sbr.rel (%p359) target = $region44
      $region43: #{sa_forward.5} parent=11 // pred_region
        _
      $region44: #{sa_forward.5} parent=11 // pred_fallthru
        _
      // Predicated region
      $region45: #{sa_forward.5} parent=11 // pred_check
        %p362 = pneg %p234
      $region46: #{sa_forward.5} parent=11 // pred_check_branch
        %364 = sbr.rel (%p362) target = $region48
      $region47: #{sa_forward.5} parent=11 // pred_region
        _
      $region48: #{sa_forward.5} parent=11 // pred_fallthru
        _
      // Predicated region
      $region49: #{sa_forward.5} parent=11 // pred_check
        %p365 = pneg %p255
      $region50: #{sa_forward.5} parent=11 // pred_check_branch
        %367 = sbr.rel (%p365) target = $region52
      $region51: #{sa_forward.5} parent=11 // pred_region
        _
      $region52: #{sa_forward.5} parent=11 // pred_fallthru
        _
      // Predicated region
      $region53: #{sa_forward.5} parent=11 // pred_check
        %p368 = pneg %p276
      $region54: #{sa_forward.5} parent=11 // pred_check_branch
        %370 = sbr.rel (%p368) target = $region56
      $region55: #{sa_forward.5} parent=11 // pred_region
        _
      $region56: #{sa_forward.5} parent=11 // pred_fallthru
        _
      // Predicated region
      $region57: #{sa_forward.5} parent=11 // pred_check
        %p371 = pneg %p297
      $region58: #{sa_forward.5} parent=11 // pred_check_branch
        %373 = sbr.rel (%p371) target = $region60
      $region59: #{sa_forward.5} parent=11 // pred_region
        _
      $region60: #{sa_forward.5} parent=11 // pred_fallthru
        _
    $region12: #{sa_forward.5} parent=5 // pred_fallthru
      _
    %p374 = scmp.lt.s32.totalorder %s19, 4
    // Predicated region
    $region61: #{sa_forward.5} parent=5 // pred_check
      %p375 = pneg %p374
    $region62: #{sa_forward.5} parent=5 // pred_check_branch
      %377 = sbr.rel (%p375) target = $region64
    $region63: #{sa_forward.5} parent=5 // pred_region
      // Predicated region
      $region65: #{sa_forward.5} parent=63 // pred_check
        %p378 = pneg %p39
      $region66: #{sa_forward.5} parent=63 // pred_check_branch
        %380 = sbr.rel (%p378) target = $region68
      $region67: #{sa_forward.5} parent=63 // pred_region
        %p381 = scmp.lt.s32.totalorder %s19, 3
        %s382 = scalar_select %p381, %s19, 3
        %s383 = smul.addr %s382, 8
        %s384 = smul.addr %s383, 8
        %s385 = scalar_lea.vmem %s0, %s384
      $region68: #{sa_forward.5} parent=63 // pred_fallthru
        _
    $region64: #{sa_forward.5} parent=5 // pred_fallthru
      _
    %p386 = scmp.le.s32.totalorder 1, %s19
    %p387 = scmp.lt.s32.totalorder %s19, 5
    %p388 = pnand %p386, %p387
    %p389 = pneg %p388
    // Predicated region
    $region69: #{sa_forward.5} parent=5 // pred_check
      _
    $region70: #{sa_forward.5} parent=5 // pred_check_branch
      %391 = sbr.rel (%p388) target = $region72
    $region71: #{sa_forward.5} parent=5 // pred_region
      %s392 = ssub.s32 %s19, 1
      %p393 = scmp.lt.s32.totalorder %s24, 3
      %s394 = scalar_select %p393, %s24, 3
      %s395 = smul.addr %s394, 8
      %s396 = smul.addr %s395, 8
      %s397 = scalar_lea.vmem %s0, %s396
      %p398 = pneg %p45
      %p399 = pneg %p42
      %p400 = pneg %p66
      %p401 = pneg %p63
      %p402 = pneg %p87
      %p403 = pneg %p84
      %p404 = pneg %p108
      %p405 = pneg %p105
      %p406 = pneg %p129
      %p407 = pneg %p126
      %p408 = pneg %p150
      %p409 = pneg %p147
      %p410 = pneg %p171
      %p411 = pneg %p168
      %p412 = pneg %p192
      %p413 = pneg %p189
      %p414 = pneg %p213
      %p415 = pneg %p210
      %p416 = pneg %p234
      %p417 = pneg %p231
      %p418 = pneg %p255
      %p419 = pneg %p252
      %p420 = pneg %p276
      %p421 = pneg %p273
      %p422 = pneg %p297
      %p423 = pneg %p294
      %p424 = pneg %p323
      %p425 = pneg %p320
      %p426 = scmp.lt.s32.totalorder %s24, 3
      %s427 = scalar_select %p426, %s24, 3
      %s428 = smul.addr %s427, 8
      %s429 = smul.addr %s428, 8
      %s430 = scalar_lea.vmem %s13, %s429
      %p431 = scmp.lt.s32.totalorder %s24, 3
      %s432 = scalar_select %p431, %s24, 3
      %s433 = smul.addr %s432, 8
      %s434 = smul.addr %s433, 8
      %s435 = scalar_lea.vmem %s0, %s434
      %p436 = scmp.lt.s32.totalorder %s24, 3
      %s437 = scalar_select %p436, %s24, 3
      %s438 = smul.addr %s437, 8
      %s439 = smul.addr %s438, 8
      %s440 = scalar_lea.vmem %s13, %s439
      %v442 = vld [vmem:[%s435] sm:$0xff]
      %v443 = vld [vmem:[%s435 + $0x8] sm:$0xff]
      %v444 = vld [vmem:[%s435 + $0x10] sm:$0xff]
      %v445 = vld [vmem:[%s435 + $0x18] sm:$0xff]
      %v446 = vld [vmem:[%s435 + $0x20] sm:$0xff]
      %v447 = vld [vmem:[%s435 + $0x28] sm:$0xff]
      %v448 = vld [vmem:[%s435 + $0x30] sm:$0xff]
      %v449 = vld [vmem:[%s435 + $0x38] sm:$0xff]
      %v450 = vld [vmem:[%s1] sm:$0xff]
      %v451 = vld [vmem:[%s1 + $0x8] sm:$0xff]
      %v452 = vld [vmem:[%s1 + $0x10] sm:$0xff]
      %v453 = vld [vmem:[%s1 + $0x18] sm:$0xff]
      %v454 = vld [vmem:[%s1 + $0x20] sm:$0xff]
      %v455 = vld [vmem:[%s1 + $0x28] sm:$0xff]
      %v456 = vld [vmem:[%s1 + $0x30] sm:$0xff]
      %v457 = vld [vmem:[%s1 + $0x38] sm:$0xff]
      %v458 = vld [vmem:[%s1 + $0x40] sm:$0xff]
      %v459 = vld [vmem:[%s1 + $0x48] sm:$0xff]
      %v460 = vld [vmem:[%s1 + $0x50] sm:$0xff]
      %v461 = vld [vmem:[%s1 + $0x58] sm:$0xff]
      %v462 = vld [vmem:[%s1 + $0x60] sm:$0xff]
      %v463 = vld [vmem:[%s1 + $0x68] sm:$0xff]
      %v464 = vld [vmem:[%s1 + $0x70] sm:$0xff]
      %v465 = vld [vmem:[%s1 + $0x78] sm:$0xff]
      %v466 = vpack.c.bf16 %v443, %v442
      %v467 = vpack.c.bf16 %v445, %v444
      %v468 = vpack.c.bf16 %v447, %v446
      %v469 = vpack.c.bf16 %v449, %v448
      %v470 = vpack.c.bf16 %v452, %v450
      %v471 = vpack.c.bf16 %v453, %v451
      %v472 = vpack.c.bf16 %v456, %v454
      %v473 = vpack.c.bf16 %v457, %v455
      %v474 = vpack.c.bf16 %v460, %v458
      %v475 = vpack.c.bf16 %v461, %v459
      %v476 = vpack.c.bf16 %v464, %v462
      %v477 = vpack.c.bf16 %v465, %v463
      %v478 = vld [vmem:[%s2] sm:$0x3]
      %v480 = vlaneseq
      %v481 = vshrl.u32 %v480, 7
      %v482 = vsub.s32 0, %v481
      %v483 = vrot.slane %v478, %v482
      %v484 = vlaneseq
      %v485 = vshrl.u32 %v484, 7
      %v486 = vsub.s32 1, %v485
      %v487 = vrot.slane %v478, %v486
      %vm490 = vcmask 523264
      %v492 = vsel %vm490, %v466, 0
      %v495 = vsel %vm490, %v467, 0
      %v498 = vsel %vm490, %v468, 0
      %v501 = vsel %vm490, %v469, 0
      %503 = vmatprep.subr.bf16.mxu0 %v471
      %504 = vmatpush1.bf16.msra.mxu0 %v470
      %505 = vmatprep.subr.bf16.mxu0 %v473
      %506 = vmatpush1.bf16.msra.mxu0 %v472
      %507 = vmatprep.subr.bf16.mxu0 %v475
      %508 = vmatpush1.bf16.msra.mxu0 %v474
      %509 = vmatprep.subr.bf16.mxu0 %v477
      %510 = vmatpush1.bf16.msra.mxu0 %v476
      %511 = vmatprep.subr.bf16.mxu0 0
      %512 = vmatpush1.bf16.msra.mxu0 0
      %513 = vmatprep.subr.bf16.mxu0 0
      %514 = vmatpush1.bf16.msra.mxu0 0
      %515 = vmatprep.subr.bf16.mxu0 0
      %516 = vmatpush1.bf16.msra.mxu0 0
      %517 = vmatprep.subr.bf16.mxu0 0
      %518 = vmatpush1.bf16.msra.mxu0 0
      %519 = vmatprep.subr.bf16.mxu0 0
      %520 = vmatpush1.bf16.msra.mxu0 0
      %521 = vmatprep.subr.bf16.mxu0 0
      %522 = vmatpush1.bf16.msra.mxu0 0
      %523 = vmatprep.subr.bf16.mxu0 0
      %524 = vmatpush1.bf16.msra.mxu0 0
      %525 = vmatprep.subr.bf16.mxu0 0
      %526 = vmatpush1.bf16.msra.mxu0 0
      %527 = vmatprep.subr.bf16.mxu0 0
      %528 = vmatpush1.bf16.msra.mxu0 0
      %529 = vmatprep.subr.bf16.mxu0 0
      %530 = vmatpush1.bf16.msra.mxu0 0
      %531 = vmatprep.subr.bf16.mxu0 0
      %532 = vmatpush1.bf16.msra.mxu0 0
      %533 = vmatprep.subr.bf16.mxu0 0
      %534 = vmatpush1.bf16.msra.mxu0 0
      %535 = vmatprep.mubr.bf16.mxu0 0
      %536 = vmatmul.mubr.bf16.gmra.mrb[0].mxu0 %v492
      %v537 = vpop.f32.mrb[0].mxu0
      %v538 = vadd.f32 %v483, %v537
      %v539 = vpop.f32.mrb[0].mxu0
      %v540 = vadd.f32 %v487, %v539
      %v541 = vpop.f32.mrb[0].mxu0
      %v542 = vadd.f32 %v483, %v541
      %v543 = vpop.f32.mrb[0].mxu0
      %v544 = vadd.f32 %v487, %v543
      %545 = vmatprep.mubr.bf16.mxu0 0
      %546 = vmatmul.mubr.bf16.gmra.mrb[0].mxu0 %v495
      %v547 = vpop.f32.mrb[0].mxu0
      %v548 = vadd.f32 %v483, %v547
      %v549 = vpop.f32.mrb[0].mxu0
      %v550 = vadd.f32 %v487, %v549
      %v551 = vpop.f32.mrb[0].mxu0
      %v552 = vadd.f32 %v483, %v551
      %v553 = vpop.f32.mrb[0].mxu0
      %v554 = vadd.f32 %v487, %v553
      %555 = vmatprep.mubr.bf16.mxu0 0
      %556 = vmatmul.mubr.bf16.gmra.mrb[0].mxu0 %v498
      %v557 = vpop.f32.mrb[0].mxu0
      %v558 = vadd.f32 %v483, %v557
      %v559 = vpop.f32.mrb[0].mxu0
      %v560 = vadd.f32 %v487, %v559
      %v561 = vpop.f32.mrb[0].mxu0
      %v562 = vadd.f32 %v483, %v561
      %v563 = vpop.f32.mrb[0].mxu0
      %v564 = vadd.f32 %v487, %v563
      %565 = vmatprep.mubr.bf16.mxu0 0
      %566 = vmatmul.mubr.bf16.gmra.mrb[0].mxu0 %v501
      %v567 = vpop.f32.mrb[0].mxu0
      %v568 = vadd.f32 %v483, %v567
      %v569 = vpop.f32.mrb[0].mxu0
      %v570 = vadd.f32 %v487, %v569
      %v571 = vpop.f32.mrb[0].mxu0
      %v572 = vadd.f32 %v483, %v571
      %v573 = vpop.f32.mrb[0].mxu0
      %v574 = vadd.f32 %v487, %v573
      %575 = vdwg.mxu0
      %v576 = vpack.c.bf16 %v542, %v538
      %v577 = vpack.c.bf16 %v552, %v548
      %v578 = vpack.c.bf16 %v562, %v558
      %v579 = vpack.c.bf16 %v572, %v568
      %584 = vrot.lane.b32.xlu0 %v576, 64
      %v585 = vpop.permute.xlu0 %584
      %586 = vrot.lane.b32.xlu0 %v577, 64
      %v587 = vpop.permute.xlu0 %586
      %588 = vrot.lane.b32.xlu0 %v578, 64
      %v589 = vpop.permute.xlu0 %588
      %590 = vrot.lane.b32.xlu0 %v579, 64
      %v591 = vpop.permute.xlu0 %590
      %vm592 = vcmask 64512
      %v594 = vsel %vm592, %v576, 0
      %v597 = vsel %vm592, %v577, 0
      %v600 = vsel %vm592, %v578, 0
      %v603 = vsel %vm592, %v579, 0
      %v606 = vsel %vm592, %v585, 0
      %v609 = vsel %vm592, %v587, 0
      %v612 = vsel %vm592, %v589, 0
      %v615 = vsel %vm592, %v591, 0
      %617 = vmatprep.subr.bf16.mxu0 0
      %618 = vmatpush1.bf16.xpose.msra.mxu0 %v606
      %619 = vmatprep.subr.bf16.mxu0 0
      %620 = vmatpush1.bf16.xpose.msra.mxu0 %v609
      %621 = vmatprep.subr.bf16.mxu0 0
      %622 = vmatpush1.bf16.xpose.msra.mxu0 %v612
      %623 = vmatprep.subr.bf16.mxu0 0
      %624 = vmatpush1.bf16.xpose.msra.mxu0 %v615
      %625 = vmatprep.subr.bf16.mxu0 0
      %626 = vmatpush1.bf16.xpose.msra.mxu0 0
      %627 = vmatprep.subr.bf16.mxu0 0
      %628 = vmatpush1.bf16.xpose.msra.mxu0 0
      %629 = vmatprep.subr.bf16.mxu0 0
      %630 = vmatpush1.bf16.xpose.msra.mxu0 0
      %631 = vmatprep.subr.bf16.mxu0 0
      %632 = vmatpush1.bf16.xpose.msra.mxu0 0
      %633 = vmatprep.subr.bf16.mxu0 0
      %634 = vmatpush1.bf16.xpose.msra.mxu0 0
      %635 = vmatprep.subr.bf16.mxu0 0
      %636 = vmatpush1.bf16.xpose.msra.mxu0 0
      %637 = vmatprep.subr.bf16.mxu0 0
      %638 = vmatpush1.bf16.xpose.msra.mxu0 0
      %639 = vmatprep.subr.bf16.mxu0 0
      %640 = vmatpush1.bf16.xpose.msra.mxu0 0
      %641 = vmatprep.subr.bf16.mxu0 0
      %642 = vmatpush1.bf16.xpose.msra.mxu0 0
      %643 = vmatprep.subr.bf16.mxu0 0
      %644 = vmatpush1.bf16.xpose.msra.mxu0 0
      %645 = vmatprep.subr.bf16.mxu0 0
      %646 = vmatpush1.bf16.xpose.msra.mxu0 0
      %647 = vmatprep.subr.bf16.mxu0 0
      %648 = vmatpush1.bf16.xpose.msra.mxu0 0
      %649 = vmatprep.mubr.bf16.mxu0 0
      %650 = vmatmul.mubr.bf16.gmra.mrb[0].mxu0 %v594
      %v651 = vpop.f32.mrb[0].mxu0
      %v652 = vadd.f32 0.0, %v651
      %v653 = vpop.f32.mrb[0].mxu0
      %v654 = vpop.f32.mrb[0].mxu0
      %v655 = vadd.f32 0.0, %v654
      %v656 = vpop.f32.mrb[0].mxu0
      %657 = vmatprep.mubr.bf16.mxu0 0
      %658 = vmatmul.mubr.bf16.gmra.mrb[0].mxu0 %v597
      %v659 = vpop.f32.mrb[0].mxu0
      %v660 = vadd.f32 0.0, %v659
      %v661 = vpop.f32.mrb[0].mxu0
      %v662 = vpop.f32.mrb[0].mxu0
      %v663 = vadd.f32 0.0, %v662
      %v664 = vpop.f32.mrb[0].mxu0
      %665 = vmatprep.mubr.bf16.mxu0 0
      %666 = vmatmul.mubr.bf16.gmra.mrb[0].mxu0 %v600
      %v667 = vpop.f32.mrb[0].mxu0
      %v668 = vadd.f32 0.0, %v667
      %v669 = vpop.f32.mrb[0].mxu0
      %v670 = vpop.f32.mrb[0].mxu0
      %v671 = vadd.f32 0.0, %v670
      %v672 = vpop.f32.mrb[0].mxu0
      %673 = vmatprep.mubr.bf16.mxu0 0
      %674 = vmatmul.mubr.bf16.gmra.mrb[0].mxu0 %v603
      %v675 = vpop.f32.mrb[0].mxu0
      %v676 = vadd.f32 0.0, %v675
      %v677 = vpop.f32.mrb[0].mxu0
      %v678 = vpop.f32.mrb[0].mxu0
      %v679 = vadd.f32 0.0, %v678
      %v680 = vpop.f32.mrb[0].mxu0
      %681 = vdwg.mxu0
      %v682 = vmul.f32 %v652, 0.35355338
      %v683 = vmul.f32 %v655, 0.35355338
      %v684 = vmul.f32 %v660, 0.35355338
      %v685 = vmul.f32 %v663, 0.35355338
      %v686 = vmul.f32 %v668, 0.35355338
      %v687 = vmul.f32 %v671, 0.35355338
      %v688 = vmul.f32 %v676, 0.35355338
      %v689 = vmul.f32 %v679, 0.35355338
      %v690 = vsel %vm490, %v682, -inf
      %691 = vmax.xlane.f32.xlu0 %v690
      %v692 = vpop.xlane.xlu0 %691
      %v693 = vsel %vm490, %v683, -inf
      %694 = vmax.xlane.f32.xlu0 %v693
      %v695 = vpop.xlane.xlu0 %694
      %v696 = vsel %vm490, %v684, -inf
      %697 = vmax.xlane.f32.xlu0 %v696
      %v698 = vpop.xlane.xlu0 %697
      %v699 = vsel %vm490, %v685, -inf
      %700 = vmax.xlane.f32.xlu0 %v699
      %v701 = vpop.xlane.xlu0 %700
      %v702 = vsel %vm490, %v686, -inf
      %703 = vmax.xlane.f32.xlu0 %v702
      %v704 = vpop.xlane.xlu0 %703
      %v705 = vsel %vm490, %v687, -inf
      %706 = vmax.xlane.f32.xlu0 %v705
      %v707 = vpop.xlane.xlu0 %706
      %v708 = vsel %vm490, %v688, -inf
      %709 = vmax.xlane.f32.xlu0 %v708
      %v710 = vpop.xlane.xlu0 %709
      %v711 = vsel %vm490, %v689, -inf
      %712 = vmax.xlane.f32.xlu0 %v711
      %v713 = vpop.xlane.xlu0 %712
      %v714 = vsub.f32 %v682, %v692
      %v715 = vsub.f32 %v683, %v695
      %v716 = vsub.f32 %v684, %v698
      %v717 = vsub.f32 %v685, %v701
      %v718 = vsub.f32 %v686, %v704
      %v719 = vsub.f32 %v687, %v707
      %v720 = vsub.f32 %v688, %v710
      %v721 = vsub.f32 %v689, %v713
      %v722 = vmul.f32 %v714, 1.442695
      %v723 = vpow.pop %v722
      %v724 = vmul.f32 %v715, 1.442695
      %v725 = vpow.pop %v724
      %v726 = vmul.f32 %v716, 1.442695
      %v727 = vpow.pop %v726
      %v728 = vmul.f32 %v717, 1.442695
      %v729 = vpow.pop %v728
      %v730 = vmul.f32 %v718, 1.442695
      %v731 = vpow.pop %v730
      %v732 = vmul.f32 %v719, 1.442695
      %v733 = vpow.pop %v732
      %v734 = vmul.f32 %v720, 1.442695
      %v735 = vpow.pop %v734
      %v736 = vmul.f32 %v721, 1.442695
      %v737 = vpow.pop %v736
      %v738 = vsel %vm490, %v723, 0.0
      %739 = vadd.xlane.f32.xlu0 %v738
      %v740 = vpop.xlane.xlu0 %739
      %v741 = vsel %vm490, %v725, 0.0
      %742 = vadd.xlane.f32.xlu0 %v741
      %v743 = vpop.xlane.xlu0 %742
      %v744 = vsel %vm490, %v727, 0.0
      %745 = vadd.xlane.f32.xlu0 %v744
      %v746 = vpop.xlane.xlu0 %745
      %v747 = vsel %vm490, %v729, 0.0
      %748 = vadd.xlane.f32.xlu0 %v747
      %v749 = vpop.xlane.xlu0 %748
      %v750 = vsel %vm490, %v731, 0.0
      %751 = vadd.xlane.f32.xlu0 %v750
      %v752 = vpop.xlane.xlu0 %751
      %v753 = vsel %vm490, %v733, 0.0
      %754 = vadd.xlane.f32.xlu0 %v753
      %v755 = vpop.xlane.xlu0 %754
      %v756 = vsel %vm490, %v735, 0.0
      %757 = vadd.xlane.f32.xlu0 %v756
      %v758 = vpop.xlane.xlu0 %757
      %v759 = vsel %vm490, %v737, 0.0
      %760 = vadd.xlane.f32.xlu0 %v759
      %v761 = vpop.xlane.xlu0 %760
      %v762 = vrcp.pop %v740
      %v763 = vrcp.pop %v743
      %v764 = vrcp.pop %v746
      %v765 = vrcp.pop %v749
      %v766 = vrcp.pop %v752
      %v767 = vrcp.pop %v755
      %v768 = vrcp.pop %v758
      %v769 = vrcp.pop %v761
      %v770 = vmul.f32 %v723, %v762
      %v771 = vmul.f32 %v725, %v763
      %v772 = vmul.f32 %v727, %v764
      %v773 = vmul.f32 %v729, %v765
      %v774 = vmul.f32 %v731, %v766
      %v775 = vmul.f32 %v733, %v767
      %v776 = vmul.f32 %v735, %v768
      %v777 = vmul.f32 %v737, %v769
      %v778 = vpack.c.bf16 %v771, %v770
      %v779 = vpack.c.bf16 %v773, %v772
      %v780 = vpack.c.bf16 %v775, %v774
      %v781 = vpack.c.bf16 %v777, %v776
      %v782 = vpack.c.bf16 %v544, %v540
      %v783 = vpack.c.bf16 %v554, %v550
      %v784 = vpack.c.bf16 %v564, %v560
      %v785 = vpack.c.bf16 %v574, %v570
      %v787 = vsel %vm490, %v778, 0
      %v790 = vsel %vm490, %v779, 0
      %v793 = vsel %vm490, %v780, 0
      %v796 = vsel %vm490, %v781, 0
      %798 = vmatprep.subr.bf16.mxu0 0
      %799 = vmatpush1.bf16.msra.mxu0 %v782
      %800 = vmatprep.subr.bf16.mxu0 0
      %801 = vmatpush1.bf16.msra.mxu0 %v783
      %802 = vmatprep.subr.bf16.mxu0 0
      %803 = vmatpush1.bf16.msra.mxu0 %v784
      %804 = vmatprep.subr.bf16.mxu0 0
      %805 = vmatpush1.bf16.msra.mxu0 %v785
      %806 = vmatprep.subr.bf16.mxu0 0
      %807 = vmatpush1.bf16.msra.mxu0 0
      %808 = vmatprep.subr.bf16.mxu0 0
      %809 = vmatpush1.bf16.msra.mxu0 0
      %810 = vmatprep.subr.bf16.mxu0 0
      %811 = vmatpush1.bf16.msra.mxu0 0
      %812 = vmatprep.subr.bf16.mxu0 0
      %813 = vmatpush1.bf16.msra.mxu0 0
      %814 = vmatprep.subr.bf16.mxu0 0
      %815 = vmatpush1.bf16.msra.mxu0 0
      %816 = vmatprep.subr.bf16.mxu0 0
      %817 = vmatpush1.bf16.msra.mxu0 0
      %818 = vmatprep.subr.bf16.mxu0 0
      %819 = vmatpush1.bf16.msra.mxu0 0
      %820 = vmatprep.subr.bf16.mxu0 0
      %821 = vmatpush1.bf16.msra.mxu0 0
      %822 = vmatprep.subr.bf16.mxu0 0
      %823 = vmatpush1.bf16.msra.mxu0 0
      %824 = vmatprep.subr.bf16.mxu0 0
      %825 = vmatpush1.bf16.msra.mxu0 0
      %826 = vmatprep.subr.bf16.mxu0 0
      %827 = vmatpush1.bf16.msra.mxu0 0
      %828 = vmatprep.subr.bf16.mxu0 0
      %829 = vmatpush1.bf16.msra.mxu0 0
      %830 = vmatprep.mubr.bf16.mxu0 0
      %831 = vmatmul.mubr.bf16.gmra.mrb[0].mxu0 %v787
      %v832 = vpop.f32.mrb[0].mxu0
      %v833 = vadd.f32 0.0, %v832
      %v834 = vpop.f32.mrb[0].mxu0
      %v835 = vpop.f32.mrb[0].mxu0
      %v836 = vadd.f32 0.0, %v835
      %v837 = vpop.f32.mrb[0].mxu0
      %838 = vmatprep.mubr.bf16.mxu0 0
      %839 = vmatmul.mubr.bf16.gmra.mrb[0].mxu0 %v790
      %v840 = vpop.f32.mrb[0].mxu0
      %v841 = vadd.f32 0.0, %v840
      %v842 = vpop.f32.mrb[0].mxu0
      %v843 = vpop.f32.mrb[0].mxu0
      %v844 = vadd.f32 0.0, %v843
      %v845 = vpop.f32.mrb[0].mxu0
      %846 = vmatprep.mubr.bf16.mxu0 0
      %847 = vmatmul.mubr.bf16.gmra.mrb[0].mxu0 %v793
      %v848 = vpop.f32.mrb[0].mxu0
      %v849 = vadd.f32 0.0, %v848
      %v850 = vpop.f32.mrb[0].mxu0
      %v851 = vpop.f32.mrb[0].mxu0
      %v852 = vadd.f32 0.0, %v851
      %v853 = vpop.f32.mrb[0].mxu0
      %854 = vmatprep.mubr.bf16.mxu0 0
      %855 = vmatmul.mubr.bf16.gmra.mrb[0].mxu0 %v796
      %v856 = vpop.f32.mrb[0].mxu0
      %v857 = vadd.f32 0.0, %v856
      %v858 = vpop.f32.mrb[0].mxu0
      %v859 = vpop.f32.mrb[0].mxu0
      %v860 = vadd.f32 0.0, %v859
      %v861 = vpop.f32.mrb[0].mxu0
      %862 = vdwg.mxu0
      %863 = vrot.lane.b32.xlu0 %v576, 120
      %v864 = vpop.permute.xlu0 %863
      %865 = vrot.lane.b32.xlu0 %v577, 120
      %v866 = vpop.permute.xlu0 %865
      %867 = vrot.lane.b32.xlu0 %v578, 120
      %v868 = vpop.permute.xlu0 %867
      %869 = vrot.lane.b32.xlu0 %v579, 120
      %v870 = vpop.permute.xlu0 %869
      %871 = vrot.lane.b32.xlu0 %v576, 56
      %v872 = vpop.permute.xlu0 %871
      %873 = vrot.lane.b32.xlu0 %v577, 56
      %v874 = vpop.permute.xlu0 %873
      %875 = vrot.lane.b32.xlu0 %v578, 56
      %v876 = vpop.permute.xlu0 %875
      %877 = vrot.lane.b32.xlu0 %v579, 56
      %v878 = vpop.permute.xlu0 %877
      %v880 = vsel %vm592, %v864, 0
      %v883 = vsel %vm592, %v866, 0
      %v886 = vsel %vm592, %v868, 0
      %v889 = vsel %vm592, %v870, 0
      %v892 = vsel %vm592, %v872, 0
      %v895 = vsel %vm592, %v874, 0
      %v898 = vsel %vm592, %v876, 0
      %v901 = vsel %vm592, %v878, 0
      %903 = vmatprep.subr.bf16.mxu0 0
      %904 = vmatpush1.bf16.xpose.msra.mxu0 %v892
      %905 = vmatprep.subr.bf16.mxu0 0
      %906 = vmatpush1.bf16.xpose.msra.mxu0 %v895
      %907 = vmatprep.subr.bf16.mxu0 0
      %908 = vmatpush1.bf16.xpose.msra.mxu0 %v898
      %909 = vmatprep.subr.bf16.mxu0 0
      %910 = vmatpush1.bf16.xpose.msra.mxu0 %v901
      %911 = vmatprep.subr.bf16.mxu0 0
      %912 = vmatpush1.bf16.xpose.msra.mxu0 0
      %913 = vmatprep.subr.bf16.mxu0 0
      %914 = vmatpush1.bf16.xpose.msra.mxu0 0
      %915 = vmatprep.subr.bf16.mxu0 0
      %916 = vmatpush1.bf16.xpose.msra.mxu0 0
      %917 = vmatprep.subr.bf16.mxu0 0
      %918 = vmatpush1.bf16.xpose.msra.mxu0 0
      %919 = vmatprep.subr.bf16.mxu0 0
      %920 = vmatpush1.bf16.xpose.msra.mxu0 0
      %921 = vmatprep.subr.bf16.mxu0 0
      %922 = vmatpush1.bf16.xpose.msra.mxu0 0
      %923 = vmatprep.subr.bf16.mxu0 0
      %924 = vmatpush1.bf16.xpose.msra.mxu0 0
      %925 = vmatprep.subr.bf16.mxu0 0
      %926 = vmatpush1.bf16.xpose.msra.mxu0 0
      %927 = vmatprep.subr.bf16.mxu0 0
      %928 = vmatpush1.bf16.xpose.msra.mxu0 0
      %929 = vmatprep.subr.bf16.mxu0 0
      %930 = vmatpush1.bf16.xpose.msra.mxu0 0
      %931 = vmatprep.subr.bf16.mxu0 0
      %932 = vmatpush1.bf16.xpose.msra.mxu0 0
      %933 = vmatprep.subr.bf16.mxu0 0
      %934 = vmatpush1.bf16.xpose.msra.mxu0 0
      %935 = vmatprep.mubr.bf16.mxu0 0
      %936 = vmatmul.mubr.bf16.gmra.mrb[0].mxu0 %v880
      %v937 = vpop.f32.mrb[0].mxu0
      %v938 = vadd.f32 0.0, %v937
      %v939 = vpop.f32.mrb[0].mxu0
      %v940 = vpop.f32.mrb[0].mxu0
      %v941 = vadd.f32 0.0, %v940
      %v942 = vpop.f32.mrb[0].mxu0
      %943 = vmatprep.mubr.bf16.mxu0 0
      %944 = vmatmul.mubr.bf16.gmra.mrb[0].mxu0 %v883
      %v945 = vpop.f32.mrb[0].mxu0
      %v946 = vadd.f32 0.0, %v945
      %v947 = vpop.f32.mrb[0].mxu0
      %v948 = vpop.f32.mrb[0].mxu0
      %v949 = vadd.f32 0.0, %v948
      %v950 = vpop.f32.mrb[0].mxu0
      %951 = vmatprep.mubr.bf16.mxu0 0
      %952 = vmatmul.mubr.bf16.gmra.mrb[0].mxu0 %v886
      %v953 = vpop.f32.mrb[0].mxu0
      %v954 = vadd.f32 0.0, %v953
      %v955 = vpop.f32.mrb[0].mxu0
      %v956 = vpop.f32.mrb[0].mxu0
      %v957 = vadd.f32 0.0, %v956
      %v958 = vpop.f32.mrb[0].mxu0
      %959 = vmatprep.mubr.bf16.mxu0 0
      %960 = vmatmul.mubr.bf16.gmra.mrb[0].mxu0 %v889
      %v961 = vpop.f32.mrb[0].mxu0
      %v962 = vadd.f32 0.0, %v961
      %v963 = vpop.f32.mrb[0].mxu0
      %v964 = vpop.f32.mrb[0].mxu0
      %v965 = vadd.f32 0.0, %v964
      %v966 = vpop.f32.mrb[0].mxu0
      %967 = vdwg.mxu0
      %v968 = vmul.f32 %v938, 0.35355338
      %v969 = vmul.f32 %v941, 0.35355338
      %v970 = vmul.f32 %v946, 0.35355338
      %v971 = vmul.f32 %v949, 0.35355338
      %v972 = vmul.f32 %v954, 0.35355338
      %v973 = vmul.f32 %v957, 0.35355338
      %v974 = vmul.f32 %v962, 0.35355338
      %v975 = vmul.f32 %v965, 0.35355338
      %v976 = vsel %vm490, %v968, -inf
      %977 = vmax.xlane.f32.xlu0 %v976
      %v978 = vpop.xlane.xlu0 %977
      %v979 = vsel %vm490, %v969, -inf
      %980 = vmax.xlane.f32.xlu0 %v979
      %v981 = vpop.xlane.xlu0 %980
      %v982 = vsel %vm490, %v970, -inf
      %983 = vmax.xlane.f32.xlu0 %v982
      %v984 = vpop.xlane.xlu0 %983
      %v985 = vsel %vm490, %v971, -inf
      %986 = vmax.xlane.f32.xlu0 %v985
      %v987 = vpop.xlane.xlu0 %986
      %v988 = vsel %vm490, %v972, -inf
      %989 = vmax.xlane.f32.xlu0 %v988
      %v990 = vpop.xlane.xlu0 %989
      %v991 = vsel %vm490, %v973, -inf
      %992 = vmax.xlane.f32.xlu0 %v991
      %v993 = vpop.xlane.xlu0 %992
      %v994 = vsel %vm490, %v974, -inf
      %995 = vmax.xlane.f32.xlu0 %v994
      %v996 = vpop.xlane.xlu0 %995
      %v997 = vsel %vm490, %v975, -inf
      %998 = vmax.xlane.f32.xlu0 %v997
      %v999 = vpop.xlane.xlu0 %998
      %v1000 = vsub.f32 %v968, %v978
      %v1001 = vsub.f32 %v969, %v981
      %v1002 = vsub.f32 %v970, %v984
      %v1003 = vsub.f32 %v971, %v987
      %v1004 = vsub.f32 %v972, %v990
      %v1005 = vsub.f32 %v973, %v993
      %v1006 = vsub.f32 %v974, %v996
      %v1007 = vsub.f32 %v975, %v999
      %v1008 = vmul.f32 %v1000, 1.442695
      %v1009 = vpow.pop %v1008
      %v1010 = vmul.f32 %v1001, 1.442695
      %v1011 = vpow.pop %v1010
      %v1012 = vmul.f32 %v1002, 1.442695
      %v1013 = vpow.pop %v1012
      %v1014 = vmul.f32 %v1003, 1.442695
      %v1015 = vpow.pop %v1014
      %v1016 = vmul.f32 %v1004, 1.442695
      %v1017 = vpow.pop %v1016
      %v1018 = vmul.f32 %v1005, 1.442695
      %v1019 = vpow.pop %v1018
      %v1020 = vmul.f32 %v1006, 1.442695
      %v1021 = vpow.pop %v1020
      %v1022 = vmul.f32 %v1007, 1.442695
      %v1023 = vpow.pop %v1022
      %v1024 = vsel %vm490, %v1009, 0.0
      %1025 = vadd.xlane.f32.xlu0 %v1024
      %v1026 = vpop.xlane.xlu0 %1025
      %v1027 = vsel %vm490, %v1011, 0.0
      %1028 = vadd.xlane.f32.xlu0 %v1027
      %v1029 = vpop.xlane.xlu0 %1028
      %v1030 = vsel %vm490, %v1013, 0.0
      %1031 = vadd.xlane.f32.xlu0 %v1030
      %v1032 = vpop.xlane.xlu0 %1031
      %v1033 = vsel %vm490, %v1015, 0.0
      %1034 = vadd.xlane.f32.xlu0 %v1033
      %v1035 = vpop.xlane.xlu0 %1034
      %v1036 = vsel %vm490, %v1017, 0.0
      %1037 = vadd.xlane.f32.xlu0 %v1036
      %v1038 = vpop.xlane.xlu0 %1037
      %v1039 = vsel %vm490, %v1019, 0.0
      %1040 = vadd.xlane.f32.xlu0 %v1039
      %v1041 = vpop.xlane.xlu0 %1040
      %v1042 = vsel %vm490, %v1021, 0.0
      %1043 = vadd.xlane.f32.xlu0 %v1042
      %v1044 = vpop.xlane.xlu0 %1043
      %v1045 = vsel %vm490, %v1023, 0.0
      %1046 = vadd.xlane.f32.xlu0 %v1045
      %v1047 = vpop.xlane.xlu0 %1046
      %v1048 = vrcp.pop %v1026
      %v1049 = vrcp.pop %v1029
      %v1050 = vrcp.pop %v1032
      %v1051 = vrcp.pop %v1035
      %v1052 = vrcp.pop %v1038
      %v1053 = vrcp.pop %v1041
      %v1054 = vrcp.pop %v1044
      %v1055 = vrcp.pop %v1047
      %v1056 = vmul.f32 %v1009, %v1048
      %v1057 = vmul.f32 %v1011, %v1049
      %v1058 = vmul.f32 %v1013, %v1050
      %v1059 = vmul.f32 %v1015, %v1051
      %v1060 = vmul.f32 %v1017, %v1052
      %v1061 = vmul.f32 %v1019, %v1053
      %v1062 = vmul.f32 %v1021, %v1054
      %v1063 = vmul.f32 %v1023, %v1055
      %v1064 = vpack.c.bf16 %v1057, %v1056
      %v1065 = vpack.c.bf16 %v1059, %v1058
      %v1066 = vpack.c.bf16 %v1061, %v1060
      %v1067 = vpack.c.bf16 %v1063, %v1062
      %1072 = vrot.lane.b32.xlu0 %v782, 120
      %v1073 = vpop.permute.xlu0 %1072
      %1074 = vrot.lane.b32.xlu0 %v783, 120
      %v1075 = vpop.permute.xlu0 %1074
      %1076 = vrot.lane.b32.xlu0 %v784, 120
      %v1077 = vpop.permute.xlu0 %1076
      %1078 = vrot.lane.b32.xlu0 %v785, 120
      %v1079 = vpop.permute.xlu0 %1078
      %v1085 = vsel %vm490, %v1064, 0
      %v1088 = vsel %vm490, %v1065, 0
      %v1091 = vsel %vm490, %v1066, 0
      %v1094 = vsel %vm490, %v1067, 0
      %1096 = vmatprep.subr.bf16.mxu0 0
      %1097 = vmatpush1.bf16.msra.mxu0 %v1073
      %1098 = vmatprep.subr.bf16.mxu0 0
      %1099 = vmatpush1.bf16.msra.mxu0 %v1075
      %1100 = vmatprep.subr.bf16.mxu0 0
      %1101 = vmatpush1.bf16.msra.mxu0 %v1077
      %1102 = vmatprep.subr.bf16.mxu0 0
      %1103 = vmatpush1.bf16.msra.mxu0 %v1079
      %1104 = vmatprep.subr.bf16.mxu0 0
      %1105 = vmatpush1.bf16.msra.mxu0 0
      %1106 = vmatprep.subr.bf16.mxu0 0
      %1107 = vmatpush1.bf16.msra.mxu0 0
      %1108 = vmatprep.subr.bf16.mxu0 0
      %1109 = vmatpush1.bf16.msra.mxu0 0
      %1110 = vmatprep.subr.bf16.mxu0 0
      %1111 = vmatpush1.bf16.msra.mxu0 0
      %1112 = vmatprep.subr.bf16.mxu0 0
      %1113 = vmatpush1.bf16.msra.mxu0 0
      %1114 = vmatprep.subr.bf16.mxu0 0
      %1115 = vmatpush1.bf16.msra.mxu0 0
      %1116 = vmatprep.subr.bf16.mxu0 0
      %1117 = vmatpush1.bf16.msra.mxu0 0
      %1118 = vmatprep.subr.bf16.mxu0 0
      %1119 = vmatpush1.bf16.msra.mxu0 0
      %1120 = vmatprep.subr.bf16.mxu0 0
      %1121 = vmatpush1.bf16.msra.mxu0 0
      %1122 = vmatprep.subr.bf16.mxu0 0
      %1123 = vmatpush1.bf16.msra.mxu0 0
      %1124 = vmatprep.subr.bf16.mxu0 0
      %1125 = vmatpush1.bf16.msra.mxu0 0
      %1126 = vmatprep.subr.bf16.mxu0 0
      %1127 = vmatpush1.bf16.msra.mxu0 0
      %1128 = vmatprep.mubr.bf16.mxu0 0
      %1129 = vmatmul.mubr.bf16.gmra.mrb[0].mxu0 %v1085
      %v1130 = vpop.f32.mrb[0].mxu0
      %v1131 = vadd.f32 0.0, %v1130
      %v1132 = vpop.f32.mrb[0].mxu0
      %v1133 = vpop.f32.mrb[0].mxu0
      %v1134 = vadd.f32 0.0, %v1133
      %v1135 = vpop.f32.mrb[0].mxu0
      %1136 = vmatprep.mubr.bf16.mxu0 0
      %1137 = vmatmul.mubr.bf16.gmra.mrb[0].mxu0 %v1088
      %v1138 = vpop.f32.mrb[0].mxu0
      %v1139 = vadd.f32 0.0, %v1138
      %v1140 = vpop.f32.mrb[0].mxu0
      %v1141 = vpop.f32.mrb[0].mxu0
      %v1142 = vadd.f32 0.0, %v1141
      %v1143 = vpop.f32.mrb[0].mxu0
      %1144 = vmatprep.mubr.bf16.mxu0 0
      %1145 = vmatmul.mubr.bf16.gmra.mrb[0].mxu0 %v1091
      %v1146 = vpop.f32.mrb[0].mxu0
      %v1147 = vadd.f32 0.0, %v1146
      %v1148 = vpop.f32.mrb[0].mxu0
      %v1149 = vpop.f32.mrb[0].mxu0
      %v1150 = vadd.f32 0.0, %v1149
      %v1151 = vpop.f32.mrb[0].mxu0
      %1152 = vmatprep.mubr.bf16.mxu0 0
      %1153 = vmatmul.mubr.bf16.gmra.mrb[0].mxu0 %v1094
      %v1154 = vpop.f32.mrb[0].mxu0
      %v1155 = vadd.f32 0.0, %v1154
      %v1156 = vpop.f32.mrb[0].mxu0
      %v1157 = vpop.f32.mrb[0].mxu0
      %v1158 = vadd.f32 0.0, %v1157
      %v1159 = vpop.f32.mrb[0].mxu0
      %1160 = vdwg.mxu0
      %1161 = vrot.lane.b32.xlu0 %v576, 112
      %v1162 = vpop.permute.xlu0 %1161
      %1163 = vrot.lane.b32.xlu0 %v577, 112
      %v1164 = vpop.permute.xlu0 %1163
      %1165 = vrot.lane.b32.xlu0 %v578, 112
      %v1166 = vpop.permute.xlu0 %1165
      %1167 = vrot.lane.b32.xlu0 %v579, 112
      %v1168 = vpop.permute.xlu0 %1167
      %1169 = vrot.lane.b32.xlu0 %v576, 48
      %v1170 = vpop.permute.xlu0 %1169
      %1171 = vrot.lane.b32.xlu0 %v577, 48
      %v1172 = vpop.permute.xlu0 %1171
      %1173 = vrot.lane.b32.xlu0 %v578, 48
      %v1174 = vpop.permute.xlu0 %1173
      %1175 = vrot.lane.b32.xlu0 %v579, 48
      %v1176 = vpop.permute.xlu0 %1175
      %v1178 = vsel %vm592, %v1162, 0
      %v1181 = vsel %vm592, %v1164, 0
      %v1184 = vsel %vm592, %v1166, 0
      %v1187 = vsel %vm592, %v1168, 0
      %v1190 = vsel %vm592, %v1170, 0
      %v1193 = vsel %vm592, %v1172, 0
      %v1196 = vsel %vm592, %v1174, 0
      %v1199 = vsel %vm592, %v1176, 0
      %1201 = vmatprep.subr.bf16.mxu0 0
      %1202 = vmatpush1.bf16.xpose.msra.mxu0 %v1190
      %1203 = vmatprep.subr.bf16.mxu0 0
      %1204 = vmatpush1.bf16.xpose.msra.mxu0 %v1193
      %1205 = vmatprep.subr.bf16.mxu0 0
      %1206 = vmatpush1.bf16.xpose.msra.mxu0 %v1196
      %1207 = vmatprep.subr.bf16.mxu0 0
      %1208 = vmatpush1.bf16.xpose.msra.mxu0 %v1199
      %1209 = vmatprep.subr.bf16.mxu0 0
      %1210 = vmatpush1.bf16.xpose.msra.mxu0 0
      %1211 = vmatprep.subr.bf16.mxu0 0
      %1212 = vmatpush1.bf16.xpose.msra.mxu0 0
      %1213 = vmatprep.subr.bf16.mxu0 0
      %1214 = vmatpush1.bf16.xpose.msra.mxu0 0
      %1215 = vmatprep.subr.bf16.mxu0 0
      %1216 = vmatpush1.bf16.xpose.msra.mxu0 0
      %1217 = vmatprep.subr.bf16.mxu0 0
      %1218 = vmatpush1.bf16.xpose.msra.mxu0 0
      %1219 = vmatprep.subr.bf16.mxu0 0
      %1220 = vmatpush1.bf16.xpose.msra.mxu0 0
      %1221 = vmatprep.subr.bf16.mxu0 0
      %1222 = vmatpush1.bf16.xpose.msra.mxu0 0
      %1223 = vmatprep.subr.bf16.mxu0 0
      %1224 = vmatpush1.bf16.xpose.msra.mxu0 0
      %1225 = vmatprep.subr.bf16.mxu0 0
      %1226 = vmatpush1.bf16.xpose.msra.mxu0 0
      %1227 = vmatprep.subr.bf16.mxu0 0
      %1228 = vmatpush1.bf16.xpose.msra.mxu0 0
      %1229 = vmatprep.subr.bf16.mxu0 0
      %1230 = vmatpush1.bf16.xpose.msra.mxu0 0
      %1231 = vmatprep.subr.bf16.mxu0 0
      %1232 = vmatpush1.bf16.xpose.msra.mxu0 0
      %1233 = vmatprep.mubr.bf16.mxu0 0
      %1234 = vmatmul.mubr.bf16.gmra.mrb[0].mxu0 %v1178
      %v1235 = vpop.f32.mrb[0].mxu0
      %v1236 = vadd.f32 0.0, %v1235
      %v1237 = vpop.f32.mrb[0].mxu0
      %v1238 = vpop.f32.mrb[0].mxu0
      %v1239 = vadd.f32 0.0, %v1238
      %v1240 = vpop.f32.mrb[0].mxu0
      %1241 = vmatprep.mubr.bf16.mxu0 0
      %1242 = vmatmul.mubr.bf16.gmra.mrb[0].mxu0 %v1181
      %v1243 = vpop.f32.mrb[0].mxu0
      %v1244 = vadd.f32 0.0, %v1243
      %v1245 = vpop.f32.mrb[0].mxu0
      %v1246 = vpop.f32.mrb[0].mxu0
      %v1247 = vadd.f32 0.0, %v1246
      %v1248 = vpop.f32.mrb[0].mxu0
      %1249 = vmatprep.mubr.bf16.mxu0 0
      %1250 = vmatmul.mubr.bf16.gmra.mrb[0].mxu0 %v1184
      %v1251 = vpop.f32.mrb[0].mxu0
      %v1252 = vadd.f32 0.0, %v1251
      %v1253 = vpop.f32.mrb[0].mxu0
      %v1254 = vpop.f32.mrb[0].mxu0
      %v1255 = vadd.f32 0.0, %v1254
      %v1256 = vpop.f32.mrb[0].mxu0
      %1257 = vmatprep.mubr.bf16.mxu0 0
      %1258 = vmatmul.mubr.bf16.gmra.mrb[0].mxu0 %v1187
      %v1259 = vpop.f32.mrb[0].mxu0
      %v1260 = vadd.f32 0.0, %v1259
      %v1261 = vpop.f32.mrb[0].mxu0
      %v1262 = vpop.f32.mrb[0].mxu0
      %v1263 = vadd.f32 0.0, %v1262
      %v1264 = vpop.f32.mrb[0].mxu0
      %1265 = vdwg.mxu0
      %v1266 = vmul.f32 %v1236, 0.35355338
      %v1267 = vmul.f32 %v1239, 0.35355338
      %v1268 = vmul.f32 %v1244, 0.35355338
      %v1269 = vmul.f32 %v1247, 0.35355338
      %v1270 = vmul.f32 %v1252, 0.35355338
      %v1271 = vmul.f32 %v1255, 0.35355338
      %v1272 = vmul.f32 %v1260, 0.35355338
      %v1273 = vmul.f32 %v1263, 0.35355338
      %v1274 = vsel %vm490, %v1266, -inf
      %1275 = vmax.xlane.f32.xlu0 %v1274
      %v1276 = vpop.xlane.xlu0 %1275
      %v1277 = vsel %vm490, %v1267, -inf
      %1278 = vmax.xlane.f32.xlu0 %v1277
      %v1279 = vpop.xlane.xlu0 %1278
      %v1280 = vsel %vm490, %v1268, -inf
      %1281 = vmax.xlane.f32.xlu0 %v1280
      %v1282 = vpop.xlane.xlu0 %1281
      %v1283 = vsel %vm490, %v1269, -inf
      %1284 = vmax.xlane.f32.xlu0 %v1283
      %v1285 = vpop.xlane.xlu0 %1284
      %v1286 = vsel %vm490, %v1270, -inf
      %1287 = vmax.xlane.f32.xlu0 %v1286
      %v1288 = vpop.xlane.xlu0 %1287
      %v1289 = vsel %vm490, %v1271, -inf
      %1290 = vmax.xlane.f32.xlu0 %v1289
      %v1291 = vpop.xlane.xlu0 %1290
      %v1292 = vsel %vm490, %v1272, -inf
      %1293 = vmax.xlane.f32.xlu0 %v1292
      %v1294 = vpop.xlane.xlu0 %1293
      %v1295 = vsel %vm490, %v1273, -inf
      %1296 = vmax.xlane.f32.xlu0 %v1295
      %v1297 = vpop.xlane.xlu0 %1296
      %v1298 = vsub.f32 %v1266, %v1276
      %v1299 = vsub.f32 %v1267, %v1279
      %v1300 = vsub.f32 %v1268, %v1282
      %v1301 = vsub.f32 %v1269, %v1285
      %v1302 = vsub.f32 %v1270, %v1288
      %v1303 = vsub.f32 %v1271, %v1291
      %v1304 = vsub.f32 %v1272, %v1294
      %v1305 = vsub.f32 %v1273, %v1297
      %v1306 = vmul.f32 %v1298, 1.442695
      %v1307 = vpow.pop %v1306
      %v1308 = vmul.f32 %v1299, 1.442695
      %v1309 = vpow.pop %v1308
      %v1310 = vmul.f32 %v1300, 1.442695
      %v1311 = vpow.pop %v1310
      %v1312 = vmul.f32 %v1301, 1.442695
      %v1313 = vpow.pop %v1312
      %v1314 = vmul.f32 %v1302, 1.442695
      %v1315 = vpow.pop %v1314
      %v1316 = vmul.f32 %v1303, 1.442695
      %v1317 = vpow.pop %v1316
      %v1318 = vmul.f32 %v1304, 1.442695
      %v1319 = vpow.pop %v1318
      %v1320 = vmul.f32 %v1305, 1.442695
      %v1321 = vpow.pop %v1320
      %v1322 = vsel %vm490, %v1307, 0.0
      %1323 = vadd.xlane.f32.xlu0 %v1322
      %v1324 = vpop.xlane.xlu0 %1323
      %v1325 = vsel %vm490, %v1309, 0.0
      %1326 = vadd.xlane.f32.xlu0 %v1325
      %v1327 = vpop.xlane.xlu0 %1326
      %v1328 = vsel %vm490, %v1311, 0.0
      %1329 = vadd.xlane.f32.xlu0 %v1328
      %v1330 = vpop.xlane.xlu0 %1329
      %v1331 = vsel %vm490, %v1313, 0.0
      %1332 = vadd.xlane.f32.xlu0 %v1331
      %v1333 = vpop.xlane.xlu0 %1332
      %v1334 = vsel %vm490, %v1315, 0.0
      %1335 = vadd.xlane.f32.xlu0 %v1334
      %v1336 = vpop.xlane.xlu0 %1335
      %v1337 = vsel %vm490, %v1317, 0.0
      %1338 = vadd.xlane.f32.xlu0 %v1337
      %v1339 = vpop.xlane.xlu0 %1338
      %v1340 = vsel %vm490, %v1319, 0.0
      %1341 = vadd.xlane.f32.xlu0 %v1340
      %v1342 = vpop.xlane.xlu0 %1341
      %v1343 = vsel %vm490, %v1321, 0.0
      %1344 = vadd.xlane.f32.xlu0 %v1343
      %v1345 = vpop.xlane.xlu0 %1344
      %v1346 = vrcp.pop %v1324
      %v1347 = vrcp.pop %v1327
      %v1348 = vrcp.pop %v1330
      %v1349 = vrcp.pop %v1333
      %v1350 = vrcp.pop %v1336
      %v1351 = vrcp.pop %v1339
      %v1352 = vrcp.pop %v1342
      %v1353 = vrcp.pop %v1345
      %v1354 = vmul.f32 %v1307, %v1346
      %v1355 = vmul.f32 %v1309, %v1347
      %v1356 = vmul.f32 %v1311, %v1348
      %v1357 = vmul.f32 %v1313, %v1349
      %v1358 = vmul.f32 %v1315, %v1350
      %v1359 = vmul.f32 %v1317, %v1351
      %v1360 = vmul.f32 %v1319, %v1352
      %v1361 = vmul.f32 %v1321, %v1353
      %v1362 = vpack.c.bf16 %v1355, %v1354
      %v1363 = vpack.c.bf16 %v1357, %v1356
      %v1364 = vpack.c.bf16 %v1359, %v1358
      %v1365 = vpack.c.bf16 %v1361, %v1360
      %1366 = vrot.lane.b32.xlu0 %v782, 112
      %v1367 = vpop.permute.xlu0 %1366
      %1368 = vrot.lane.b32.xlu0 %v783, 112
      %v1369 = vpop.permute.xlu0 %1368
      %1370 = vrot.lane.b32.xlu0 %v784, 112
      %v1371 = vpop.permute.xlu0 %1370
      %1372 = vrot.lane.b32.xlu0 %v785, 112
      %v1373 = vpop.permute.xlu0 %1372
      %v1379 = vsel %vm490, %v1362, 0
      %v1382 = vsel %vm490, %v1363, 0
      %v1385 = vsel %vm490, %v1364, 0
      %v1388 = vsel %vm490, %v1365, 0
      %1390 = vmatprep.subr.bf16.mxu0 0
      %1391 = vmatpush1.bf16.msra.mxu0 %v1367
      %1392 = vmatprep.subr.bf16.mxu0 0
      %1393 = vmatpush1.bf16.msra.mxu0 %v1369
      %1394 = vmatprep.subr.bf16.mxu0 0
      %1395 = vmatpush1.bf16.msra.mxu0 %v1371
      %1396 = vmatprep.subr.bf16.mxu0 0
      %1397 = vmatpush1.bf16.msra.mxu0 %v1373
      %1398 = vmatprep.subr.bf16.mxu0 0
      %1399 = vmatpush1.bf16.msra.mxu0 0
      %1400 = vmatprep.subr.bf16.mxu0 0
      %1401 = vmatpush1.bf16.msra.mxu0 0
      %1402 = vmatprep.subr.bf16.mxu0 0
      %1403 = vmatpush1.bf16.msra.mxu0 0
      %1404 = vmatprep.subr.bf16.mxu0 0
      %1405 = vmatpush1.bf16.msra.mxu0 0
      %1406 = vmatprep.subr.bf16.mxu0 0
      %1407 = vmatpush1.bf16.msra.mxu0 0
      %1408 = vmatprep.subr.bf16.mxu0 0
      %1409 = vmatpush1.bf16.msra.mxu0 0
      %1410 = vmatprep.subr.bf16.mxu0 0
      %1411 = vmatpush1.bf16.msra.mxu0 0
      %1412 = vmatprep.subr.bf16.mxu0 0
      %1413 = vmatpush1.bf16.msra.mxu0 0
      %1414 = vmatprep.subr.bf16.mxu0 0
      %1415 = vmatpush1.bf16.msra.mxu0 0
      %1416 = vmatprep.subr.bf16.mxu0 0
      %1417 = vmatpush1.bf16.msra.mxu0 0
      %1418 = vmatprep.subr.bf16.mxu0 0
      %1419 = vmatpush1.bf16.msra.mxu0 0
      %1420 = vmatprep.subr.bf16.mxu0 0
      %1421 = vmatpush1.bf16.msra.mxu0 0
      %1422 = vmatprep.mubr.bf16.mxu0 0
      %1423 = vmatmul.mubr.bf16.gmra.mrb[0].mxu0 %v1379
      %v1424 = vpop.f32.mrb[0].mxu0
      %v1425 = vadd.f32 0.0, %v1424
      %v1426 = vpop.f32.mrb[0].mxu0
      %v1427 = vpop.f32.mrb[0].mxu0
      %v1428 = vadd.f32 0.0, %v1427
      %v1429 = vpop.f32.mrb[0].mxu0
      %1430 = vmatprep.mubr.bf16.mxu0 0
      %1431 = vmatmul.mubr.bf16.gmra.mrb[0].mxu0 %v1382
      %v1432 = vpop.f32.mrb[0].mxu0
      %v1433 = vadd.f32 0.0, %v1432
      %v1434 = vpop.f32.mrb[0].mxu0
      %v1435 = vpop.f32.mrb[0].mxu0
      %v1436 = vadd.f32 0.0, %v1435
      %v1437 = vpop.f32.mrb[0].mxu0
      %1438 = vmatprep.mubr.bf16.mxu0 0
      %1439 = vmatmul.mubr.bf16.gmra.mrb[0].mxu0 %v1385
      %v1440 = vpop.f32.mrb[0].mxu0
      %v1441 = vadd.f32 0.0, %v1440
      %v1442 = vpop.f32.mrb[0].mxu0
      %v1443 = vpop.f32.mrb[0].mxu0
      %v1444 = vadd.f32 0.0, %v1443
      %v1445 = vpop.f32.mrb[0].mxu0
      %1446 = vmatprep.mubr.bf16.mxu0 0
      %1447 = vmatmul.mubr.bf16.gmra.mrb[0].mxu0 %v1388
      %v1448 = vpop.f32.mrb[0].mxu0
      %v1449 = vadd.f32 0.0, %v1448
      %v1450 = vpop.f32.mrb[0].mxu0
      %v1451 = vpop.f32.mrb[0].mxu0
      %v1452 = vadd.f32 0.0, %v1451
      %v1453 = vpop.f32.mrb[0].mxu0
      %1454 = vdwg.mxu0
      %1455 = vrot.lane.b32.xlu0 %v576, 104
      %v1456 = vpop.permute.xlu0 %1455
      %1457 = vrot.lane.b32.xlu0 %v577, 104
      %v1458 = vpop.permute.xlu0 %1457
      %1459 = vrot.lane.b32.xlu0 %v578, 104
      %v1460 = vpop.permute.xlu0 %1459
      %1461 = vrot.lane.b32.xlu0 %v579, 104
      %v1462 = vpop.permute.xlu0 %1461
      %1463 = vrot.lane.b32.xlu0 %v576, 40
      %v1464 = vpop.permute.xlu0 %1463
      %1465 = vrot.lane.b32.xlu0 %v577, 40
      %v1466 = vpop.permute.xlu0 %1465
      %1467 = vrot.lane.b32.xlu0 %v578, 40
      %v1468 = vpop.permute.xlu0 %1467
      %1469 = vrot.lane.b32.xlu0 %v579, 40
      %v1470 = vpop.permute.xlu0 %1469
      %v1472 = vsel %vm592, %v1456, 0
      %v1475 = vsel %vm592, %v1458, 0
      %v1478 = vsel %vm592, %v1460, 0
      %v1481 = vsel %vm592, %v1462, 0
      %v1484 = vsel %vm592, %v1464, 0
      %v1487 = vsel %vm592, %v1466, 0
      %v1490 = vsel %vm592, %v1468, 0
      %v1493 = vsel %vm592, %v1470, 0
      %1495 = vmatprep.subr.bf16.mxu0 0
      %1496 = vmatpush1.bf16.xpose.msra.mxu0 %v1484
      %1497 = vmatprep.subr.bf16.mxu0 0
      %1498 = vmatpush1.bf16.xpose.msra.mxu0 %v1487
      %1499 = vmatprep.subr.bf16.mxu0 0
      %1500 = vmatpush1.bf16.xpose.msra.mxu0 %v1490
      %1501 = vmatprep.subr.bf16.mxu0 0
      %1502 = vmatpush1.bf16.xpose.msra.mxu0 %v1493
      %1503 = vmatprep.subr.bf16.mxu0 0
      %1504 = vmatpush1.bf16.xpose.msra.mxu0 0
      %1505 = vmatprep.subr.bf16.mxu0 0
      %1506 = vmatpush1.bf16.xpose.msra.mxu0 0
      %1507 = vmatprep.subr.bf16.mxu0 0
      %1508 = vmatpush1.bf16.xpose.msra.mxu0 0
      %1509 = vmatprep.subr.bf16.mxu0 0
      %1510 = vmatpush1.bf16.xpose.msra.mxu0 0
      %1511 = vmatprep.subr.bf16.mxu0 0
      %1512 = vmatpush1.bf16.xpose.msra.mxu0 0
      %1513 = vmatprep.subr.bf16.mxu0 0
      %1514 = vmatpush1.bf16.xpose.msra.mxu0 0
      %1515 = vmatprep.subr.bf16.mxu0 0
      %1516 = vmatpush1.bf16.xpose.msra.mxu0 0
      %1517 = vmatprep.subr.bf16.mxu0 0
      %1518 = vmatpush1.bf16.xpose.msra.mxu0 0
      %1519 = vmatprep.subr.bf16.mxu0 0
      %1520 = vmatpush1.bf16.xpose.msra.mxu0 0
      %1521 = vmatprep.subr.bf16.mxu0 0
      %1522 = vmatpush1.bf16.xpose.msra.mxu0 0
      %1523 = vmatprep.subr.bf16.mxu0 0
      %1524 = vmatpush1.bf16.xpose.msra.mxu0 0
      %1525 = vmatprep.subr.bf16.mxu0 0
      %1526 = vmatpush1.bf16.xpose.msra.mxu0 0
      %1527 = vmatprep.mubr.bf16.mxu0 0
      %1528 = vmatmul.mubr.bf16.gmra.mrb[0].mxu0 %v1472
      %v1529 = vpop.f32.mrb[0].mxu0
      %v1530 = vadd.f32 0.0, %v1529
      %v1531 = vpop.f32.mrb[0].mxu0
      %v1532 = vpop.f32.mrb[0].mxu0
      %v1533 = vadd.f32 0.0, %v1532
      %v1534 = vpop.f32.mrb[0].mxu0
      %1535 = vmatprep.mubr.bf16.mxu0 0
      %1536 = vmatmul.mubr.bf16.gmra.mrb[0].mxu0 %v1475
      %v1537 = vpop.f32.mrb[0].mxu0
      %v1538 = vadd.f32 0.0, %v1537
      %v1539 = vpop.f32.mrb[0].mxu0
      %v1540 = vpop.f32.mrb[0].mxu0
      %v1541 = vadd.f32 0.0, %v1540
      %v1542 = vpop.f32.mrb[0].mxu0
      %1543 = vmatprep.mubr.bf16.mxu0 0
      %1544 = vmatmul.mubr.bf16.gmra.mrb[0].mxu0 %v1478
      %v1545 = vpop.f32.mrb[0].mxu0
      %v1546 = vadd.f32 0.0, %v1545
      %v1547 = vpop.f32.mrb[0].mxu0
      %v1548 = vpop.f32.mrb[0].mxu0
      %v1549 = vadd.f32 0.0, %v1548
      %v1550 = vpop.f32.mrb[0].mxu0
      %1551 = vmatprep.mubr.bf16.mxu0 0
      %1552 = vmatmul.mubr.bf16.gmra.mrb[0].mxu0 %v1481
      %v1553 = vpop.f32.mrb[0].mxu0
      %v1554 = vadd.f32 0.0, %v1553
      %v1555 = vpop.f32.mrb[0].mxu0
      %v1556 = vpop.f32.mrb[0].mxu0
      %v1557 = vadd.f32 0.0, %v1556
      %v1558 = vpop.f32.mrb[0].mxu0
      %1559 = vdwg.mxu0
      %v1560 = vmul.f32 %v1530, 0.35355338
      %v1561 = vmul.f32 %v1533, 0.35355338
      %v1562 = vmul.f32 %v1538, 0.35355338
      %v1563 = vmul.f32 %v1541, 0.35355338
      %v1564 = vmul.f32 %v1546, 0.35355338
      %v1565 = vmul.f32 %v1549, 0.35355338
      %v1566 = vmul.f32 %v1554, 0.35355338
      %v1567 = vmul.f32 %v1557, 0.35355338
      %v1568 = vsel %vm490, %v1560, -inf
      %1569 = vmax.xlane.f32.xlu0 %v1568
      %v1570 = vpop.xlane.xlu0 %1569
      %v1571 = vsel %vm490, %v1561, -inf
      %1572 = vmax.xlane.f32.xlu0 %v1571
      %v1573 = vpop.xlane.xlu0 %1572
      %v1574 = vsel %vm490, %v1562, -inf
      %1575 = vmax.xlane.f32.xlu0 %v1574
      %v1576 = vpop.xlane.xlu0 %1575
      %v1577 = vsel %vm490, %v1563, -inf
      %1578 = vmax.xlane.f32.xlu0 %v1577
      %v1579 = vpop.xlane.xlu0 %1578
      %v1580 = vsel %vm490, %v1564, -inf
      %1581 = vmax.xlane.f32.xlu0 %v1580
      %v1582 = vpop.xlane.xlu0 %1581
      %v1583 = vsel %vm490, %v1565, -inf
      %1584 = vmax.xlane.f32.xlu0 %v1583
      %v1585 = vpop.xlane.xlu0 %1584
      %v1586 = vsel %vm490, %v1566, -inf
      %1587 = vmax.xlane.f32.xlu0 %v1586
      %v1588 = vpop.xlane.xlu0 %1587
      %v1589 = vsel %vm490, %v1567, -inf
      %1590 = vmax.xlane.f32.xlu0 %v1589
      %v1591 = vpop.xlane.xlu0 %1590
      %v1592 = vsub.f32 %v1560, %v1570
      %v1593 = vsub.f32 %v1561, %v1573
      %v1594 = vsub.f32 %v1562, %v1576
      %v1595 = vsub.f32 %v1563, %v1579
      %v1596 = vsub.f32 %v1564, %v1582
      %v1597 = vsub.f32 %v1565, %v1585
      %v1598 = vsub.f32 %v1566, %v1588
      %v1599 = vsub.f32 %v1567, %v1591
      %v1600 = vmul.f32 %v1592, 1.442695
      %v1601 = vpow.pop %v1600
      %v1602 = vmul.f32 %v1593, 1.442695
      %v1603 = vpow.pop %v1602
      %v1604 = vmul.f32 %v1594, 1.442695
      %v1605 = vpow.pop %v1604
      %v1606 = vmul.f32 %v1595, 1.442695
      %v1607 = vpow.pop %v1606
      %v1608 = vmul.f32 %v1596, 1.442695
      %v1609 = vpow.pop %v1608
      %v1610 = vmul.f32 %v1597, 1.442695
      %v1611 = vpow.pop %v1610
      %v1612 = vmul.f32 %v1598, 1.442695
      %v1613 = vpow.pop %v1612
      %v1614 = vmul.f32 %v1599, 1.442695
      %v1615 = vpow.pop %v1614
      %v1616 = vsel %vm490, %v1601, 0.0
      %1617 = vadd.xlane.f32.xlu0 %v1616
      %v1618 = vpop.xlane.xlu0 %1617
      %v1619 = vsel %vm490, %v1603, 0.0
      %1620 = vadd.xlane.f32.xlu0 %v1619
      %v1621 = vpop.xlane.xlu0 %1620
      %v1622 = vsel %vm490, %v1605, 0.0
      %1623 = vadd.xlane.f32.xlu0 %v1622
      %v1624 = vpop.xlane.xlu0 %1623
      %v1625 = vsel %vm490, %v1607, 0.0
      %1626 = vadd.xlane.f32.xlu0 %v1625
      %v1627 = vpop.xlane.xlu0 %1626
      %v1628 = vsel %vm490, %v1609, 0.0
      %1629 = vadd.xlane.f32.xlu0 %v1628
      %v1630 = vpop.xlane.xlu0 %1629
      %v1631 = vsel %vm490, %v1611, 0.0
      %1632 = vadd.xlane.f32.xlu0 %v1631
      %v1633 = vpop.xlane.xlu0 %1632
      %v1634 = vsel %vm490, %v1613, 0.0
      %1635 = vadd.xlane.f32.xlu0 %v1634
      %v1636 = vpop.xlane.xlu0 %1635
      %v1637 = vsel %vm490, %v1615, 0.0
      %1638 = vadd.xlane.f32.xlu0 %v1637
      %v1639 = vpop.xlane.xlu0 %1638
      %v1640 = vrcp.pop %v1618
      %v1641 = vrcp.pop %v1621
      %v1642 = vrcp.pop %v1624
      %v1643 = vrcp.pop %v1627
      %v1644 = vrcp.pop %v1630
      %v1645 = vrcp.pop %v1633
      %v1646 = vrcp.pop %v1636
      %v1647 = vrcp.pop %v1639
      %v1648 = vmul.f32 %v1601, %v1640
      %v1649 = vmul.f32 %v1603, %v1641
      %v1650 = vmul.f32 %v1605, %v1642
      %v1651 = vmul.f32 %v1607, %v1643
      %v1652 = vmul.f32 %v1609, %v1644
      %v1653 = vmul.f32 %v1611, %v1645
      %v1654 = vmul.f32 %v1613, %v1646
      %v1655 = vmul.f32 %v1615, %v1647
      %v1656 = vpack.c.bf16 %v1649, %v1648
      %v1657 = vpack.c.bf16 %v1651, %v1650
      %v1658 = vpack.c.bf16 %v1653, %v1652
      %v1659 = vpack.c.bf16 %v1655, %v1654
      %1660 = vrot.lane.b32.xlu0 %v782, 104
      %v1661 = vpop.permute.xlu0 %1660
      %1662 = vrot.lane.b32.xlu0 %v783, 104
      %v1663 = vpop.permute.xlu0 %1662
      %1664 = vrot.lane.b32.xlu0 %v784, 104
      %v1665 = vpop.permute.xlu0 %1664
      %1666 = vrot.lane.b32.xlu0 %v785, 104
      %v1667 = vpop.permute.xlu0 %1666
      %v1673 = vsel %vm490, %v1656, 0
      %v1676 = vsel %vm490, %v1657, 0
      %v1679 = vsel %vm490, %v1658, 0
      %v1682 = vsel %vm490, %v1659, 0
      %1684 = vmatprep.subr.bf16.mxu0 0
      %1685 = vmatpush1.bf16.msra.mxu0 %v1661
      %1686 = vmatprep.subr.bf16.mxu0 0
      %1687 = vmatpush1.bf16.msra.mxu0 %v1663
      %1688 = vmatprep.subr.bf16.mxu0 0
      %1689 = vmatpush1.bf16.msra.mxu0 %v1665
      %1690 = vmatprep.subr.bf16.mxu0 0
      %1691 = vmatpush1.bf16.msra.mxu0 %v1667
      %1692 = vmatprep.subr.bf16.mxu0 0
      %1693 = vmatpush1.bf16.msra.mxu0 0
      %1694 = vmatprep.subr.bf16.mxu0 0
      %1695 = vmatpush1.bf16.msra.mxu0 0
      %1696 = vmatprep.subr.bf16.mxu0 0
      %1697 = vmatpush1.bf16.msra.mxu0 0
      %1698 = vmatprep.subr.bf16.mxu0 0
      %1699 = vmatpush1.bf16.msra.mxu0 0
      %1700 = vmatprep.subr.bf16.mxu0 0
      %1701 = vmatpush1.bf16.msra.mxu0 0
      %1702 = vmatprep.subr.bf16.mxu0 0
      %1703 = vmatpush1.bf16.msra.mxu0 0
      %1704 = vmatprep.subr.bf16.mxu0 0
      %1705 = vmatpush1.bf16.msra.mxu0 0
      %1706 = vmatprep.subr.bf16.mxu0 0
      %1707 = vmatpush1.bf16.msra.mxu0 0
      %1708 = vmatprep.subr.bf16.mxu0 0
      %1709 = vmatpush1.bf16.msra.mxu0 0
      %1710 = vmatprep.subr.bf16.mxu0 0
      %1711 = vmatpush1.bf16.msra.mxu0 0
      %1712 = vmatprep.subr.bf16.mxu0 0
      %1713 = vmatpush1.bf16.msra.mxu0 0
      %1714 = vmatprep.subr.bf16.mxu0 0
      %1715 = vmatpush1.bf16.msra.mxu0 0
      %1716 = vmatprep.mubr.bf16.mxu0 0
      %1717 = vmatmul.mubr.bf16.gmra.mrb[0].mxu0 %v1673
      %v1718 = vpop.f32.mrb[0].mxu0
      %v1719 = vadd.f32 0.0, %v1718
      %v1720 = vpop.f32.mrb[0].mxu0
      %v1721 = vpop.f32.mrb[0].mxu0
      %v1722 = vadd.f32 0.0, %v1721
      %v1723 = vpop.f32.mrb[0].mxu0
      %1724 = vmatprep.mubr.bf16.mxu0 0
      %1725 = vmatmul.mubr.bf16.gmra.mrb[0].mxu0 %v1676
      %v1726 = vpop.f32.mrb[0].mxu0
      %v1727 = vadd.f32 0.0, %v1726
      %v1728 = vpop.f32.mrb[0].mxu0
      %v1729 = vpop.f32.mrb[0].mxu0
      %v1730 = vadd.f32 0.0, %v1729
      %v1731 = vpop.f32.mrb[0].mxu0
      %1732 = vmatprep.mubr.bf16.mxu0 0
      %1733 = vmatmul.mubr.bf16.gmra.mrb[0].mxu0 %v1679
      %v1734 = vpop.f32.mrb[0].mxu0
      %v1735 = vadd.f32 0.0, %v1734
      %v1736 = vpop.f32.mrb[0].mxu0
      %v1737 = vpop.f32.mrb[0].mxu0
      %v1738 = vadd.f32 0.0, %v1737
      %v1739 = vpop.f32.mrb[0].mxu0
      %1740 = vmatprep.mubr.bf16.mxu0 0
      %1741 = vmatmul.mubr.bf16.gmra.mrb[0].mxu0 %v1682
      %v1742 = vpop.f32.mrb[0].mxu0
      %v1743 = vadd.f32 0.0, %v1742
      %v1744 = vpop.f32.mrb[0].mxu0
      %v1745 = vpop.f32.mrb[0].mxu0
      %v1746 = vadd.f32 0.0, %v1745
      %v1747 = vpop.f32.mrb[0].mxu0
      %1748 = vdwg.mxu0
      %1749 = vrot.lane.b32.xlu0 %v576, 96
      %v1750 = vpop.permute.xlu0 %1749
      %1751 = vrot.lane.b32.xlu0 %v577, 96
      %v1752 = vpop.permute.xlu0 %1751
      %1753 = vrot.lane.b32.xlu0 %v578, 96
      %v1754 = vpop.permute.xlu0 %1753
      %1755 = vrot.lane.b32.xlu0 %v579, 96
      %v1756 = vpop.permute.xlu0 %1755
      %1757 = vrot.lane.b32.xlu0 %v576, 32
      %v1758 = vpop.permute.xlu0 %1757
      %1759 = vrot.lane.b32.xlu0 %v577, 32
      %v1760 = vpop.permute.xlu0 %1759
      %1761 = vrot.lane.b32.xlu0 %v578, 32
      %v1762 = vpop.permute.xlu0 %1761
      %1763 = vrot.lane.b32.xlu0 %v579, 32
      %v1764 = vpop.permute.xlu0 %1763
      %v1766 = vsel %vm592, %v1750, 0
      %v1769 = vsel %vm592, %v1752, 0
      %v1772 = vsel %vm592, %v1754, 0
      %v1775 = vsel %vm592, %v1756, 0
      %v1778 = vsel %vm592, %v1758, 0
      %v1781 = vsel %vm592, %v1760, 0
      %v1784 = vsel %vm592, %v1762, 0
      %v1787 = vsel %vm592, %v1764, 0
      %1789 = vmatprep.subr.bf16.mxu0 0
      %1790 = vmatpush1.bf16.xpose.msra.mxu0 %v1778
      %1791 = vmatprep.subr.bf16.mxu0 0
      %1792 = vmatpush1.bf16.xpose.msra.mxu0 %v1781
      %1793 = vmatprep.subr.bf16.mxu0 0
      %1794 = vmatpush1.bf16.xpose.msra.mxu0 %v1784
      %1795 = vmatprep.subr.bf16.mxu0 0
      %1796 = vmatpush1.bf16.xpose.msra.mxu0 %v1787
      %1797 = vmatprep.subr.bf16.mxu0 0
      %1798 = vmatpush1.bf16.xpose.msra.mxu0 0
      %1799 = vmatprep.subr.bf16.mxu0 0
      %1800 = vmatpush1.bf16.xpose.msra.mxu0 0
      %1801 = vmatprep.subr.bf16.mxu0 0
      %1802 = vmatpush1.bf16.xpose.msra.mxu0 0
      %1803 = vmatprep.subr.bf16.mxu0 0
      %1804 = vmatpush1.bf16.xpose.msra.mxu0 0
      %1805 = vmatprep.subr.bf16.mxu0 0
      %1806 = vmatpush1.bf16.xpose.msra.mxu0 0
      %1807 = vmatprep.subr.bf16.mxu0 0
      %1808 = vmatpush1.bf16.xpose.msra.mxu0 0
      %1809 = vmatprep.subr.bf16.mxu0 0
      %1810 = vmatpush1.bf16.xpose.msra.mxu0 0
      %1811 = vmatprep.subr.bf16.mxu0 0
      %1812 = vmatpush1.bf16.xpose.msra.mxu0 0
      %1813 = vmatprep.subr.bf16.mxu0 0
      %1814 = vmatpush1.bf16.xpose.msra.mxu0 0
      %1815 = vmatprep.subr.bf16.mxu0 0
      %1816 = vmatpush1.bf16.xpose.msra.mxu0 0
      %1817 = vmatprep.subr.bf16.mxu0 0
      %1818 = vmatpush1.bf16.xpose.msra.mxu0 0
      %1819 = vmatprep.subr.bf16.mxu0 0
      %1820 = vmatpush1.bf16.xpose.msra.mxu0 0
      %1821 = vmatprep.mubr.bf16.mxu0 0
      %1822 = vmatmul.mubr.bf16.gmra.mrb[0].mxu0 %v1766
      %v1823 = vpop.f32.mrb[0].mxu0
      %v1824 = vadd.f32 0.0, %v1823
      %v1825 = vpop.f32.mrb[0].mxu0
      %v1826 = vpop.f32.mrb[0].mxu0
      %v1827 = vadd.f32 0.0, %v1826
      %v1828 = vpop.f32.mrb[0].mxu0
      %1829 = vmatprep.mubr.bf16.mxu0 0
      %1830 = vmatmul.mubr.bf16.gmra.mrb[0].mxu0 %v1769
      %v1831 = vpop.f32.mrb[0].mxu0
      %v1832 = vadd.f32 0.0, %v1831
      %v1833 = vpop.f32.mrb[0].mxu0
      %v1834 = vpop.f32.mrb[0].mxu0
      %v1835 = vadd.f32 0.0, %v1834
      %v1836 = vpop.f32.mrb[0].mxu0
      %1837 = vmatprep.mubr.bf16.mxu0 0
      %1838 = vmatmul.mubr.bf16.gmra.mrb[0].mxu0 %v1772
      %v1839 = vpop.f32.mrb[0].mxu0
      %v1840 = vadd.f32 0.0, %v1839
      %v1841 = vpop.f32.mrb[0].mxu0
      %v1842 = vpop.f32.mrb[0].mxu0
      %v1843 = vadd.f32 0.0, %v1842
      %v1844 = vpop.f32.mrb[0].mxu0
      %1845 = vmatprep.mubr.bf16.mxu0 0
      %1846 = vmatmul.mubr.bf16.gmra.mrb[0].mxu0 %v1775
      %v1847 = vpop.f32.mrb[0].mxu0
      %v1848 = vadd.f32 0.0, %v1847
      %v1849 = vpop.f32.mrb[0].mxu0
      %v1850 = vpop.f32.mrb[0].mxu0
      %v1851 = vadd.f32 0.0, %v1850
      %v1852 = vpop.f32.mrb[0].mxu0
      %1853 = vdwg.mxu0
      %v1854 = vmul.f32 %v1824, 0.35355338
      %v1855 = vmul.f32 %v1827, 0.35355338
      %v1856 = vmul.f32 %v1832, 0.35355338
      %v1857 = vmul.f32 %v1835, 0.35355338
      %v1858 = vmul.f32 %v1840, 0.35355338
      %v1859 = vmul.f32 %v1843, 0.35355338
      %v1860 = vmul.f32 %v1848, 0.35355338
      %v1861 = vmul.f32 %v1851, 0.35355338
      %v1862 = vsel %vm490, %v1854, -inf
      %1863 = vmax.xlane.f32.xlu0 %v1862
      %v1864 = vpop.xlane.xlu0 %1863
      %v1865 = vsel %vm490, %v1855, -inf
      %1866 = vmax.xlane.f32.xlu0 %v1865
      %v1867 = vpop.xlane.xlu0 %1866
      %v1868 = vsel %vm490, %v1856, -inf
      %1869 = vmax.xlane.f32.xlu0 %v1868
      %v1870 = vpop.xlane.xlu0 %1869
      %v1871 = vsel %vm490, %v1857, -inf
      %1872 = vmax.xlane.f32.xlu0 %v1871
      %v1873 = vpop.xlane.xlu0 %1872
      %v1874 = vsel %vm490, %v1858, -inf
      %1875 = vmax.xlane.f32.xlu0 %v1874
      %v1876 = vpop.xlane.xlu0 %1875
      %v1877 = vsel %vm490, %v1859, -inf
      %1878 = vmax.xlane.f32.xlu0 %v1877
      %v1879 = vpop.xlane.xlu0 %1878
      %v1880 = vsel %vm490, %v1860, -inf
      %1881 = vmax.xlane.f32.xlu0 %v1880
      %v1882 = vpop.xlane.xlu0 %1881
      %v1883 = vsel %vm490, %v1861, -inf
      %1884 = vmax.xlane.f32.xlu0 %v1883
      %v1885 = vpop.xlane.xlu0 %1884
      %v1886 = vsub.f32 %v1854, %v1864
      %v1887 = vsub.f32 %v1855, %v1867
      %v1888 = vsub.f32 %v1856, %v1870
      %v1889 = vsub.f32 %v1857, %v1873
      %v1890 = vsub.f32 %v1858, %v1876
      %v1891 = vsub.f32 %v1859, %v1879
      %v1892 = vsub.f32 %v1860, %v1882
      %v1893 = vsub.f32 %v1861, %v1885
      %v1894 = vmul.f32 %v1886, 1.442695
      %v1895 = vpow.pop %v1894
      %v1896 = vmul.f32 %v1887, 1.442695
      %v1897 = vpow.pop %v1896
      %v1898 = vmul.f32 %v1888, 1.442695
      %v1899 = vpow.pop %v1898
      %v1900 = vmul.f32 %v1889, 1.442695
      %v1901 = vpow.pop %v1900
      %v1902 = vmul.f32 %v1890, 1.442695
      %v1903 = vpow.pop %v1902
      %v1904 = vmul.f32 %v1891, 1.442695
      %v1905 = vpow.pop %v1904
      %v1906 = vmul.f32 %v1892, 1.442695
      %v1907 = vpow.pop %v1906
      %v1908 = vmul.f32 %v1893, 1.442695
      %v1909 = vpow.pop %v1908
      %v1910 = vsel %vm490, %v1895, 0.0
      %1911 = vadd.xlane.f32.xlu0 %v1910
      %v1912 = vpop.xlane.xlu0 %1911
      %v1913 = vsel %vm490, %v1897, 0.0
      %1914 = vadd.xlane.f32.xlu0 %v1913
      %v1915 = vpop.xlane.xlu0 %1914
      %v1916 = vsel %vm490, %v1899, 0.0
      %1917 = vadd.xlane.f32.xlu0 %v1916
      %v1918 = vpop.xlane.xlu0 %1917
      %v1919 = vsel %vm490, %v1901, 0.0
      %1920 = vadd.xlane.f32.xlu0 %v1919
      %v1921 = vpop.xlane.xlu0 %1920
      %v1922 = vsel %vm490, %v1903, 0.0
      %1923 = vadd.xlane.f32.xlu0 %v1922
      %v1924 = vpop.xlane.xlu0 %1923
      %v1925 = vsel %vm490, %v1905, 0.0
      %1926 = vadd.xlane.f32.xlu0 %v1925
      %v1927 = vpop.xlane.xlu0 %1926
      %v1928 = vsel %vm490, %v1907, 0.0
      %1929 = vadd.xlane.f32.xlu0 %v1928
      %v1930 = vpop.xlane.xlu0 %1929
      %v1931 = vsel %vm490, %v1909, 0.0
      %1932 = vadd.xlane.f32.xlu0 %v1931
      %v1933 = vpop.xlane.xlu0 %1932
      %v1934 = vrcp.pop %v1912
      %v1935 = vrcp.pop %v1915
      %v1936 = vrcp.pop %v1918
      %v1937 = vrcp.pop %v1921
      %v1938 = vrcp.pop %v1924
      %v1939 = vrcp.pop %v1927
      %v1940 = vrcp.pop %v1930
      %v1941 = vrcp.pop %v1933
      %v1942 = vmul.f32 %v1895, %v1934
      %v1943 = vmul.f32 %v1897, %v1935
      %v1944 = vmul.f32 %v1899, %v1936
      %v1945 = vmul.f32 %v1901, %v1937
      %v1946 = vmul.f32 %v1903, %v1938
      %v1947 = vmul.f32 %v1905, %v1939
      %v1948 = vmul.f32 %v1907, %v1940
      %v1949 = vmul.f32 %v1909, %v1941
      %v1950 = vpack.c.bf16 %v1943, %v1942
      %v1951 = vpack.c.bf16 %v1945, %v1944
      %v1952 = vpack.c.bf16 %v1947, %v1946
      %v1953 = vpack.c.bf16 %v1949, %v1948
      %1954 = vrot.lane.b32.xlu0 %v782, 96
      %v1955 = vpop.permute.xlu0 %1954
      %1956 = vrot.lane.b32.xlu0 %v783, 96
      %v1957 = vpop.permute.xlu0 %1956
      %1958 = vrot.lane.b32.xlu0 %v784, 96
      %v1959 = vpop.permute.xlu0 %1958
      %1960 = vrot.lane.b32.xlu0 %v785, 96
      %v1961 = vpop.permute.xlu0 %1960
      %v1967 = vsel %vm490, %v1950, 0
      %v1970 = vsel %vm490, %v1951, 0
      %v1973 = vsel %vm490, %v1952, 0
      %v1976 = vsel %vm490, %v1953, 0
      %1978 = vmatprep.subr.bf16.mxu0 0
      %1979 = vmatpush1.bf16.msra.mxu0 %v1955
      %1980 = vmatprep.subr.bf16.mxu0 0
      %1981 = vmatpush1.bf16.msra.mxu0 %v1957
      %1982 = vmatprep.subr.bf16.mxu0 0
      %1983 = vmatpush1.bf16.msra.mxu0 %v1959
      %1984 = vmatprep.subr.bf16.mxu0 0
      %1985 = vmatpush1.bf16.msra.mxu0 %v1961
      %1986 = vmatprep.subr.bf16.mxu0 0
      %1987 = vmatpush1.bf16.msra.mxu0 0
      %1988 = vmatprep.subr.bf16.mxu0 0
      %1989 = vmatpush1.bf16.msra.mxu0 0
      %1990 = vmatprep.subr.bf16.mxu0 0
      %1991 = vmatpush1.bf16.msra.mxu0 0
      %1992 = vmatprep.subr.bf16.mxu0 0
      %1993 = vmatpush1.bf16.msra.mxu0 0
      %1994 = vmatprep.subr.bf16.mxu0 0
      %1995 = vmatpush1.bf16.msra.mxu0 0
      %1996 = vmatprep.subr.bf16.mxu0 0
      %1997 = vmatpush1.bf16.msra.mxu0 0
      %1998 = vmatprep.subr.bf16.mxu0 0
      %1999 = vmatpush1.bf16.msra.mxu0 0
      %2000 = vmatprep.subr.bf16.mxu0 0
      %2001 = vmatpush1.bf16.msra.mxu0 0
      %2002 = vmatprep.subr.bf16.mxu0 0
      %2003 = vmatpush1.bf16.msra.mxu0 0
      %2004 = vmatprep.subr.bf16.mxu0 0
      %2005 = vmatpush1.bf16.msra.mxu0 0
      %2006 = vmatprep.subr.bf16.mxu0 0
      %2007 = vmatpush1.bf16.msra.mxu0 0
      %2008 = vmatprep.subr.bf16.mxu0 0
      %2009 = vmatpush1.bf16.msra.mxu0 0
      %2010 = vmatprep.mubr.bf16.mxu0 0
      %2011 = vmatmul.mubr.bf16.gmra.mrb[0].mxu0 %v1967
      %v2012 = vpop.f32.mrb[0].mxu0
      %v2013 = vadd.f32 0.0, %v2012
      %v2014 = vpop.f32.mrb[0].mxu0
      %v2015 = vpop.f32.mrb[0].mxu0
      %v2016 = vadd.f32 0.0, %v2015
      %v2017 = vpop.f32.mrb[0].mxu0
      %2018 = vmatprep.mubr.bf16.mxu0 0
      %2019 = vmatmul.mubr.bf16.gmra.mrb[0].mxu0 %v1970
      %v2020 = vpop.f32.mrb[0].mxu0
      %v2021 = vadd.f32 0.0, %v2020
      %v2022 = vpop.f32.mrb[0].mxu0
      %v2023 = vpop.f32.mrb[0].mxu0
      %v2024 = vadd.f32 0.0, %v2023
      %v2025 = vpop.f32.mrb[0].mxu0
      %2026 = vmatprep.mubr.bf16.mxu0 0
      %2027 = vmatmul.mubr.bf16.gmra.mrb[0].mxu0 %v1973
      %v2028 = vpop.f32.mrb[0].mxu0
      %v2029 = vadd.f32 0.0, %v2028
      %v2030 = vpop.f32.mrb[0].mxu0
      %v2031 = vpop.f32.mrb[0].mxu0
      %v2032 = vadd.f32 0.0, %v2031
      %v2033 = vpop.f32.mrb[0].mxu0
      %2034 = vmatprep.mubr.bf16.mxu0 0
      %2035 = vmatmul.mubr.bf16.gmra.mrb[0].mxu0 %v1976
      %v2036 = vpop.f32.mrb[0].mxu0
      %v2037 = vadd.f32 0.0, %v2036
      %v2038 = vpop.f32.mrb[0].mxu0
      %v2039 = vpop.f32.mrb[0].mxu0
      %v2040 = vadd.f32 0.0, %v2039
      %v2041 = vpop.f32.mrb[0].mxu0
      %2042 = vdwg.mxu0
      %2043 = vrot.lane.b32.xlu0 %v576, 88
      %v2044 = vpop.permute.xlu0 %2043
      %2045 = vrot.lane.b32.xlu0 %v577, 88
      %v2046 = vpop.permute.xlu0 %2045
      %2047 = vrot.lane.b32.xlu0 %v578, 88
      %v2048 = vpop.permute.xlu0 %2047
      %2049 = vrot.lane.b32.xlu0 %v579, 88
      %v2050 = vpop.permute.xlu0 %2049
      %2051 = vrot.lane.b32.xlu0 %v576, 24
      %v2052 = vpop.permute.xlu0 %2051
      %2053 = vrot.lane.b32.xlu0 %v577, 24
      %v2054 = vpop.permute.xlu0 %2053
      %2055 = vrot.lane.b32.xlu0 %v578, 24
      %v2056 = vpop.permute.xlu0 %2055
      %2057 = vrot.lane.b32.xlu0 %v579, 24
      %v2058 = vpop.permute.xlu0 %2057
      %v2060 = vsel %vm592, %v2044, 0
      %v2063 = vsel %vm592, %v2046, 0
      %v2066 = vsel %vm592, %v2048, 0
      %v2069 = vsel %vm592, %v2050, 0
      %v2072 = vsel %vm592, %v2052, 0
      %v2075 = vsel %vm592, %v2054, 0
      %v2078 = vsel %vm592, %v2056, 0
      %v2081 = vsel %vm592, %v2058, 0
      %2083 = vmatprep.subr.bf16.mxu0 0
      %2084 = vmatpush1.bf16.xpose.msra.mxu0 %v2072
      %2085 = vmatprep.subr.bf16.mxu0 0
      %2086 = vmatpush1.bf16.xpose.msra.mxu0 %v2075
      %2087 = vmatprep.subr.bf16.mxu0 0
      %2088 = vmatpush1.bf16.xpose.msra.mxu0 %v2078
      %2089 = vmatprep.subr.bf16.mxu0 0
      %2090 = vmatpush1.bf16.xpose.msra.mxu0 %v2081
      %2091 = vmatprep.subr.bf16.mxu0 0
      %2092 = vmatpush1.bf16.xpose.msra.mxu0 0
      %2093 = vmatprep.subr.bf16.mxu0 0
      %2094 = vmatpush1.bf16.xpose.msra.mxu0 0
      %2095 = vmatprep.subr.bf16.mxu0 0
      %2096 = vmatpush1.bf16.xpose.msra.mxu0 0
      %2097 = vmatprep.subr.bf16.mxu0 0
      %2098 = vmatpush1.bf16.xpose.msra.mxu0 0
      %2099 = vmatprep.subr.bf16.mxu0 0
      %2100 = vmatpush1.bf16.xpose.msra.mxu0 0
      %2101 = vmatprep.subr.bf16.mxu0 0
      %2102 = vmatpush1.bf16.xpose.msra.mxu0 0
      %2103 = vmatprep.subr.bf16.mxu0 0
      %2104 = vmatpush1.bf16.xpose.msra.mxu0 0
      %2105 = vmatprep.subr.bf16.mxu0 0
      %2106 = vmatpush1.bf16.xpose.msra.mxu0 0
      %2107 = vmatprep.subr.bf16.mxu0 0
      %2108 = vmatpush1.bf16.xpose.msra.mxu0 0
      %2109 = vmatprep.subr.bf16.mxu0 0
      %2110 = vmatpush1.bf16.xpose.msra.mxu0 0
      %2111 = vmatprep.subr.bf16.mxu0 0
      %2112 = vmatpush1.bf16.xpose.msra.mxu0 0
      %2113 = vmatprep.subr.bf16.mxu0 0
      %2114 = vmatpush1.bf16.xpose.msra.mxu0 0
      %2115 = vmatprep.mubr.bf16.mxu0 0
      %2116 = vmatmul.mubr.bf16.gmra.mrb[0].mxu0 %v2060
      %v2117 = vpop.f32.mrb[0].mxu0
      %v2118 = vadd.f32 0.0, %v2117
      %v2119 = vpop.f32.mrb[0].mxu0
      %v2120 = vpop.f32.mrb[0].mxu0
      %v2121 = vadd.f32 0.0, %v2120
      %v2122 = vpop.f32.mrb[0].mxu0
      %2123 = vmatprep.mubr.bf16.mxu0 0
      %2124 = vmatmul.mubr.bf16.gmra.mrb[0].mxu0 %v2063
      %v2125 = vpop.f32.mrb[0].mxu0
      %v2126 = vadd.f32 0.0, %v2125
      %v2127 = vpop.f32.mrb[0].mxu0
      %v2128 = vpop.f32.mrb[0].mxu0
      %v2129 = vadd.f32 0.0, %v2128
      %v2130 = vpop.f32.mrb[0].mxu0
      %2131 = vmatprep.mubr.bf16.mxu0 0
      %2132 = vmatmul.mubr.bf16.gmra.mrb[0].mxu0 %v2066
      %v2133 = vpop.f32.mrb[0].mxu0
      %v2134 = vadd.f32 0.0, %v2133
      %v2135 = vpop.f32.mrb[0].mxu0
      %v2136 = vpop.f32.mrb[0].mxu0
      %v2137 = vadd.f32 0.0, %v2136
      %v2138 = vpop.f32.mrb[0].mxu0
      %2139 = vmatprep.mubr.bf16.mxu0 0
      %2140 = vmatmul.mubr.bf16.gmra.mrb[0].mxu0 %v2069
      %v2141 = vpop.f32.mrb[0].mxu0
      %v2142 = vadd.f32 0.0, %v2141
      %v2143 = vpop.f32.mrb[0].mxu0
      %v2144 = vpop.f32.mrb[0].mxu0
      %v2145 = vadd.f32 0.0, %v2144
      %v2146 = vpop.f32.mrb[0].mxu0
      %2147 = vdwg.mxu0
      %v2148 = vmul.f32 %v2118, 0.35355338
      %v2149 = vmul.f32 %v2121, 0.35355338
      %v2150 = vmul.f32 %v2126, 0.35355338
      %v2151 = vmul.f32 %v2129, 0.35355338
      %v2152 = vmul.f32 %v2134, 0.35355338
      %v2153 = vmul.f32 %v2137, 0.35355338
      %v2154 = vmul.f32 %v2142, 0.35355338
      %v2155 = vmul.f32 %v2145, 0.35355338
      %v2156 = vsel %vm490, %v2148, -inf
      %2157 = vmax.xlane.f32.xlu0 %v2156
      %v2158 = vpop.xlane.xlu0 %2157
      %v2159 = vsel %vm490, %v2149, -inf
      %2160 = vmax.xlane.f32.xlu0 %v2159
      %v2161 = vpop.xlane.xlu0 %2160
      %v2162 = vsel %vm490, %v2150, -inf
      %2163 = vmax.xlane.f32.xlu0 %v2162
      %v2164 = vpop.xlane.xlu0 %2163
      %v2165 = vsel %vm490, %v2151, -inf
      %2166 = vmax.xlane.f32.xlu0 %v2165
      %v2167 = vpop.xlane.xlu0 %2166
      %v2168 = vsel %vm490, %v2152, -inf
      %2169 = vmax.xlane.f32.xlu0 %v2168
      %v2170 = vpop.xlane.xlu0 %2169
      %v2171 = vsel %vm490, %v2153, -inf
      %2172 = vmax.xlane.f32.xlu0 %v2171
      %v2173 = vpop.xlane.xlu0 %2172
      %v2174 = vsel %vm490, %v2154, -inf
      %2175 = vmax.xlane.f32.xlu0 %v2174
      %v2176 = vpop.xlane.xlu0 %2175
      %v2177 = vsel %vm490, %v2155, -inf
      %2178 = vmax.xlane.f32.xlu0 %v2177
      %v2179 = vpop.xlane.xlu0 %2178
      %v2180 = vsub.f32 %v2148, %v2158
      %v2181 = vsub.f32 %v2149, %v2161
      %v2182 = vsub.f32 %v2150, %v2164
      %v2183 = vsub.f32 %v2151, %v2167
      %v2184 = vsub.f32 %v2152, %v2170
      %v2185 = vsub.f32 %v2153, %v2173
      %v2186 = vsub.f32 %v2154, %v2176
      %v2187 = vsub.f32 %v2155, %v2179
      %v2188 = vmul.f32 %v2180, 1.442695
      %v2189 = vpow.pop %v2188
      %v2190 = vmul.f32 %v2181, 1.442695
      %v2191 = vpow.pop %v2190
      %v2192 = vmul.f32 %v2182, 1.442695
      %v2193 = vpow.pop %v2192
      %v2194 = vmul.f32 %v2183, 1.442695
      %v2195 = vpow.pop %v2194
      %v2196 = vmul.f32 %v2184, 1.442695
      %v2197 = vpow.pop %v2196
      %v2198 = vmul.f32 %v2185, 1.442695
      %v2199 = vpow.pop %v2198
      %v2200 = vmul.f32 %v2186, 1.442695
      %v2201 = vpow.pop %v2200
      %v2202 = vmul.f32 %v2187, 1.442695
      %v2203 = vpow.pop %v2202
      %v2204 = vsel %vm490, %v2189, 0.0
      %2205 = vadd.xlane.f32.xlu0 %v2204
      %v2206 = vpop.xlane.xlu0 %2205
      %v2207 = vsel %vm490, %v2191, 0.0
      %2208 = vadd.xlane.f32.xlu0 %v2207
      %v2209 = vpop.xlane.xlu0 %2208
      %v2210 = vsel %vm490, %v2193, 0.0
      %2211 = vadd.xlane.f32.xlu0 %v2210
      %v2212 = vpop.xlane.xlu0 %2211
      %v2213 = vsel %vm490, %v2195, 0.0
      %2214 = vadd.xlane.f32.xlu0 %v2213
      %v2215 = vpop.xlane.xlu0 %2214
      %v2216 = vsel %vm490, %v2197, 0.0
      %2217 = vadd.xlane.f32.xlu0 %v2216
      %v2218 = vpop.xlane.xlu0 %2217
      %v2219 = vsel %vm490, %v2199, 0.0
      %2220 = vadd.xlane.f32.xlu0 %v2219
      %v2221 = vpop.xlane.xlu0 %2220
      %v2222 = vsel %vm490, %v2201, 0.0
      %2223 = vadd.xlane.f32.xlu0 %v2222
      %v2224 = vpop.xlane.xlu0 %2223
      %v2225 = vsel %vm490, %v2203, 0.0
      %2226 = vadd.xlane.f32.xlu0 %v2225
      %v2227 = vpop.xlane.xlu0 %2226
      %v2228 = vrcp.pop %v2206
      %v2229 = vrcp.pop %v2209
      %v2230 = vrcp.pop %v2212
      %v2231 = vrcp.pop %v2215
      %v2232 = vrcp.pop %v2218
      %v2233 = vrcp.pop %v2221
      %v2234 = vrcp.pop %v2224
      %v2235 = vrcp.pop %v2227
      %v2236 = vmul.f32 %v2189, %v2228
      %v2237 = vmul.f32 %v2191, %v2229
      %v2238 = vmul.f32 %v2193, %v2230
      %v2239 = vmul.f32 %v2195, %v2231
      %v2240 = vmul.f32 %v2197, %v2232
      %v2241 = vmul.f32 %v2199, %v2233
      %v2242 = vmul.f32 %v2201, %v2234
      %v2243 = vmul.f32 %v2203, %v2235
      %v2244 = vpack.c.bf16 %v2237, %v2236
      %v2245 = vpack.c.bf16 %v2239, %v2238
      %v2246 = vpack.c.bf16 %v2241, %v2240
      %v2247 = vpack.c.bf16 %v2243, %v2242
      %2248 = vrot.lane.b32.xlu0 %v782, 88
      %v2249 = vpop.permute.xlu0 %2248
      %2250 = vrot.lane.b32.xlu0 %v783, 88
      %v2251 = vpop.permute.xlu0 %2250
      %2252 = vrot.lane.b32.xlu0 %v784, 88
      %v2253 = vpop.permute.xlu0 %2252
      %2254 = vrot.lane.b32.xlu0 %v785, 88
      %v2255 = vpop.permute.xlu0 %2254
      %v2261 = vsel %vm490, %v2244, 0
      %v2264 = vsel %vm490, %v2245, 0
      %v2267 = vsel %vm490, %v2246, 0
      %v2270 = vsel %vm490, %v2247, 0
      %2272 = vmatprep.subr.bf16.mxu0 0
      %2273 = vmatpush1.bf16.msra.mxu0 %v2249
      %2274 = vmatprep.subr.bf16.mxu0 0
      %2275 = vmatpush1.bf16.msra.mxu0 %v2251
      %2276 = vmatprep.subr.bf16.mxu0 0
      %2277 = vmatpush1.bf16.msra.mxu0 %v2253
      %2278 = vmatprep.subr.bf16.mxu0 0
      %2279 = vmatpush1.bf16.msra.mxu0 %v2255
      %2280 = vmatprep.subr.bf16.mxu0 0
      %2281 = vmatpush1.bf16.msra.mxu0 0
      %2282 = vmatprep.subr.bf16.mxu0 0
      %2283 = vmatpush1.bf16.msra.mxu0 0
      %2284 = vmatprep.subr.bf16.mxu0 0
      %2285 = vmatpush1.bf16.msra.mxu0 0
      %2286 = vmatprep.subr.bf16.mxu0 0
      %2287 = vmatpush1.bf16.msra.mxu0 0
      %2288 = vmatprep.subr.bf16.mxu0 0
      %2289 = vmatpush1.bf16.msra.mxu0 0
      %2290 = vmatprep.subr.bf16.mxu0 0
      %2291 = vmatpush1.bf16.msra.mxu0 0
      %2292 = vmatprep.subr.bf16.mxu0 0
      %2293 = vmatpush1.bf16.msra.mxu0 0
      %2294 = vmatprep.subr.bf16.mxu0 0
      %2295 = vmatpush1.bf16.msra.mxu0 0
      %2296 = vmatprep.subr.bf16.mxu0 0
      %2297 = vmatpush1.bf16.msra.mxu0 0
      %2298 = vmatprep.subr.bf16.mxu0 0
      %2299 = vmatpush1.bf16.msra.mxu0 0
      %2300 = vmatprep.subr.bf16.mxu0 0
      %2301 = vmatpush1.bf16.msra.mxu0 0
      %2302 = vmatprep.subr.bf16.mxu0 0
      %2303 = vmatpush1.bf16.msra.mxu0 0
      %2304 = vmatprep.mubr.bf16.mxu0 0
      %2305 = vmatmul.mubr.bf16.gmra.mrb[0].mxu0 %v2261
      %v2306 = vpop.f32.mrb[0].mxu0
      %v2307 = vadd.f32 0.0, %v2306
      %v2308 = vpop.f32.mrb[0].mxu0
      %v2309 = vpop.f32.mrb[0].mxu0
      %v2310 = vadd.f32 0.0, %v2309
      %v2311 = vpop.f32.mrb[0].mxu0
      %2312 = vmatprep.mubr.bf16.mxu0 0
      %2313 = vmatmul.mubr.bf16.gmra.mrb[0].mxu0 %v2264
      %v2314 = vpop.f32.mrb[0].mxu0
      %v2315 = vadd.f32 0.0, %v2314
      %v2316 = vpop.f32.mrb[0].mxu0
      %v2317 = vpop.f32.mrb[0].mxu0
      %v2318 = vadd.f32 0.0, %v2317
      %v2319 = vpop.f32.mrb[0].mxu0
      %2320 = vmatprep.mubr.bf16.mxu0 0
      %2321 = vmatmul.mubr.bf16.gmra.mrb[0].mxu0 %v2267
      %v2322 = vpop.f32.mrb[0].mxu0
      %v2323 = vadd.f32 0.0, %v2322
      %v2324 = vpop.f32.mrb[0].mxu0
      %v2325 = vpop.f32.mrb[0].mxu0
      %v2326 = vadd.f32 0.0, %v2325
      %v2327 = vpop.f32.mrb[0].mxu0
      %2328 = vmatprep.mubr.bf16.mxu0 0
      %2329 = vmatmul.mubr.bf16.gmra.mrb[0].mxu0 %v2270
      %v2330 = vpop.f32.mrb[0].mxu0
      %v2331 = vadd.f32 0.0, %v2330
      %v2332 = vpop.f32.mrb[0].mxu0
      %v2333 = vpop.f32.mrb[0].mxu0
      %v2334 = vadd.f32 0.0, %v2333
      %v2335 = vpop.f32.mrb[0].mxu0
      %2336 = vdwg.mxu0
      %2337 = vrot.lane.b32.xlu0 %v576, 80
      %v2338 = vpop.permute.xlu0 %2337
      %2339 = vrot.lane.b32.xlu0 %v577, 80
      %v2340 = vpop.permute.xlu0 %2339
      %2341 = vrot.lane.b32.xlu0 %v578, 80
      %v2342 = vpop.permute.xlu0 %2341
      %2343 = vrot.lane.b32.xlu0 %v579, 80
      %v2344 = vpop.permute.xlu0 %2343
      %2345 = vrot.lane.b32.xlu0 %v576, 16
      %v2346 = vpop.permute.xlu0 %2345
      %2347 = vrot.lane.b32.xlu0 %v577, 16
      %v2348 = vpop.permute.xlu0 %2347
      %2349 = vrot.lane.b32.xlu0 %v578, 16
      %v2350 = vpop.permute.xlu0 %2349
      %2351 = vrot.lane.b32.xlu0 %v579, 16
      %v2352 = vpop.permute.xlu0 %2351
      %v2354 = vsel %vm592, %v2338, 0
      %v2357 = vsel %vm592, %v2340, 0
      %v2360 = vsel %vm592, %v2342, 0
      %v2363 = vsel %vm592, %v2344, 0
      %v2366 = vsel %vm592, %v2346, 0
      %v2369 = vsel %vm592, %v2348, 0
      %v2372 = vsel %vm592, %v2350, 0
      %v2375 = vsel %vm592, %v2352, 0
      %2377 = vmatprep.subr.bf16.mxu0 0
      %2378 = vmatpush1.bf16.xpose.msra.mxu0 %v2366
      %2379 = vmatprep.subr.bf16.mxu0 0
      %2380 = vmatpush1.bf16.xpose.msra.mxu0 %v2369
      %2381 = vmatprep.subr.bf16.mxu0 0
      %2382 = vmatpush1.bf16.xpose.msra.mxu0 %v2372
      %2383 = vmatprep.subr.bf16.mxu0 0
      %2384 = vmatpush1.bf16.xpose.msra.mxu0 %v2375
      %2385 = vmatprep.subr.bf16.mxu0 0
      %2386 = vmatpush1.bf16.xpose.msra.mxu0 0
      %2387 = vmatprep.subr.bf16.mxu0 0
      %2388 = vmatpush1.bf16.xpose.msra.mxu0 0
      %2389 = vmatprep.subr.bf16.mxu0 0
      %2390 = vmatpush1.bf16.xpose.msra.mxu0 0
      %2391 = vmatprep.subr.bf16.mxu0 0
      %2392 = vmatpush1.bf16.xpose.msra.mxu0 0
      %2393 = vmatprep.subr.bf16.mxu0 0
      %2394 = vmatpush1.bf16.xpose.msra.mxu0 0
      %2395 = vmatprep.subr.bf16.mxu0 0
      %2396 = vmatpush1.bf16.xpose.msra.mxu0 0
      %2397 = vmatprep.subr.bf16.mxu0 0
      %2398 = vmatpush1.bf16.xpose.msra.mxu0 0
      %2399 = vmatprep.subr.bf16.mxu0 0
      %2400 = vmatpush1.bf16.xpose.msra.mxu0 0
      %2401 = vmatprep.subr.bf16.mxu0 0
      %2402 = vmatpush1.bf16.xpose.msra.mxu0 0
      %2403 = vmatprep.subr.bf16.mxu0 0
      %2404 = vmatpush1.bf16.xpose.msra.mxu0 0
      %2405 = vmatprep.subr.bf16.mxu0 0
      %2406 = vmatpush1.bf16.xpose.msra.mxu0 0
      %2407 = vmatprep.subr.bf16.mxu0 0
      %2408 = vmatpush1.bf16.xpose.msra.mxu0 0
      %2409 = vmatprep.mubr.bf16.mxu0 0
      %2410 = vmatmul.mubr.bf16.gmra.mrb[0].mxu0 %v2354
      %v2411 = vpop.f32.mrb[0].mxu0
      %v2412 = vadd.f32 0.0, %v2411
      %v2413 = vpop.f32.mrb[0].mxu0
      %v2414 = vpop.f32.mrb[0].mxu0
      %v2415 = vadd.f32 0.0, %v2414
      %v2416 = vpop.f32.mrb[0].mxu0
      %2417 = vmatprep.mubr.bf16.mxu0 0
      %2418 = vmatmul.mubr.bf16.gmra.mrb[0].mxu0 %v2357
      %v2419 = vpop.f32.mrb[0].mxu0
      %v2420 = vadd.f32 0.0, %v2419
      %v2421 = vpop.f32.mrb[0].mxu0
      %v2422 = vpop.f32.mrb[0].mxu0
      %v2423 = vadd.f32 0.0, %v2422
      %v2424 = vpop.f32.mrb[0].mxu0
      %2425 = vmatprep.mubr.bf16.mxu0 0
      %2426 = vmatmul.mubr.bf16.gmra.mrb[0].mxu0 %v2360
      %v2427 = vpop.f32.mrb[0].mxu0
      %v2428 = vadd.f32 0.0, %v2427
      %v2429 = vpop.f32.mrb[0].mxu0
      %v2430 = vpop.f32.mrb[0].mxu0
      %v2431 = vadd.f32 0.0, %v2430
      %v2432 = vpop.f32.mrb[0].mxu0
      %2433 = vmatprep.mubr.bf16.mxu0 0
      %2434 = vmatmul.mubr.bf16.gmra.mrb[0].mxu0 %v2363
      %v2435 = vpop.f32.mrb[0].mxu0
      %v2436 = vadd.f32 0.0, %v2435
      %v2437 = vpop.f32.mrb[0].mxu0
      %v2438 = vpop.f32.mrb[0].mxu0
      %v2439 = vadd.f32 0.0, %v2438
      %v2440 = vpop.f32.mrb[0].mxu0
      %2441 = vdwg.mxu0
      %v2442 = vmul.f32 %v2412, 0.35355338
      %v2443 = vmul.f32 %v2415, 0.35355338
      %v2444 = vmul.f32 %v2420, 0.35355338
      %v2445 = vmul.f32 %v2423, 0.35355338
      %v2446 = vmul.f32 %v2428, 0.35355338
      %v2447 = vmul.f32 %v2431, 0.35355338
      %v2448 = vmul.f32 %v2436, 0.35355338
      %v2449 = vmul.f32 %v2439, 0.35355338
      %v2450 = vsel %vm490, %v2442, -inf
      %2451 = vmax.xlane.f32.xlu0 %v2450
      %v2452 = vpop.xlane.xlu0 %2451
      %v2453 = vsel %vm490, %v2443, -inf
      %2454 = vmax.xlane.f32.xlu0 %v2453
      %v2455 = vpop.xlane.xlu0 %2454
      %v2456 = vsel %vm490, %v2444, -inf
      %2457 = vmax.xlane.f32.xlu0 %v2456
      %v2458 = vpop.xlane.xlu0 %2457
      %v2459 = vsel %vm490, %v2445, -inf
      %2460 = vmax.xlane.f32.xlu0 %v2459
      %v2461 = vpop.xlane.xlu0 %2460
      %v2462 = vsel %vm490, %v2446, -inf
      %2463 = vmax.xlane.f32.xlu0 %v2462
      %v2464 = vpop.xlane.xlu0 %2463
      %v2465 = vsel %vm490, %v2447, -inf
      %2466 = vmax.xlane.f32.xlu0 %v2465
      %v2467 = vpop.xlane.xlu0 %2466
      %v2468 = vsel %vm490, %v2448, -inf
      %2469 = vmax.xlane.f32.xlu0 %v2468
      %v2470 = vpop.xlane.xlu0 %2469
      %v2471 = vsel %vm490, %v2449, -inf
      %2472 = vmax.xlane.f32.xlu0 %v2471
      %v2473 = vpop.xlane.xlu0 %2472
      %v2474 = vsub.f32 %v2442, %v2452
      %v2475 = vsub.f32 %v2443, %v2455
      %v2476 = vsub.f32 %v2444, %v2458
      %v2477 = vsub.f32 %v2445, %v2461
      %v2478 = vsub.f32 %v2446, %v2464
      %v2479 = vsub.f32 %v2447, %v2467
      %v2480 = vsub.f32 %v2448, %v2470
      %v2481 = vsub.f32 %v2449, %v2473
      %v2482 = vmul.f32 %v2474, 1.442695
      %v2483 = vpow.pop %v2482
      %v2484 = vmul.f32 %v2475, 1.442695
      %v2485 = vpow.pop %v2484
      %v2486 = vmul.f32 %v2476, 1.442695
      %v2487 = vpow.pop %v2486
      %v2488 = vmul.f32 %v2477, 1.442695
      %v2489 = vpow.pop %v2488
      %v2490 = vmul.f32 %v2478, 1.442695
      %v2491 = vpow.pop %v2490
      %v2492 = vmul.f32 %v2479, 1.442695
      %v2493 = vpow.pop %v2492
      %v2494 = vmul.f32 %v2480, 1.442695
      %v2495 = vpow.pop %v2494
      %v2496 = vmul.f32 %v2481, 1.442695
      %v2497 = vpow.pop %v2496
      %v2498 = vsel %vm490, %v2483, 0.0
      %2499 = vadd.xlane.f32.xlu0 %v2498
      %v2500 = vpop.xlane.xlu0 %2499
      %v2501 = vsel %vm490, %v2485, 0.0
      %2502 = vadd.xlane.f32.xlu0 %v2501
      %v2503 = vpop.xlane.xlu0 %2502
      %v2504 = vsel %vm490, %v2487, 0.0
      %2505 = vadd.xlane.f32.xlu0 %v2504
      %v2506 = vpop.xlane.xlu0 %2505
      %v2507 = vsel %vm490, %v2489, 0.0
      %2508 = vadd.xlane.f32.xlu0 %v2507
      %v2509 = vpop.xlane.xlu0 %2508
      %v2510 = vsel %vm490, %v2491, 0.0
      %2511 = vadd.xlane.f32.xlu0 %v2510
      %v2512 = vpop.xlane.xlu0 %2511
      %v2513 = vsel %vm490, %v2493, 0.0
      %2514 = vadd.xlane.f32.xlu0 %v2513
      %v2515 = vpop.xlane.xlu0 %2514
      %v2516 = vsel %vm490, %v2495, 0.0
      %2517 = vadd.xlane.f32.xlu0 %v2516
      %v2518 = vpop.xlane.xlu0 %2517
      %v2519 = vsel %vm490, %v2497, 0.0
      %2520 = vadd.xlane.f32.xlu0 %v2519
      %v2521 = vpop.xlane.xlu0 %2520
      %v2522 = vrcp.pop %v2500
      %v2523 = vrcp.pop %v2503
      %v2524 = vrcp.pop %v2506
      %v2525 = vrcp.pop %v2509
      %v2526 = vrcp.pop %v2512
      %v2527 = vrcp.pop %v2515
      %v2528 = vrcp.pop %v2518
      %v2529 = vrcp.pop %v2521
      %v2530 = vmul.f32 %v2483, %v2522
      %v2531 = vmul.f32 %v2485, %v2523
      %v2532 = vmul.f32 %v2487, %v2524
      %v2533 = vmul.f32 %v2489, %v2525
      %v2534 = vmul.f32 %v2491, %v2526
      %v2535 = vmul.f32 %v2493, %v2527
      %v2536 = vmul.f32 %v2495, %v2528
      %v2537 = vmul.f32 %v2497, %v2529
      %v2538 = vpack.c.bf16 %v2531, %v2530
      %v2539 = vpack.c.bf16 %v2533, %v2532
      %v2540 = vpack.c.bf16 %v2535, %v2534
      %v2541 = vpack.c.bf16 %v2537, %v2536
      %2542 = vrot.lane.b32.xlu0 %v782, 80
      %v2543 = vpop.permute.xlu0 %2542
      %2544 = vrot.lane.b32.xlu0 %v783, 80
      %v2545 = vpop.permute.xlu0 %2544
      %2546 = vrot.lane.b32.xlu0 %v784, 80
      %v2547 = vpop.permute.xlu0 %2546
      %2548 = vrot.lane.b32.xlu0 %v785, 80
      %v2549 = vpop.permute.xlu0 %2548
      %v2555 = vsel %vm490, %v2538, 0
      %v2558 = vsel %vm490, %v2539, 0
      %v2561 = vsel %vm490, %v2540, 0
      %v2564 = vsel %vm490, %v2541, 0
      %2566 = vmatprep.subr.bf16.mxu0 0
      %2567 = vmatpush1.bf16.msra.mxu0 %v2543
      %2568 = vmatprep.subr.bf16.mxu0 0
      %2569 = vmatpush1.bf16.msra.mxu0 %v2545
      %2570 = vmatprep.subr.bf16.mxu0 0
      %2571 = vmatpush1.bf16.msra.mxu0 %v2547
      %2572 = vmatprep.subr.bf16.mxu0 0
      %2573 = vmatpush1.bf16.msra.mxu0 %v2549
      %2574 = vmatprep.subr.bf16.mxu0 0
      %2575 = vmatpush1.bf16.msra.mxu0 0
      %2576 = vmatprep.subr.bf16.mxu0 0
      %2577 = vmatpush1.bf16.msra.mxu0 0
      %2578 = vmatprep.subr.bf16.mxu0 0
      %2579 = vmatpush1.bf16.msra.mxu0 0
      %2580 = vmatprep.subr.bf16.mxu0 0
      %2581 = vmatpush1.bf16.msra.mxu0 0
      %2582 = vmatprep.subr.bf16.mxu0 0
      %2583 = vmatpush1.bf16.msra.mxu0 0
      %2584 = vmatprep.subr.bf16.mxu0 0
      %2585 = vmatpush1.bf16.msra.mxu0 0
      %2586 = vmatprep.subr.bf16.mxu0 0
      %2587 = vmatpush1.bf16.msra.mxu0 0
      %2588 = vmatprep.subr.bf16.mxu0 0
      %2589 = vmatpush1.bf16.msra.mxu0 0
      %2590 = vmatprep.subr.bf16.mxu0 0
      %2591 = vmatpush1.bf16.msra.mxu0 0
      %2592 = vmatprep.subr.bf16.mxu0 0
      %2593 = vmatpush1.bf16.msra.mxu0 0
      %2594 = vmatprep.subr.bf16.mxu0 0
      %2595 = vmatpush1.bf16.msra.mxu0 0
      %2596 = vmatprep.subr.bf16.mxu0 0
      %2597 = vmatpush1.bf16.msra.mxu0 0
      %2598 = vmatprep.mubr.bf16.mxu0 0
      %2599 = vmatmul.mubr.bf16.gmra.mrb[0].mxu0 %v2555
      %v2600 = vpop.f32.mrb[0].mxu0
      %v2601 = vadd.f32 0.0, %v2600
      %v2602 = vpop.f32.mrb[0].mxu0
      %v2603 = vpop.f32.mrb[0].mxu0
      %v2604 = vadd.f32 0.0, %v2603
      %v2605 = vpop.f32.mrb[0].mxu0
      %2606 = vmatprep.mubr.bf16.mxu0 0
      %2607 = vmatmul.mubr.bf16.gmra.mrb[0].mxu0 %v2558
      %v2608 = vpop.f32.mrb[0].mxu0
      %v2609 = vadd.f32 0.0, %v2608
      %v2610 = vpop.f32.mrb[0].mxu0
      %v2611 = vpop.f32.mrb[0].mxu0
      %v2612 = vadd.f32 0.0, %v2611
      %v2613 = vpop.f32.mrb[0].mxu0
      %2614 = vmatprep.mubr.bf16.mxu0 0
      %2615 = vmatmul.mubr.bf16.gmra.mrb[0].mxu0 %v2561
      %v2616 = vpop.f32.mrb[0].mxu0
      %v2617 = vadd.f32 0.0, %v2616
      %v2618 = vpop.f32.mrb[0].mxu0
      %v2619 = vpop.f32.mrb[0].mxu0
      %v2620 = vadd.f32 0.0, %v2619
      %v2621 = vpop.f32.mrb[0].mxu0
      %2622 = vmatprep.mubr.bf16.mxu0 0
      %2623 = vmatmul.mubr.bf16.gmra.mrb[0].mxu0 %v2564
      %v2624 = vpop.f32.mrb[0].mxu0
      %v2625 = vadd.f32 0.0, %v2624
      %v2626 = vpop.f32.mrb[0].mxu0
      %v2627 = vpop.f32.mrb[0].mxu0
      %v2628 = vadd.f32 0.0, %v2627
      %v2629 = vpop.f32.mrb[0].mxu0
      %2630 = vdwg.mxu0
      %2631 = vrot.lane.b32.xlu0 %v576, 72
      %v2632 = vpop.permute.xlu0 %2631
      %2633 = vrot.lane.b32.xlu0 %v577, 72
      %v2634 = vpop.permute.xlu0 %2633
      %2635 = vrot.lane.b32.xlu0 %v578, 72
      %v2636 = vpop.permute.xlu0 %2635
      %2637 = vrot.lane.b32.xlu0 %v579, 72
      %v2638 = vpop.permute.xlu0 %2637
      %2639 = vrot.lane.b32.xlu0 %v576, 8
      %v2640 = vpop.permute.xlu0 %2639
      %2641 = vrot.lane.b32.xlu0 %v577, 8
      %v2642 = vpop.permute.xlu0 %2641
      %2643 = vrot.lane.b32.xlu0 %v578, 8
      %v2644 = vpop.permute.xlu0 %2643
      %2645 = vrot.lane.b32.xlu0 %v579, 8
      %v2646 = vpop.permute.xlu0 %2645
      %v2648 = vsel %vm592, %v2632, 0
      %v2651 = vsel %vm592, %v2634, 0
      %v2654 = vsel %vm592, %v2636, 0
      %v2657 = vsel %vm592, %v2638, 0
      %v2660 = vsel %vm592, %v2640, 0
      %v2663 = vsel %vm592, %v2642, 0
      %v2666 = vsel %vm592, %v2644, 0
      %v2669 = vsel %vm592, %v2646, 0
      %2671 = vmatprep.subr.bf16.mxu0 0
      %2672 = vmatpush1.bf16.xpose.msra.mxu0 %v2660
      %2673 = vmatprep.subr.bf16.mxu0 0
      %2674 = vmatpush1.bf16.xpose.msra.mxu0 %v2663
      %2675 = vmatprep.subr.bf16.mxu0 0
      %2676 = vmatpush1.bf16.xpose.msra.mxu0 %v2666
      %2677 = vmatprep.subr.bf16.mxu0 0
      %2678 = vmatpush1.bf16.xpose.msra.mxu0 %v2669
      %2679 = vmatprep.subr.bf16.mxu0 0
      %2680 = vmatpush1.bf16.xpose.msra.mxu0 0
      %2681 = vmatprep.subr.bf16.mxu0 0
      %2682 = vmatpush1.bf16.xpose.msra.mxu0 0
      %2683 = vmatprep.subr.bf16.mxu0 0
      %2684 = vmatpush1.bf16.xpose.msra.mxu0 0
      %2685 = vmatprep.subr.bf16.mxu0 0
      %2686 = vmatpush1.bf16.xpose.msra.mxu0 0
      %2687 = vmatprep.subr.bf16.mxu0 0
      %2688 = vmatpush1.bf16.xpose.msra.mxu0 0
      %2689 = vmatprep.subr.bf16.mxu0 0
      %2690 = vmatpush1.bf16.xpose.msra.mxu0 0
      %2691 = vmatprep.subr.bf16.mxu0 0
      %2692 = vmatpush1.bf16.xpose.msra.mxu0 0
      %2693 = vmatprep.subr.bf16.mxu0 0
      %2694 = vmatpush1.bf16.xpose.msra.mxu0 0
      %2695 = vmatprep.subr.bf16.mxu0 0
      %2696 = vmatpush1.bf16.xpose.msra.mxu0 0
      %2697 = vmatprep.subr.bf16.mxu0 0
      %2698 = vmatpush1.bf16.xpose.msra.mxu0 0
      %2699 = vmatprep.subr.bf16.mxu0 0
      %2700 = vmatpush1.bf16.xpose.msra.mxu0 0
      %2701 = vmatprep.subr.bf16.mxu0 0
      %2702 = vmatpush1.bf16.xpose.msra.mxu0 0
      %2703 = vmatprep.mubr.bf16.mxu0 0
      %2704 = vmatmul.mubr.bf16.gmra.mrb[0].mxu0 %v2648
      %v2705 = vpop.f32.mrb[0].mxu0
      %v2706 = vadd.f32 0.0, %v2705
      %v2707 = vpop.f32.mrb[0].mxu0
      %v2708 = vpop.f32.mrb[0].mxu0
      %v2709 = vadd.f32 0.0, %v2708
      %v2710 = vpop.f32.mrb[0].mxu0
      %2711 = vmatprep.mubr.bf16.mxu0 0
      %2712 = vmatmul.mubr.bf16.gmra.mrb[0].mxu0 %v2651
      %v2713 = vpop.f32.mrb[0].mxu0
      %v2714 = vadd.f32 0.0, %v2713
      %v2715 = vpop.f32.mrb[0].mxu0
      %v2716 = vpop.f32.mrb[0].mxu0
      %v2717 = vadd.f32 0.0, %v2716
      %v2718 = vpop.f32.mrb[0].mxu0
      %2719 = vmatprep.mubr.bf16.mxu0 0
      %2720 = vmatmul.mubr.bf16.gmra.mrb[0].mxu0 %v2654
      %v2721 = vpop.f32.mrb[0].mxu0
      %v2722 = vadd.f32 0.0, %v2721
      %v2723 = vpop.f32.mrb[0].mxu0
      %v2724 = vpop.f32.mrb[0].mxu0
      %v2725 = vadd.f32 0.0, %v2724
      %v2726 = vpop.f32.mrb[0].mxu0
      %2727 = vmatprep.mubr.bf16.mxu0 0
      %2728 = vmatmul.mubr.bf16.gmra.mrb[0].mxu0 %v2657
      %v2729 = vpop.f32.mrb[0].mxu0
      %v2730 = vadd.f32 0.0, %v2729
      %v2731 = vpop.f32.mrb[0].mxu0
      %v2732 = vpop.f32.mrb[0].mxu0
      %v2733 = vadd.f32 0.0, %v2732
      %v2734 = vpop.f32.mrb[0].mxu0
      %2735 = vdwg.mxu0
      %v2736 = vmul.f32 %v2706, 0.35355338
      %v2737 = vmul.f32 %v2709, 0.35355338
      %v2738 = vmul.f32 %v2714, 0.35355338
      %v2739 = vmul.f32 %v2717, 0.35355338
      %v2740 = vmul.f32 %v2722, 0.35355338
      %v2741 = vmul.f32 %v2725, 0.35355338
      %v2742 = vmul.f32 %v2730, 0.35355338
      %v2743 = vmul.f32 %v2733, 0.35355338
      %v2744 = vsel %vm490, %v2736, -inf
      %2745 = vmax.xlane.f32.xlu0 %v2744
      %v2746 = vpop.xlane.xlu0 %2745
      %v2747 = vsel %vm490, %v2737, -inf
      %2748 = vmax.xlane.f32.xlu0 %v2747
      %v2749 = vpop.xlane.xlu0 %2748
      %v2750 = vsel %vm490, %v2738, -inf
      %2751 = vmax.xlane.f32.xlu0 %v2750
      %v2752 = vpop.xlane.xlu0 %2751
      %v2753 = vsel %vm490, %v2739, -inf
      %2754 = vmax.xlane.f32.xlu0 %v2753
      %v2755 = vpop.xlane.xlu0 %2754
      %v2756 = vsel %vm490, %v2740, -inf
      %2757 = vmax.xlane.f32.xlu0 %v2756
      %v2758 = vpop.xlane.xlu0 %2757
      %v2759 = vsel %vm490, %v2741, -inf
      %2760 = vmax.xlane.f32.xlu0 %v2759
      %v2761 = vpop.xlane.xlu0 %2760
      %v2762 = vsel %vm490, %v2742, -inf
      %2763 = vmax.xlane.f32.xlu0 %v2762
      %v2764 = vpop.xlane.xlu0 %2763
      %v2765 = vsel %vm490, %v2743, -inf
      %2766 = vmax.xlane.f32.xlu0 %v2765
      %v2767 = vpop.xlane.xlu0 %2766
      %v2768 = vsub.f32 %v2736, %v2746
      %v2769 = vsub.f32 %v2737, %v2749
      %v2770 = vsub.f32 %v2738, %v2752
      %v2771 = vsub.f32 %v2739, %v2755
      %v2772 = vsub.f32 %v2740, %v2758
      %v2773 = vsub.f32 %v2741, %v2761
      %v2774 = vsub.f32 %v2742, %v2764
      %v2775 = vsub.f32 %v2743, %v2767
      %v2776 = vmul.f32 %v2768, 1.442695
      %v2777 = vpow.pop %v2776
      %v2778 = vmul.f32 %v2769, 1.442695
      %v2779 = vpow.pop %v2778
      %v2780 = vmul.f32 %v2770, 1.442695
      %v2781 = vpow.pop %v2780
      %v2782 = vmul.f32 %v2771, 1.442695
      %v2783 = vpow.pop %v2782
      %v2784 = vmul.f32 %v2772, 1.442695
      %v2785 = vpow.pop %v2784
      %v2786 = vmul.f32 %v2773, 1.442695
      %v2787 = vpow.pop %v2786
      %v2788 = vmul.f32 %v2774, 1.442695
      %v2789 = vpow.pop %v2788
      %v2790 = vmul.f32 %v2775, 1.442695
      %v2791 = vpow.pop %v2790
      %v2792 = vsel %vm490, %v2777, 0.0
      %2793 = vadd.xlane.f32.xlu0 %v2792
      %v2794 = vpop.xlane.xlu0 %2793
      %v2795 = vsel %vm490, %v2779, 0.0
      %2796 = vadd.xlane.f32.xlu0 %v2795
      %v2797 = vpop.xlane.xlu0 %2796
      %v2798 = vsel %vm490, %v2781, 0.0
      %2799 = vadd.xlane.f32.xlu0 %v2798
      %v2800 = vpop.xlane.xlu0 %2799
      %v2801 = vsel %vm490, %v2783, 0.0
      %2802 = vadd.xlane.f32.xlu0 %v2801
      %v2803 = vpop.xlane.xlu0 %2802
      %v2804 = vsel %vm490, %v2785, 0.0
      %2805 = vadd.xlane.f32.xlu0 %v2804
      %v2806 = vpop.xlane.xlu0 %2805
      %v2807 = vsel %vm490, %v2787, 0.0
      %2808 = vadd.xlane.f32.xlu0 %v2807
      %v2809 = vpop.xlane.xlu0 %2808
      %v2810 = vsel %vm490, %v2789, 0.0
      %2811 = vadd.xlane.f32.xlu0 %v2810
      %v2812 = vpop.xlane.xlu0 %2811
      %v2813 = vsel %vm490, %v2791, 0.0
      %2814 = vadd.xlane.f32.xlu0 %v2813
      %v2815 = vpop.xlane.xlu0 %2814
      %v2816 = vrcp.pop %v2794
      %v2817 = vrcp.pop %v2797
      %v2818 = vrcp.pop %v2800
      %v2819 = vrcp.pop %v2803
      %v2820 = vrcp.pop %v2806
      %v2821 = vrcp.pop %v2809
      %v2822 = vrcp.pop %v2812
      %v2823 = vrcp.pop %v2815
      %v2824 = vmul.f32 %v2777, %v2816
      %v2825 = vmul.f32 %v2779, %v2817
      %v2826 = vmul.f32 %v2781, %v2818
      %v2827 = vmul.f32 %v2783, %v2819
      %v2828 = vmul.f32 %v2785, %v2820
      %v2829 = vmul.f32 %v2787, %v2821
      %v2830 = vmul.f32 %v2789, %v2822
      %v2831 = vmul.f32 %v2791, %v2823
      %v2832 = vpack.c.bf16 %v2825, %v2824
      %v2833 = vpack.c.bf16 %v2827, %v2826
      %v2834 = vpack.c.bf16 %v2829, %v2828
      %v2835 = vpack.c.bf16 %v2831, %v2830
      %2836 = vrot.lane.b32.xlu0 %v782, 72
      %v2837 = vpop.permute.xlu0 %2836
      %2838 = vrot.lane.b32.xlu0 %v783, 72
      %v2839 = vpop.permute.xlu0 %2838
      %2840 = vrot.lane.b32.xlu0 %v784, 72
      %v2841 = vpop.permute.xlu0 %2840
      %2842 = vrot.lane.b32.xlu0 %v785, 72
      %v2843 = vpop.permute.xlu0 %2842
      %v2849 = vsel %vm490, %v2832, 0
      %v2852 = vsel %vm490, %v2833, 0
      %v2855 = vsel %vm490, %v2834, 0
      %v2858 = vsel %vm490, %v2835, 0
      %2860 = vmatprep.subr.bf16.mxu0 0
      %2861 = vmatpush1.bf16.msra.mxu0 %v2837
      %2862 = vmatprep.subr.bf16.mxu0 0
      %2863 = vmatpush1.bf16.msra.mxu0 %v2839
      %2864 = vmatprep.subr.bf16.mxu0 0
      %2865 = vmatpush1.bf16.msra.mxu0 %v2841
      %2866 = vmatprep.subr.bf16.mxu0 0
      %2867 = vmatpush1.bf16.msra.mxu0 %v2843
      %2868 = vmatprep.subr.bf16.mxu0 0
      %2869 = vmatpush1.bf16.msra.mxu0 0
      %2870 = vmatprep.subr.bf16.mxu0 0
      %2871 = vmatpush1.bf16.msra.mxu0 0
      %2872 = vmatprep.subr.bf16.mxu0 0
      %2873 = vmatpush1.bf16.msra.mxu0 0
      %2874 = vmatprep.subr.bf16.mxu0 0
      %2875 = vmatpush1.bf16.msra.mxu0 0
      %2876 = vmatprep.subr.bf16.mxu0 0
      %2877 = vmatpush1.bf16.msra.mxu0 0
      %2878 = vmatprep.subr.bf16.mxu0 0
      %2879 = vmatpush1.bf16.msra.mxu0 0
      %2880 = vmatprep.subr.bf16.mxu0 0
      %2881 = vmatpush1.bf16.msra.mxu0 0
      %2882 = vmatprep.subr.bf16.mxu0 0
      %2883 = vmatpush1.bf16.msra.mxu0 0
      %2884 = vmatprep.subr.bf16.mxu0 0
      %2885 = vmatpush1.bf16.msra.mxu0 0
      %2886 = vmatprep.subr.bf16.mxu0 0
      %2887 = vmatpush1.bf16.msra.mxu0 0
      %2888 = vmatprep.subr.bf16.mxu0 0
      %2889 = vmatpush1.bf16.msra.mxu0 0
      %2890 = vmatprep.subr.bf16.mxu0 0
      %2891 = vmatpush1.bf16.msra.mxu0 0
      %2892 = vmatprep.mubr.bf16.mxu0 0
      %2893 = vmatmul.mubr.bf16.gmra.mrb[0].mxu0 %v2849
      %v2894 = vpop.f32.mrb[0].mxu0
      %v2895 = vadd.f32 0.0, %v2894
      %v2896 = vpop.f32.mrb[0].mxu0
      %v2897 = vpop.f32.mrb[0].mxu0
      %v2898 = vadd.f32 0.0, %v2897
      %v2899 = vpop.f32.mrb[0].mxu0
      %2900 = vmatprep.mubr.bf16.mxu0 0
      %2901 = vmatmul.mubr.bf16.gmra.mrb[0].mxu0 %v2852
      %v2902 = vpop.f32.mrb[0].mxu0
      %v2903 = vadd.f32 0.0, %v2902
      %v2904 = vpop.f32.mrb[0].mxu0
      %v2905 = vpop.f32.mrb[0].mxu0
      %v2906 = vadd.f32 0.0, %v2905
      %v2907 = vpop.f32.mrb[0].mxu0
      %2908 = vmatprep.mubr.bf16.mxu0 0
      %2909 = vmatmul.mubr.bf16.gmra.mrb[0].mxu0 %v2855
      %v2910 = vpop.f32.mrb[0].mxu0
      %v2911 = vadd.f32 0.0, %v2910
      %v2912 = vpop.f32.mrb[0].mxu0
      %v2913 = vpop.f32.mrb[0].mxu0
      %v2914 = vadd.f32 0.0, %v2913
      %v2915 = vpop.f32.mrb[0].mxu0
      %2916 = vmatprep.mubr.bf16.mxu0 0
      %2917 = vmatmul.mubr.bf16.gmra.mrb[0].mxu0 %v2858
      %v2918 = vpop.f32.mrb[0].mxu0
      %v2919 = vadd.f32 0.0, %v2918
      %v2920 = vpop.f32.mrb[0].mxu0
      %v2921 = vpop.f32.mrb[0].mxu0
      %v2922 = vadd.f32 0.0, %v2921
      %v2923 = vpop.f32.mrb[0].mxu0
      %2924 = vdwg.mxu0
      %2933 = vrot.lane.b32.xlu0 %v1131, 8
      %v2934 = vpop.permute.xlu0 %2933
      %2935 = vrot.lane.b32.xlu0 %v1134, 8
      %v2936 = vpop.permute.xlu0 %2935
      %2937 = vrot.lane.b32.xlu0 %v1139, 8
      %v2938 = vpop.permute.xlu0 %2937
      %2939 = vrot.lane.b32.xlu0 %v1142, 8
      %v2940 = vpop.permute.xlu0 %2939
      %2941 = vrot.lane.b32.xlu0 %v1147, 8
      %v2942 = vpop.permute.xlu0 %2941
      %2943 = vrot.lane.b32.xlu0 %v1150, 8
      %v2944 = vpop.permute.xlu0 %2943
      %2945 = vrot.lane.b32.xlu0 %v1155, 8
      %v2946 = vpop.permute.xlu0 %2945
      %2947 = vrot.lane.b32.xlu0 %v1158, 8
      %v2948 = vpop.permute.xlu0 %2947
      %2965 = vrot.lane.b32.xlu0 %v1425, 16
      %v2966 = vpop.permute.xlu0 %2965
      %2967 = vrot.lane.b32.xlu0 %v1428, 16
      %v2968 = vpop.permute.xlu0 %2967
      %2969 = vrot.lane.b32.xlu0 %v1433, 16
      %v2970 = vpop.permute.xlu0 %2969
      %2971 = vrot.lane.b32.xlu0 %v1436, 16
      %v2972 = vpop.permute.xlu0 %2971
      %2973 = vrot.lane.b32.xlu0 %v1441, 16
      %v2974 = vpop.permute.xlu0 %2973
      %2975 = vrot.lane.b32.xlu0 %v1444, 16
      %v2976 = vpop.permute.xlu0 %2975
      %2977 = vrot.lane.b32.xlu0 %v1449, 16
      %v2978 = vpop.permute.xlu0 %2977
      %2979 = vrot.lane.b32.xlu0 %v1452, 16
      %v2980 = vpop.permute.xlu0 %2979
      %2997 = vrot.lane.b32.xlu0 %v1719, 24
      %v2998 = vpop.permute.xlu0 %2997
      %2999 = vrot.lane.b32.xlu0 %v1722, 24
      %v3000 = vpop.permute.xlu0 %2999
      %3001 = vrot.lane.b32.xlu0 %v1727, 24
      %v3002 = vpop.permute.xlu0 %3001
      %3003 = vrot.lane.b32.xlu0 %v1730, 24
      %v3004 = vpop.permute.xlu0 %3003
      %3005 = vrot.lane.b32.xlu0 %v1735, 24
      %v3006 = vpop.permute.xlu0 %3005
      %3007 = vrot.lane.b32.xlu0 %v1738, 24
      %v3008 = vpop.permute.xlu0 %3007
      %3009 = vrot.lane.b32.xlu0 %v1743, 24
      %v3010 = vpop.permute.xlu0 %3009
      %3011 = vrot.lane.b32.xlu0 %v1746, 24
      %v3012 = vpop.permute.xlu0 %3011
      %3029 = vrot.lane.b32.xlu0 %v2013, 32
      %v3030 = vpop.permute.xlu0 %3029
      %3031 = vrot.lane.b32.xlu0 %v2016, 32
      %v3032 = vpop.permute.xlu0 %3031
      %3033 = vrot.lane.b32.xlu0 %v2021, 32
      %v3034 = vpop.permute.xlu0 %3033
      %3035 = vrot.lane.b32.xlu0 %v2024, 32
      %v3036 = vpop.permute.xlu0 %3035
      %3037 = vrot.lane.b32.xlu0 %v2029, 32
      %v3038 = vpop.permute.xlu0 %3037
      %3039 = vrot.lane.b32.xlu0 %v2032, 32
      %v3040 = vpop.permute.xlu0 %3039
      %3041 = vrot.lane.b32.xlu0 %v2037, 32
      %v3042 = vpop.permute.xlu0 %3041
      %3043 = vrot.lane.b32.xlu0 %v2040, 32
      %v3044 = vpop.permute.xlu0 %3043
      %3061 = vrot.lane.b32.xlu0 %v2307, 40
      %v3062 = vpop.permute.xlu0 %3061
      %3063 = vrot.lane.b32.xlu0 %v2310, 40
      %v3064 = vpop.permute.xlu0 %3063
      %3065 = vrot.lane.b32.xlu0 %v2315, 40
      %v3066 = vpop.permute.xlu0 %3065
      %3067 = vrot.lane.b32.xlu0 %v2318, 40
      %v3068 = vpop.permute.xlu0 %3067
      %3069 = vrot.lane.b32.xlu0 %v2323, 40
      %v3070 = vpop.permute.xlu0 %3069
      %3071 = vrot.lane.b32.xlu0 %v2326, 40
      %v3072 = vpop.permute.xlu0 %3071
      %3073 = vrot.lane.b32.xlu0 %v2331, 40
      %v3074 = vpop.permute.xlu0 %3073
      %3075 = vrot.lane.b32.xlu0 %v2334, 40
      %v3076 = vpop.permute.xlu0 %3075
      %3093 = vrot.lane.b32.xlu0 %v2601, 48
      %v3094 = vpop.permute.xlu0 %3093
      %3095 = vrot.lane.b32.xlu0 %v2604, 48
      %v3096 = vpop.permute.xlu0 %3095
      %3097 = vrot.lane.b32.xlu0 %v2609, 48
      %v3098 = vpop.permute.xlu0 %3097
      %3099 = vrot.lane.b32.xlu0 %v2612, 48
      %v3100 = vpop.permute.xlu0 %3099
      %3101 = vrot.lane.b32.xlu0 %v2617, 48
      %v3102 = vpop.permute.xlu0 %3101
      %3103 = vrot.lane.b32.xlu0 %v2620, 48
      %v3104 = vpop.permute.xlu0 %3103
      %3105 = vrot.lane.b32.xlu0 %v2625, 48
      %v3106 = vpop.permute.xlu0 %3105
      %3107 = vrot.lane.b32.xlu0 %v2628, 48
      %v3108 = vpop.permute.xlu0 %3107
      %3125 = vrot.lane.b32.xlu0 %v2895, 56
      %v3126 = vpop.permute.xlu0 %3125
      %3127 = vrot.lane.b32.xlu0 %v2898, 56
      %v3128 = vpop.permute.xlu0 %3127
      %3129 = vrot.lane.b32.xlu0 %v2903, 56
      %v3130 = vpop.permute.xlu0 %3129
      %3131 = vrot.lane.b32.xlu0 %v2906, 56
      %v3132 = vpop.permute.xlu0 %3131
      %3133 = vrot.lane.b32.xlu0 %v2911, 56
      %v3134 = vpop.permute.xlu0 %3133
      %3135 = vrot.lane.b32.xlu0 %v2914, 56
      %v3136 = vpop.permute.xlu0 %3135
      %3137 = vrot.lane.b32.xlu0 %v2919, 56
      %v3138 = vpop.permute.xlu0 %3137
      %3139 = vrot.lane.b32.xlu0 %v2922, 56
      %v3140 = vpop.permute.xlu0 %3139
      %v3149 = vsel %vm592, %v833, %v2934
      %v3150 = vsel %vm592, %v836, %v2936
      %v3151 = vsel %vm592, %v841, %v2938
      %v3152 = vsel %vm592, %v844, %v2940
      %v3153 = vsel %vm592, %v849, %v2942
      %v3154 = vsel %vm592, %v852, %v2944
      %v3155 = vsel %vm592, %v857, %v2946
      %v3156 = vsel %vm592, %v860, %v2948
      %vm3157 = vcmask 130048
      %v3158 = vsel %vm3157, %v3149, %v2966
      %v3159 = vsel %vm3157, %v3150, %v2968
      %v3160 = vsel %vm3157, %v3151, %v2970
      %v3161 = vsel %vm3157, %v3152, %v2972
      %v3162 = vsel %vm3157, %v3153, %v2974
      %v3163 = vsel %vm3157, %v3154, %v2976
      %v3164 = vsel %vm3157, %v3155, %v2978
      %v3165 = vsel %vm3157, %v3156, %v2980
      %vm3166 = vcmask 195584
      %v3167 = vsel %vm3166, %v3158, %v2998
      %v3168 = vsel %vm3166, %v3159, %v3000
      %v3169 = vsel %vm3166, %v3160, %v3002
      %v3170 = vsel %vm3166, %v3161, %v3004
      %v3171 = vsel %vm3166, %v3162, %v3006
      %v3172 = vsel %vm3166, %v3163, %v3008
      %v3173 = vsel %vm3166, %v3164, %v3010
      %v3174 = vsel %vm3166, %v3165, %v3012
      %vm3175 = vcmask 261120
      %v3176 = vsel %vm3175, %v3167, %v3030
      %v3177 = vsel %vm3175, %v3168, %v3032
      %v3178 = vsel %vm3175, %v3169, %v3034
      %v3179 = vsel %vm3175, %v3170, %v3036
      %v3180 = vsel %vm3175, %v3171, %v3038
      %v3181 = vsel %vm3175, %v3172, %v3040
      %v3182 = vsel %vm3175, %v3173, %v3042
      %v3183 = vsel %vm3175, %v3174, %v3044
      %vm3184 = vcmask 326656
      %v3185 = vsel %vm3184, %v3176, %v3062
      %v3186 = vsel %vm3184, %v3177, %v3064
      %v3187 = vsel %vm3184, %v3178, %v3066
      %v3188 = vsel %vm3184, %v3179, %v3068
      %v3189 = vsel %vm3184, %v3180, %v3070
      %v3190 = vsel %vm3184, %v3181, %v3072
      %v3191 = vsel %vm3184, %v3182, %v3074
      %v3192 = vsel %vm3184, %v3183, %v3076
      %vm3193 = vcmask 392192
      %v3194 = vsel %vm3193, %v3185, %v3094
      %v3195 = vsel %vm3193, %v3186, %v3096
      %v3196 = vsel %vm3193, %v3187, %v3098
      %v3197 = vsel %vm3193, %v3188, %v3100
      %v3198 = vsel %vm3193, %v3189, %v3102
      %v3199 = vsel %vm3193, %v3190, %v3104
      %v3200 = vsel %vm3193, %v3191, %v3106
      %v3201 = vsel %vm3193, %v3192, %v3108
      %vm3202 = vcmask 457728
      %v3203 = vsel %vm3202, %v3194, %v3126
      %v3204 = vsel %vm3202, %v3195, %v3128
      %v3205 = vsel %vm3202, %v3196, %v3130
      %v3206 = vsel %vm3202, %v3197, %v3132
      %v3207 = vsel %vm3202, %v3198, %v3134
      %v3208 = vsel %vm3202, %v3199, %v3136
      %v3209 = vsel %vm3202, %v3200, %v3138
      %v3210 = vsel %vm3202, %v3201, %v3140
      %v3211 = vld [vmem:[%s3] sm:$0xff]
      %v3212 = vld [vmem:[%s3 + $0x8] sm:$0xff]
      %v3213 = vld [vmem:[%s3 + $0x10] sm:$0xff]
      %v3214 = vld [vmem:[%s3 + $0x18] sm:$0xff]
      %v3215 = vld [vmem:[%s3 + $0x20] sm:$0xff]
      %v3216 = vld [vmem:[%s3 + $0x28] sm:$0xff]
      %v3217 = vld [vmem:[%s3 + $0x30] sm:$0xff]
      %v3218 = vld [vmem:[%s3 + $0x38] sm:$0xff]
      %v3219 = vpack.c.bf16 %v3204, %v3203
      %v3220 = vpack.c.bf16 %v3206, %v3205
      %v3221 = vpack.c.bf16 %v3208, %v3207
      %v3222 = vpack.c.bf16 %v3210, %v3209
      %v3223 = vpack.c.bf16 %v3212, %v3211
      %v3224 = vpack.c.bf16 %v3214, %v3213
      %v3225 = vpack.c.bf16 %v3216, %v3215
      %v3226 = vpack.c.bf16 %v3218, %v3217
      %v3227 = vld [vmem:[%s4] sm:$0x1]
      %v3229 = vlaneseq
      %v3230 = vshrl.u32 %v3229, 7
      %v3231 = vsub.s32 0, %v3230
      %v3232 = vrot.slane %v3227, %v3231
      %v3235 = vsel %vm490, %v3219, 0
      %v3238 = vsel %vm490, %v3220, 0
      %v3241 = vsel %vm490, %v3221, 0
      %v3244 = vsel %vm490, %v3222, 0
      %3246 = vmatprep.subr.bf16.mxu0 0
      %3247 = vmatpush1.bf16.msra.mxu0 %v3223
      %3248 = vmatprep.subr.bf16.mxu0 0
      %3249 = vmatpush1.bf16.msra.mxu0 %v3224
      %3250 = vmatprep.subr.bf16.mxu0 0
      %3251 = vmatpush1.bf16.msra.mxu0 %v3225
      %3252 = vmatprep.subr.bf16.mxu0 0
      %3253 = vmatpush1.bf16.msra.mxu0 %v3226
      %3254 = vmatprep.subr.bf16.mxu0 0
      %3255 = vmatpush1.bf16.msra.mxu0 0
      %3256 = vmatprep.subr.bf16.mxu0 0
      %3257 = vmatpush1.bf16.msra.mxu0 0
      %3258 = vmatprep.subr.bf16.mxu0 0
      %3259 = vmatpush1.bf16.msra.mxu0 0
      %3260 = vmatprep.subr.bf16.mxu0 0
      %3261 = vmatpush1.bf16.msra.mxu0 0
      %3262 = vmatprep.subr.bf16.mxu0 0
      %3263 = vmatpush1.bf16.msra.mxu0 0
      %3264 = vmatprep.subr.bf16.mxu0 0
      %3265 = vmatpush1.bf16.msra.mxu0 0
      %3266 = vmatprep.subr.bf16.mxu0 0
      %3267 = vmatpush1.bf16.msra.mxu0 0
      %3268 = vmatprep.subr.bf16.mxu0 0
      %3269 = vmatpush1.bf16.msra.mxu0 0
      %3270 = vmatprep.subr.bf16.mxu0 0
      %3271 = vmatpush1.bf16.msra.mxu0 0
      %3272 = vmatprep.subr.bf16.mxu0 0
      %3273 = vmatpush1.bf16.msra.mxu0 0
      %3274 = vmatprep.subr.bf16.mxu0 0
      %3275 = vmatpush1.bf16.msra.mxu0 0
      %3276 = vmatprep.subr.bf16.mxu0 0
      %3277 = vmatpush1.bf16.msra.mxu0 0
      %3278 = vmatprep.mubr.bf16.mxu0 0
      %3279 = vmatmul.mubr.bf16.gmra.mrb[0].mxu0 %v3235
      %v3280 = vpop.f32.mrb[0].mxu0
      %v3281 = vadd.f32 %v3232, %v3280
      %v3282 = vpop.f32.mrb[0].mxu0
      %v3283 = vpop.f32.mrb[0].mxu0
      %v3284 = vadd.f32 %v3232, %v3283
      %v3285 = vpop.f32.mrb[0].mxu0
      %3286 = vmatprep.mubr.bf16.mxu0 0
      %3287 = vmatmul.mubr.bf16.gmra.mrb[0].mxu0 %v3238
      %v3288 = vpop.f32.mrb[0].mxu0
      %v3289 = vadd.f32 %v3232, %v3288
      %v3290 = vpop.f32.mrb[0].mxu0
      %v3291 = vpop.f32.mrb[0].mxu0
      %v3292 = vadd.f32 %v3232, %v3291
      %v3293 = vpop.f32.mrb[0].mxu0
      %3294 = vmatprep.mubr.bf16.mxu0 0
      %3295 = vmatmul.mubr.bf16.gmra.mrb[0].mxu0 %v3241
      %v3296 = vpop.f32.mrb[0].mxu0
      %v3297 = vadd.f32 %v3232, %v3296
      %v3298 = vpop.f32.mrb[0].mxu0
      %v3299 = vpop.f32.mrb[0].mxu0
      %v3300 = vadd.f32 %v3232, %v3299
      %v3301 = vpop.f32.mrb[0].mxu0
      %3302 = vmatprep.mubr.bf16.mxu0 0
      %3303 = vmatmul.mubr.bf16.gmra.mrb[0].mxu0 %v3244
      %v3304 = vpop.f32.mrb[0].mxu0
      %v3305 = vadd.f32 %v3232, %v3304
      %v3306 = vpop.f32.mrb[0].mxu0
      %v3307 = vpop.f32.mrb[0].mxu0
      %v3308 = vadd.f32 %v3232, %v3307
      %v3309 = vpop.f32.mrb[0].mxu0
      %3310 = vdwg.mxu0
      %v3311 = vadd.f32 %v442, %v3281
      %v3312 = vadd.f32 %v443, %v3284
      %v3313 = vadd.f32 %v444, %v3289
      %v3314 = vadd.f32 %v445, %v3292
      %v3315 = vadd.f32 %v446, %v3297
      %v3316 = vadd.f32 %v447, %v3300
      %v3317 = vadd.f32 %v448, %v3305
      %v3318 = vadd.f32 %v449, %v3308
      %v3319 = vld [vmem:[%s5] sm:$0x1]
      %v3320 = vld [vmem:[%s6] sm:$0x1]
      %v3321 = vsel %vm490, %v3311, 0.0
      %3322 = vadd.xlane.f32.xlu0 %v3321
      %v3323 = vpop.xlane.xlu0 %3322
      %v3324 = vsel %vm490, %v3312, 0.0
      %3325 = vadd.xlane.f32.xlu0 %v3324
      %v3326 = vpop.xlane.xlu0 %3325
      %v3327 = vsel %vm490, %v3313, 0.0
      %3328 = vadd.xlane.f32.xlu0 %v3327
      %v3329 = vpop.xlane.xlu0 %3328
      %v3330 = vsel %vm490, %v3314, 0.0
      %3331 = vadd.xlane.f32.xlu0 %v3330
      %v3332 = vpop.xlane.xlu0 %3331
      %v3333 = vsel %vm490, %v3315, 0.0
      %3334 = vadd.xlane.f32.xlu0 %v3333
      %v3335 = vpop.xlane.xlu0 %3334
      %v3336 = vsel %vm490, %v3316, 0.0
      %3337 = vadd.xlane.f32.xlu0 %v3336
      %v3338 = vpop.xlane.xlu0 %3337
      %v3339 = vsel %vm490, %v3317, 0.0
      %3340 = vadd.xlane.f32.xlu0 %v3339
      %v3341 = vpop.xlane.xlu0 %3340
      %v3342 = vsel %vm490, %v3318, 0.0
      %3343 = vadd.xlane.f32.xlu0 %v3342
      %v3344 = vpop.xlane.xlu0 %3343
      %v3345 = vrcp.pop 64.0
      %v3346 = vmul.f32 %v3323, %v3345
      %v3347 = vmul.f32 %v3326, %v3345
      %v3348 = vmul.f32 %v3329, %v3345
      %v3349 = vmul.f32 %v3332, %v3345
      %v3350 = vmul.f32 %v3335, %v3345
      %v3351 = vmul.f32 %v3338, %v3345
      %v3352 = vmul.f32 %v3341, %v3345
      %v3353 = vmul.f32 %v3344, %v3345
      %v3354 = vsub.f32 %v3311, %v3346
      %v3355 = vsub.f32 %v3312, %v3347
      %v3356 = vsub.f32 %v3313, %v3348
      %v3357 = vsub.f32 %v3314, %v3349
      %v3358 = vsub.f32 %v3315, %v3350
      %v3359 = vsub.f32 %v3316, %v3351
      %v3360 = vsub.f32 %v3317, %v3352
      %v3361 = vsub.f32 %v3318, %v3353
      %v3362 = vmul.f32 %v3354, %v3354
      %v3363 = vmul.f32 %v3355, %v3355
      %v3364 = vmul.f32 %v3356, %v3356
      %v3365 = vmul.f32 %v3357, %v3357
      %v3366 = vmul.f32 %v3358, %v3358
      %v3367 = vmul.f32 %v3359, %v3359
      %v3368 = vmul.f32 %v3360, %v3360
      %v3369 = vmul.f32 %v3361, %v3361
      %v3370 = vsel %vm490, %v3362, 0.0
      %3371 = vadd.xlane.f32.xlu0 %v3370
      %v3372 = vpop.xlane.xlu0 %3371
      %v3373 = vsel %vm490, %v3363, 0.0
      %3374 = vadd.xlane.f32.xlu0 %v3373
      %v3375 = vpop.xlane.xlu0 %3374
      %v3376 = vsel %vm490, %v3364, 0.0
      %3377 = vadd.xlane.f32.xlu0 %v3376
      %v3378 = vpop.xlane.xlu0 %3377
      %v3379 = vsel %vm490, %v3365, 0.0
      %3380 = vadd.xlane.f32.xlu0 %v3379
      %v3381 = vpop.xlane.xlu0 %3380
      %v3382 = vsel %vm490, %v3366, 0.0
      %3383 = vadd.xlane.f32.xlu0 %v3382
      %v3384 = vpop.xlane.xlu0 %3383
      %v3385 = vsel %vm490, %v3367, 0.0
      %3386 = vadd.xlane.f32.xlu0 %v3385
      %v3387 = vpop.xlane.xlu0 %3386
      %v3388 = vsel %vm490, %v3368, 0.0
      %3389 = vadd.xlane.f32.xlu0 %v3388
      %v3390 = vpop.xlane.xlu0 %3389
      %v3391 = vsel %vm490, %v3369, 0.0
      %3392 = vadd.xlane.f32.xlu0 %v3391
      %v3393 = vpop.xlane.xlu0 %3392
      %v3394 = vmul.f32 %v3372, %v3345
      %v3395 = vmul.f32 %v3375, %v3345
      %v3396 = vmul.f32 %v3378, %v3345
      %v3397 = vmul.f32 %v3381, %v3345
      %v3398 = vmul.f32 %v3384, %v3345
      %v3399 = vmul.f32 %v3387, %v3345
      %v3400 = vmul.f32 %v3390, %v3345
      %v3401 = vmul.f32 %v3393, %v3345
      %v3402 = vadd.f32 %v3394, 1e-05
      %v3403 = vadd.f32 %v3395, 1e-05
      %v3404 = vadd.f32 %v3396, 1e-05
      %v3405 = vadd.f32 %v3397, 1e-05
      %v3406 = vadd.f32 %v3398, 1e-05
      %v3407 = vadd.f32 %v3399, 1e-05
      %v3408 = vadd.f32 %v3400, 1e-05
      %v3409 = vadd.f32 %v3401, 1e-05
      %v3410 = vrsqrt.pop %v3402
      %v3411 = vrsqrt.pop %v3403
      %v3412 = vrsqrt.pop %v3404
      %v3413 = vrsqrt.pop %v3405
      %v3414 = vrsqrt.pop %v3406
      %v3415 = vrsqrt.pop %v3407
      %v3416 = vrsqrt.pop %v3408
      %v3417 = vrsqrt.pop %v3409
      %v3418 = vmul.f32 %v3354, %v3410
      %v3419 = vmul.f32 %v3355, %v3411
      %v3420 = vmul.f32 %v3356, %v3412
      %v3421 = vmul.f32 %v3357, %v3413
      %v3422 = vmul.f32 %v3358, %v3414
      %v3423 = vmul.f32 %v3359, %v3415
      %v3424 = vmul.f32 %v3360, %v3416
      %v3425 = vmul.f32 %v3361, %v3417
      %v3427 = vlaneseq
      %v3428 = vshrl.u32 %v3427, 7
      %v3429 = vsub.s32 0, %v3428
      %v3430 = vrot.slane %v3319, %v3429
      %v3432 = vmul.f32 %v3418, %v3430
      %v3433 = vmul.f32 %v3419, %v3430
      %v3434 = vmul.f32 %v3420, %v3430
      %v3435 = vmul.f32 %v3421, %v3430
      %v3436 = vmul.f32 %v3422, %v3430
      %v3437 = vmul.f32 %v3423, %v3430
      %v3438 = vmul.f32 %v3424, %v3430
      %v3439 = vmul.f32 %v3425, %v3430
      %v3441 = vlaneseq
      %v3442 = vshrl.u32 %v3441, 7
      %v3443 = vsub.s32 0, %v3442
      %v3444 = vrot.slane %v3320, %v3443
      %v3446 = vadd.f32 %v3432, %v3444
      %v3447 = vadd.f32 %v3433, %v3444
      %v3448 = vadd.f32 %v3434, %v3444
      %v3449 = vadd.f32 %v3435, %v3444
      %v3450 = vadd.f32 %v3436, %v3444
      %v3451 = vadd.f32 %v3437, %v3444
      %v3452 = vadd.f32 %v3438, %v3444
      %v3453 = vadd.f32 %v3439, %v3444
      %v3454 = vld [vmem:[%s7] sm:$0xff]
      %v3455 = vld [vmem:[%s7 + $0x8] sm:$0xff]
      %v3456 = vld [vmem:[%s7 + $0x10] sm:$0xff]
      %v3457 = vld [vmem:[%s7 + $0x18] sm:$0xff]
      %v3458 = vld [vmem:[%s7 + $0x20] sm:$0xff]
      %v3459 = vld [vmem:[%s7 + $0x28] sm:$0xff]
      %v3460 = vld [vmem:[%s7 + $0x30] sm:$0xff]
      %v3461 = vld [vmem:[%s7 + $0x38] sm:$0xff]
      %v3462 = vpack.c.bf16 %v3447, %v3446
      %v3463 = vpack.c.bf16 %v3449, %v3448
      %v3464 = vpack.c.bf16 %v3451, %v3450
      %v3465 = vpack.c.bf16 %v3453, %v3452
      %v3466 = vpack.c.bf16 %v3455, %v3454
      %v3467 = vpack.c.bf16 %v3457, %v3456
      %v3468 = vpack.c.bf16 %v3459, %v3458
      %v3469 = vpack.c.bf16 %v3461, %v3460
      %v3470 = vld [vmem:[%s8] sm:$0x1]
      %v3472 = vlaneseq
      %v3473 = vshrl.u32 %v3472, 7
      %v3474 = vsub.s32 0, %v3473
      %v3475 = vrot.slane %v3470, %v3474
      %v3478 = vsel %vm490, %v3462, 0
      %v3481 = vsel %vm490, %v3463, 0
      %v3484 = vsel %vm490, %v3464, 0
      %v3487 = vsel %vm490, %v3465, 0
      %3489 = vmatprep.subr.bf16.mxu0 0
      %3490 = vmatpush1.bf16.msra.mxu0 %v3466
      %3491 = vmatprep.subr.bf16.mxu0 0
      %3492 = vmatpush1.bf16.msra.mxu0 %v3467
      %3493 = vmatprep.subr.bf16.mxu0 0
      %3494 = vmatpush1.bf16.msra.mxu0 %v3468
      %3495 = vmatprep.subr.bf16.mxu0 0
      %3496 = vmatpush1.bf16.msra.mxu0 %v3469
      %3497 = vmatprep.subr.bf16.mxu0 0
      %3498 = vmatpush1.bf16.msra.mxu0 0
      %3499 = vmatprep.subr.bf16.mxu0 0
      %3500 = vmatpush1.bf16.msra.mxu0 0
      %3501 = vmatprep.subr.bf16.mxu0 0
      %3502 = vmatpush1.bf16.msra.mxu0 0
      %3503 = vmatprep.subr.bf16.mxu0 0
      %3504 = vmatpush1.bf16.msra.mxu0 0
      %3505 = vmatprep.subr.bf16.mxu0 0
      %3506 = vmatpush1.bf16.msra.mxu0 0
      %3507 = vmatprep.subr.bf16.mxu0 0
      %3508 = vmatpush1.bf16.msra.mxu0 0
      %3509 = vmatprep.subr.bf16.mxu0 0
      %3510 = vmatpush1.bf16.msra.mxu0 0
      %3511 = vmatprep.subr.bf16.mxu0 0
      %3512 = vmatpush1.bf16.msra.mxu0 0
      %3513 = vmatprep.subr.bf16.mxu0 0
      %3514 = vmatpush1.bf16.msra.mxu0 0
      %3515 = vmatprep.subr.bf16.mxu0 0
      %3516 = vmatpush1.bf16.msra.mxu0 0
      %3517 = vmatprep.subr.bf16.mxu0 0
      %3518 = vmatpush1.bf16.msra.mxu0 0
      %3519 = vmatprep.subr.bf16.mxu0 0
      %3520 = vmatpush1.bf16.msra.mxu0 0
      %3521 = vmatprep.mubr.bf16.mxu0 0
      %3522 = vmatmul.mubr.bf16.gmra.mrb[0].mxu0 %v3478
      %v3523 = vpop.f32.mrb[0].mxu0
      %v3524 = vadd.f32 %v3475, %v3523
      %v3525 = vpop.f32.mrb[0].mxu0
      %v3526 = vpop.f32.mrb[0].mxu0
      %v3527 = vadd.f32 %v3475, %v3526
      %v3528 = vpop.f32.mrb[0].mxu0
      %3529 = vmatprep.mubr.bf16.mxu0 0
      %3530 = vmatmul.mubr.bf16.gmra.mrb[0].mxu0 %v3481
      %v3531 = vpop.f32.mrb[0].mxu0
      %v3532 = vadd.f32 %v3475, %v3531
      %v3533 = vpop.f32.mrb[0].mxu0
      %v3534 = vpop.f32.mrb[0].mxu0
      %v3535 = vadd.f32 %v3475, %v3534
      %v3536 = vpop.f32.mrb[0].mxu0
      %3537 = vmatprep.mubr.bf16.mxu0 0
      %3538 = vmatmul.mubr.bf16.gmra.mrb[0].mxu0 %v3484
      %v3539 = vpop.f32.mrb[0].mxu0
      %v3540 = vadd.f32 %v3475, %v3539
      %v3541 = vpop.f32.mrb[0].mxu0
      %v3542 = vpop.f32.mrb[0].mxu0
      %v3543 = vadd.f32 %v3475, %v3542
      %v3544 = vpop.f32.mrb[0].mxu0
      %3545 = vmatprep.mubr.bf16.mxu0 0
      %3546 = vmatmul.mubr.bf16.gmra.mrb[0].mxu0 %v3487
      %v3547 = vpop.f32.mrb[0].mxu0
      %v3548 = vadd.f32 %v3475, %v3547
      %v3549 = vpop.f32.mrb[0].mxu0
      %v3550 = vpop.f32.mrb[0].mxu0
      %v3551 = vadd.f32 %v3475, %v3550
      %v3552 = vpop.f32.mrb[0].mxu0
      %3553 = vdwg.mxu0
      %v3554 = vmul.f32 %v3524, 0.5
      %v3555 = vmul.f32 %v3527, 0.5
      %v3556 = vmul.f32 %v3532, 0.5
      %v3557 = vmul.f32 %v3535, 0.5
      %v3558 = vmul.f32 %v3540, 0.5
      %v3559 = vmul.f32 %v3543, 0.5
      %v3560 = vmul.f32 %v3548, 0.5
      %v3561 = vmul.f32 %v3551, 0.5
      %v3562 = vmul.f32 %v3524, 0.70710677
      %v3563 = vmul.f32 %v3527, 0.70710677
      %v3564 = vmul.f32 %v3532, 0.70710677
      %v3565 = vmul.f32 %v3535, 0.70710677
      %v3566 = vmul.f32 %v3540, 0.70710677
      %v3567 = vmul.f32 %v3543, 0.70710677
      %v3568 = vmul.f32 %v3548, 0.70710677
      %v3569 = vmul.f32 %v3551, 0.70710677
      %v3570 = verf.f32.pop %v3562
      %v3571 = verf.f32.pop %v3563
      %v3572 = verf.f32.pop %v3564
      %v3573 = verf.f32.pop %v3565
      %v3574 = verf.f32.pop %v3566
      %v3575 = verf.f32.pop %v3567
      %v3576 = verf.f32.pop %v3568
      %v3577 = verf.f32.pop %v3569
      %v3578 = vadd.f32 %v3570, 1.0
      %v3579 = vadd.f32 %v3571, 1.0
      %v3580 = vadd.f32 %v3572, 1.0
      %v3581 = vadd.f32 %v3573, 1.0
      %v3582 = vadd.f32 %v3574, 1.0
      %v3583 = vadd.f32 %v3575, 1.0
      %v3584 = vadd.f32 %v3576, 1.0
      %v3585 = vadd.f32 %v3577, 1.0
      %v3586 = vmul.f32 %v3554, %v3578
      %v3587 = vmul.f32 %v3555, %v3579
      %v3588 = vmul.f32 %v3556, %v3580
      %v3589 = vmul.f32 %v3557, %v3581
      %v3590 = vmul.f32 %v3558, %v3582
      %v3591 = vmul.f32 %v3559, %v3583
      %v3592 = vmul.f32 %v3560, %v3584
      %v3593 = vmul.f32 %v3561, %v3585
      %v3594 = vld [vmem:[%s9] sm:$0xff]
      %v3595 = vld [vmem:[%s9 + $0x8] sm:$0xff]
      %v3596 = vld [vmem:[%s9 + $0x10] sm:$0xff]
      %v3597 = vld [vmem:[%s9 + $0x18] sm:$0xff]
      %v3598 = vld [vmem:[%s9 + $0x20] sm:$0xff]
      %v3599 = vld [vmem:[%s9 + $0x28] sm:$0xff]
      %v3600 = vld [vmem:[%s9 + $0x30] sm:$0xff]
      %v3601 = vld [vmem:[%s9 + $0x38] sm:$0xff]
      %v3602 = vld [vmem:[%s9 + $0x40] sm:$0xff]
      %v3603 = vld [vmem:[%s9 + $0x48] sm:$0xff]
      %v3604 = vld [vmem:[%s9 + $0x50] sm:$0xff]
      %v3605 = vld [vmem:[%s9 + $0x58] sm:$0xff]
      %v3606 = vld [vmem:[%s9 + $0x60] sm:$0xff]
      %v3607 = vld [vmem:[%s9 + $0x68] sm:$0xff]
      %v3608 = vld [vmem:[%s9 + $0x70] sm:$0xff]
      %v3609 = vld [vmem:[%s9 + $0x78] sm:$0xff]
      %v3610 = vpack.c.bf16 %v3587, %v3586
      %v3611 = vpack.c.bf16 %v3589, %v3588
      %v3612 = vpack.c.bf16 %v3591, %v3590
      %v3613 = vpack.c.bf16 %v3593, %v3592
      %v3614 = vpack.c.bf16 %v3595, %v3594
      %v3615 = vpack.c.bf16 %v3597, %v3596
      %v3616 = vpack.c.bf16 %v3599, %v3598
      %v3617 = vpack.c.bf16 %v3601, %v3600
      %v3618 = vpack.c.bf16 %v3603, %v3602
      %v3619 = vpack.c.bf16 %v3605, %v3604
      %v3620 = vpack.c.bf16 %v3607, %v3606
      %v3621 = vpack.c.bf16 %v3609, %v3608
      %v3622 = vld [vmem:[%s10] sm:$0x1]
      %v3624 = vlaneseq
      %v3625 = vshrl.u32 %v3624, 7
      %v3626 = vsub.s32 0, %v3625
      %v3627 = vrot.slane %v3622, %v3626
      %3629 = vmatprep.subr.bf16.mxu0 0
      %3630 = vmatpush1.bf16.msra.mxu0 %v3614
      %3631 = vmatprep.subr.bf16.mxu0 0
      %3632 = vmatpush1.bf16.msra.mxu0 %v3615
      %3633 = vmatprep.subr.bf16.mxu0 0
      %3634 = vmatpush1.bf16.msra.mxu0 %v3616
      %3635 = vmatprep.subr.bf16.mxu0 0
      %3636 = vmatpush1.bf16.msra.mxu0 %v3617
      %3637 = vmatprep.subr.bf16.mxu0 0
      %3638 = vmatpush1.bf16.msra.mxu0 %v3618
      %3639 = vmatprep.subr.bf16.mxu0 0
      %3640 = vmatpush1.bf16.msra.mxu0 %v3619
      %3641 = vmatprep.subr.bf16.mxu0 0
      %3642 = vmatpush1.bf16.msra.mxu0 %v3620
      %3643 = vmatprep.subr.bf16.mxu0 0
      %3644 = vmatpush1.bf16.msra.mxu0 %v3621
      %3645 = vmatprep.subr.bf16.mxu0 0
      %3646 = vmatpush1.bf16.msra.mxu0 0
      %3647 = vmatprep.subr.bf16.mxu0 0
      %3648 = vmatpush1.bf16.msra.mxu0 0
      %3649 = vmatprep.subr.bf16.mxu0 0
      %3650 = vmatpush1.bf16.msra.mxu0 0
      %3651 = vmatprep.subr.bf16.mxu0 0
      %3652 = vmatpush1.bf16.msra.mxu0 0
      %3653 = vmatprep.subr.bf16.mxu0 0
      %3654 = vmatpush1.bf16.msra.mxu0 0
      %3655 = vmatprep.subr.bf16.mxu0 0
      %3656 = vmatpush1.bf16.msra.mxu0 0
      %3657 = vmatprep.subr.bf16.mxu0 0
      %3658 = vmatpush1.bf16.msra.mxu0 0
      %3659 = vmatprep.subr.bf16.mxu0 0
      %3660 = vmatpush1.bf16.msra.mxu0 0
      %3661 = vmatprep.mubr.bf16.mxu0 0
      %3662 = vmatmul.mubr.bf16.gmra.mrb[0].mxu0 %v3610
      %v3663 = vpop.f32.mrb[0].mxu0
      %v3664 = vadd.f32 %v3627, %v3663
      %v3665 = vpop.f32.mrb[0].mxu0
      %v3666 = vpop.f32.mrb[0].mxu0
      %v3667 = vadd.f32 %v3627, %v3666
      %v3668 = vpop.f32.mrb[0].mxu0
      %3669 = vmatprep.mubr.bf16.mxu0 0
      %3670 = vmatmul.mubr.bf16.gmra.mrb[0].mxu0 %v3611
      %v3671 = vpop.f32.mrb[0].mxu0
      %v3672 = vadd.f32 %v3627, %v3671
      %v3673 = vpop.f32.mrb[0].mxu0
      %v3674 = vpop.f32.mrb[0].mxu0
      %v3675 = vadd.f32 %v3627, %v3674
      %v3676 = vpop.f32.mrb[0].mxu0
      %3677 = vmatprep.mubr.bf16.mxu0 0
      %3678 = vmatmul.mubr.bf16.gmra.mrb[0].mxu0 %v3612
      %v3679 = vpop.f32.mrb[0].mxu0
      %v3680 = vadd.f32 %v3627, %v3679
      %v3681 = vpop.f32.mrb[0].mxu0
      %v3682 = vpop.f32.mrb[0].mxu0
      %v3683 = vadd.f32 %v3627, %v3682
      %v3684 = vpop.f32.mrb[0].mxu0
      %3685 = vmatprep.mubr.bf16.mxu0 0
      %3686 = vmatmul.mubr.bf16.gmra.mrb[0].mxu0 %v3613
      %v3687 = vpop.f32.mrb[0].mxu0
      %v3688 = vadd.f32 %v3627, %v3687
      %v3689 = vpop.f32.mrb[0].mxu0
      %v3690 = vpop.f32.mrb[0].mxu0
      %v3691 = vadd.f32 %v3627, %v3690
      %v3692 = vpop.f32.mrb[0].mxu0
      %3693 = vdwg.mxu0
      %v3694 = vadd.f32 %v3446, %v3664
      %v3695 = vadd.f32 %v3447, %v3667
      %v3696 = vadd.f32 %v3448, %v3672
      %v3697 = vadd.f32 %v3449, %v3675
      %v3698 = vadd.f32 %v3450, %v3680
      %v3699 = vadd.f32 %v3451, %v3683
      %v3700 = vadd.f32 %v3452, %v3688
      %v3701 = vadd.f32 %v3453, %v3691
      %v3702 = vld [vmem:[%s11] sm:$0x1]
      %v3703 = vld [vmem:[%s12] sm:$0x1]
      %v3704 = vsel %vm490, %v3694, 0.0
      %3705 = vadd.xlane.f32.xlu0 %v3704
      %v3706 = vpop.xlane.xlu0 %3705
      %v3707 = vsel %vm490, %v3695, 0.0
      %3708 = vadd.xlane.f32.xlu0 %v3707
      %v3709 = vpop.xlane.xlu0 %3708
      %v3710 = vsel %vm490, %v3696, 0.0
      %3711 = vadd.xlane.f32.xlu0 %v3710
      %v3712 = vpop.xlane.xlu0 %3711
      %v3713 = vsel %vm490, %v3697, 0.0
      %3714 = vadd.xlane.f32.xlu0 %v3713
      %v3715 = vpop.xlane.xlu0 %3714
      %v3716 = vsel %vm490, %v3698, 0.0
      %3717 = vadd.xlane.f32.xlu0 %v3716
      %v3718 = vpop.xlane.xlu0 %3717
      %v3719 = vsel %vm490, %v3699, 0.0
      %3720 = vadd.xlane.f32.xlu0 %v3719
      %v3721 = vpop.xlane.xlu0 %3720
      %v3722 = vsel %vm490, %v3700, 0.0
      %3723 = vadd.xlane.f32.xlu0 %v3722
      %v3724 = vpop.xlane.xlu0 %3723
      %v3725 = vsel %vm490, %v3701, 0.0
      %3726 = vadd.xlane.f32.xlu0 %v3725
      %v3727 = vpop.xlane.xlu0 %3726
      %v3728 = vmul.f32 %v3706, %v3345
      %v3729 = vmul.f32 %v3709, %v3345
      %v3730 = vmul.f32 %v3712, %v3345
      %v3731 = vmul.f32 %v3715, %v3345
      %v3732 = vmul.f32 %v3718, %v3345
      %v3733 = vmul.f32 %v3721, %v3345
      %v3734 = vmul.f32 %v3724, %v3345
      %v3735 = vmul.f32 %v3727, %v3345
      %v3736 = vsub.f32 %v3694, %v3728
      %v3737 = vsub.f32 %v3695, %v3729
      %v3738 = vsub.f32 %v3696, %v3730
      %v3739 = vsub.f32 %v3697, %v3731
      %v3740 = vsub.f32 %v3698, %v3732
      %v3741 = vsub.f32 %v3699, %v3733
      %v3742 = vsub.f32 %v3700, %v3734
      %v3743 = vsub.f32 %v3701, %v3735
      %v3744 = vmul.f32 %v3736, %v3736
      %v3745 = vmul.f32 %v3737, %v3737
      %v3746 = vmul.f32 %v3738, %v3738
      %v3747 = vmul.f32 %v3739, %v3739
      %v3748 = vmul.f32 %v3740, %v3740
      %v3749 = vmul.f32 %v3741, %v3741
      %v3750 = vmul.f32 %v3742, %v3742
      %v3751 = vmul.f32 %v3743, %v3743
      %v3752 = vsel %vm490, %v3744, 0.0
      %3753 = vadd.xlane.f32.xlu0 %v3752
      %v3754 = vpop.xlane.xlu0 %3753
      %v3755 = vsel %vm490, %v3745, 0.0
      %3756 = vadd.xlane.f32.xlu0 %v3755
      %v3757 = vpop.xlane.xlu0 %3756
      %v3758 = vsel %vm490, %v3746, 0.0
      %3759 = vadd.xlane.f32.xlu0 %v3758
      %v3760 = vpop.xlane.xlu0 %3759
      %v3761 = vsel %vm490, %v3747, 0.0
      %3762 = vadd.xlane.f32.xlu0 %v3761
      %v3763 = vpop.xlane.xlu0 %3762
      %v3764 = vsel %vm490, %v3748, 0.0
      %3765 = vadd.xlane.f32.xlu0 %v3764
      %v3766 = vpop.xlane.xlu0 %3765
      %v3767 = vsel %vm490, %v3749, 0.0
      %3768 = vadd.xlane.f32.xlu0 %v3767
      %v3769 = vpop.xlane.xlu0 %3768
      %v3770 = vsel %vm490, %v3750, 0.0
      %3771 = vadd.xlane.f32.xlu0 %v3770
      %v3772 = vpop.xlane.xlu0 %3771
      %v3773 = vsel %vm490, %v3751, 0.0
      %3774 = vadd.xlane.f32.xlu0 %v3773
      %v3775 = vpop.xlane.xlu0 %3774
      %v3776 = vmul.f32 %v3754, %v3345
      %v3777 = vmul.f32 %v3757, %v3345
      %v3778 = vmul.f32 %v3760, %v3345
      %v3779 = vmul.f32 %v3763, %v3345
      %v3780 = vmul.f32 %v3766, %v3345
      %v3781 = vmul.f32 %v3769, %v3345
      %v3782 = vmul.f32 %v3772, %v3345
      %v3783 = vmul.f32 %v3775, %v3345
      %v3784 = vadd.f32 %v3776, 1e-05
      %v3785 = vadd.f32 %v3777, 1e-05
      %v3786 = vadd.f32 %v3778, 1e-05
      %v3787 = vadd.f32 %v3779, 1e-05
      %v3788 = vadd.f32 %v3780, 1e-05
      %v3789 = vadd.f32 %v3781, 1e-05
      %v3790 = vadd.f32 %v3782, 1e-05
      %v3791 = vadd.f32 %v3783, 1e-05
      %v3792 = vrsqrt.pop %v3784
      %v3793 = vrsqrt.pop %v3785
      %v3794 = vrsqrt.pop %v3786
      %v3795 = vrsqrt.pop %v3787
      %v3796 = vrsqrt.pop %v3788
      %v3797 = vrsqrt.pop %v3789
      %v3798 = vrsqrt.pop %v3790
      %v3799 = vrsqrt.pop %v3791
      %v3800 = vmul.f32 %v3736, %v3792
      %v3801 = vmul.f32 %v3737, %v3793
      %v3802 = vmul.f32 %v3738, %v3794
      %v3803 = vmul.f32 %v3739, %v3795
      %v3804 = vmul.f32 %v3740, %v3796
      %v3805 = vmul.f32 %v3741, %v3797
      %v3806 = vmul.f32 %v3742, %v3798
      %v3807 = vmul.f32 %v3743, %v3799
      %v3809 = vlaneseq
      %v3810 = vshrl.u32 %v3809, 7
      %v3811 = vsub.s32 0, %v3810
      %v3812 = vrot.slane %v3702, %v3811
      %v3814 = vmul.f32 %v3800, %v3812
      %v3815 = vmul.f32 %v3801, %v3812
      %v3816 = vmul.f32 %v3802, %v3812
      %v3817 = vmul.f32 %v3803, %v3812
      %v3818 = vmul.f32 %v3804, %v3812
      %v3819 = vmul.f32 %v3805, %v3812
      %v3820 = vmul.f32 %v3806, %v3812
      %v3821 = vmul.f32 %v3807, %v3812
      %v3823 = vlaneseq
      %v3824 = vshrl.u32 %v3823, 7
      %v3825 = vsub.s32 0, %v3824
      %v3826 = vrot.slane %v3703, %v3825
      %v3828 = vadd.f32 %v3814, %v3826
      %v3829 = vadd.f32 %v3815, %v3826
      %v3830 = vadd.f32 %v3816, %v3826
      %v3831 = vadd.f32 %v3817, %v3826
      %v3832 = vadd.f32 %v3818, %v3826
      %v3833 = vadd.f32 %v3819, %v3826
      %v3834 = vadd.f32 %v3820, %v3826
      %v3835 = vadd.f32 %v3821, %v3826
      %3836 = vst.msk [vmem:[%s440] sm:$0xff] %vm490, %v3828
      %3837 = vst.msk [vmem:[%s440 + $0x8] sm:$0xff] %vm490, %v3829
      %3838 = vst.msk [vmem:[%s440 + $0x10] sm:$0xff] %vm490, %v3830
      %3839 = vst.msk [vmem:[%s440 + $0x18] sm:$0xff] %vm490, %v3831
      %3840 = vst.msk [vmem:[%s440 + $0x20] sm:$0xff] %vm490, %v3832
      %3841 = vst.msk [vmem:[%s440 + $0x28] sm:$0xff] %vm490, %v3833
      %3842 = vst.msk [vmem:[%s440 + $0x30] sm:$0xff] %vm490, %v3834
      %3843 = vst.msk [vmem:[%s440 + $0x38] sm:$0xff] %vm490, %v3835
      %p3844 = scmp.lt.s32.totalorder %s24, 3
      %s3845 = scalar_select %p3844, %s24, 3
      %s3846 = smul.addr %s3845, 8
      %s3847 = smul.addr %s3846, 8
      %s3848 = scalar_lea.vmem %s13, %s3847
      // Predicated region
      $region73: #{sa_forward.5} parent=71 // pred_check
        %p3849 = pneg %p320
      $region74: #{sa_forward.5} parent=71 // pred_check_branch
        %3851 = sbr.rel (%p3849) target = $region76
      $region75: #{sa_forward.5} parent=71 // pred_region
        _
      $region76: #{sa_forward.5} parent=71 // pred_fallthru
        _
    $region72: #{sa_forward.5} parent=5 // pred_fallthru
      _
    %p3852 = scmp.le.s32.totalorder 2, %s19
    // Predicated region
    $region77: #{sa_forward.5} parent=5 // pred_check
      %p3853 = pneg %p3852
    $region78: #{sa_forward.5} parent=5 // pred_check_branch
      %3855 = sbr.rel (%p3853) target = $region80
    $region79: #{sa_forward.5} parent=5 // pred_region
      %s3856 = ssub.s32 %s19, 2
      // Predicated region
      $region81: #{sa_forward.5} parent=79 // pred_check
        %p3857 = pneg %p326
      $region82: #{sa_forward.5} parent=79 // pred_check_branch
        %3859 = sbr.rel (%p3857) target = $region84
      $region83: #{sa_forward.5} parent=79 // pred_region
        %p3860 = scmp.lt.s32.totalorder %s25, 3
        %s3861 = scalar_select %p3860, %s25, 3
        %s3862 = smul.addr %s3861, 8
        %s3863 = smul.addr %s3862, 8
        %s3864 = scalar_lea.vmem %s13, %s3863
      $region84: #{sa_forward.5} parent=79 // pred_fallthru
        _
    $region80: #{sa_forward.5} parent=5 // pred_fallthru
      _
  $region6: #{sa_forward.5} parent=0 // loop_footer
    %s23 = sadd.s32 1, %s19
  $region7: #{sa_forward.5} parent=0 // loop_footer_branch
    %18 = sbr.rel target = $region3
  $region8: #{sa_forward.5} parent=0 // loop_exit
    _

</llo_original>
